<compile_context>
chip_gen: v6e
topology: v6e:2x2x1
jax: 0.10.0
libtpu: 0.0.40
codegen_flags: <defaults>
</compile_context>

<pallas_src>
import jax
import jax.numpy as jnp
from jax import lax
from jax.experimental import pallas as pl
from jax.experimental.pallas import tpu as pltpu


def _mm(a, b):
    """a @ b with f32 accumulation on the MXU."""
    return lax.dot_general(a, b, (((1,), (0,)), ((), ())),
                           preferred_element_type=jnp.float32)


def make_kernel(num_layers, num_heads, c, bb, seq):
    bf16 = jnp.bfloat16
    pack = 128 // c            # batch rows packed per 128-lane output row
    out_sub = seq // pack      # output sublane rows per batch element

    def kernel(p_ref, lin_w_ref, lin_b_ref, qkv_w_ref, qkv_b_ref,
               ow_ref, ob_ref, f1_ref, f2_ref,
               mask_k_ref, mask_v_ref, o_ref, attn_scr):
        mask_k = mask_k_ref[...]                      # (C, H*S)  0/1 f32
        mask_v = mask_v_ref[...]                      # (H*S, C)  0/1 f32
        mask_v16 = mask_v.astype(bf16)                # hoisted cast

        p = p_ref[...]                                # (BB*S, C) f32
        # x = p + self.linear(p)
        x = p + _mm(p.astype(bf16), lin_w_ref[...]) + lin_b_ref[...]

        for l in range(num_layers):
            x16 = x.astype(bf16)
            # Fused q/k/v projection: one lane-padded (C, 128) MXU push.
            qkv = _mm(x16, qkv_w_ref[l]) + qkv_b_ref[l]     # (BB*S, NQ) f32
            q16 = qkv[:, 0:c].astype(bf16)                  # scale folded in
            k2 = qkv[:, c:2 * c]
            v2 = qkv[:, 2 * c:3 * c]

            for b in range(bb):
                r0 = b * seq
                qb = q16[r0:r0 + seq, :]                    # (S, C)  bf16
                kbT = k2[r0:r0 + seq, :].T                  # (C, S)  f32
                vb = v2[r0:r0 + seq, :]                     # (S, C)  f32

                # Block-diagonal K^T / V (tile + 0/1 mask, built in f32,
                # cast once -> v5e-safe), then three MXU-friendly matmuls.
                k_bd = (jnp.concatenate([kbT] * num_heads, axis=1)
                        * mask_k).astype(bf16)              # (C, H*S)
                v_bd = (jnp.concatenate([vb] * num_heads, axis=0)
                        * mask_v).astype(bf16)              # (H*S, C)

                s = _mm(qb, k_bd)                           # (S, H*S) f32
                # Global row max: per-head softmax is shift-invariant, so one
                # reduction over all H*S lanes is exact.
                s = s - jnp.max(s, axis=-1, keepdims=True)
                e16 = jnp.exp(s).astype(bf16)
                # Per-head denominators broadcast to channels via the mask.
                denom = jnp.maximum(_mm(e16, mask_v16), 1e-30)   # (S, C)
                pv = _mm(e16, v_bd)                              # (S, C)
                attn_scr[r0:r0 + seq, :] = pv * pl.reciprocal(denom,
                                                              approx=True)

            # out_proj over the whole (BB*S, C) slab + residual.
            x = x + _mm(attn_scr[...].astype(bf16), ow_ref[l]) + ob_ref[l]

            # fc2(fc1(x)) + x   (no biases)
            x16 = x.astype(bf16)
            h1 = _mm(x16, f1_ref[l])
            x = x + _mm(h1.astype(bf16), f2_ref[l])

        # Lane-dense store: per batch element pack `pack` aligned sublane
        # slices of (out_sub, C) side by side into (out_sub, 128) so every
        # store is a full-width unmasked vst.  Wrapper undoes the packing.
        for b in range(bb):
            r0 = b * seq
            packed = jnp.concatenate(
                [x[r0 + j * out_sub: r0 + (j + 1) * out_sub, :]
                 for j in range(pack)], axis=1)              # (out_sub, 128)
            o_ref[b] = packed

    return kernel


def _default_batch_block(batch):
    """Whole batch per grid step on single-TensorCore chips (v5e/v6e); one
    batch element per step on v7x so the two TensorCores split the batch.
    Only a heuristic -- pass batch_block explicitly to override."""
    try:
        kind = jax.devices()[0].device_kind.lower()
    except Exception:
        return batch
    if "v7" in kind or "7x" in kind:
        return 1
    return batch


def transformer_block(x, params, num_heads, batch_block=None):
    B, C, H, W = x.shape
    S = H * W
    L = params["qw"].shape[0]
    head_dim = C // num_heads
    scale = head_dim ** -0.5
    bf16 = jnp.bfloat16

    assert C % num_heads == 0
    assert 128 % C == 0 and S % (128 // C) == 0, \
        "lane-dense output packing needs 128 % C == 0 and S % (128//C) == 0"
    PACK = 128 // C
    OUT_SUB = S // PACK

    BB = batch_block if batch_block is not None else _default_batch_block(B)
    assert B % BB == 0

    # ---- host-side weight folding (exact in real arithmetic) ----
    in_w, in_b = params["in_w"], params["in_b"]       # (L, C, 3C), (L, 1, 3C)
    qw_f = jnp.einsum("lij,ljk->lik", params["qw"], in_w[:, :, 0:C]) * scale
    kw_f = jnp.einsum("lij,ljk->lik", params["kw"], in_w[:, :, C:2 * C])
    vw_f = jnp.einsum("lij,ljk->lik", params["vw"], in_w[:, :, 2 * C:])
    qkv_w = jnp.concatenate([qw_f, kw_f, vw_f], axis=2)           # (L, C, 3C)
    qkv_b = jnp.concatenate([in_b[:, :, 0:C] * scale,
                             in_b[:, :, C:2 * C],
                             in_b[:, :, 2 * C:]], axis=2)         # (L, 1, 3C)
    NQ = ((3 * C + 127) // 128) * 128                 # lane-pad fused QKV
    pad = NQ - 3 * C
    if pad:
        qkv_w = jnp.pad(qkv_w, ((0, 0), (0, 0), (0, pad)))
        qkv_b = jnp.pad(qkv_b, ((0, 0), (0, 0), (0, pad)))

    # bf16 matmul operands (f32 accumulation in-kernel); biases stay f32.
    lin_w = params["lin_w"].astype(bf16)
    qkv_w = qkv_w.astype(bf16)
    out_w = params["out_w"].astype(bf16)
    fc1_w = params["fc1_w"].astype(bf16)
    fc2_w = params["fc2_w"].astype(bf16)

    # 0/1 head masks for block-diagonal K^T / V.
    head_of_c = jnp.arange(C) // head_dim
    head_of_j = jnp.arange(num_heads * S) // S
    mask_k = (head_of_c[:, None] == head_of_j[None, :]).astype(jnp.float32)
    mask_v = (head_of_j[:, None] == head_of_c[None, :]).astype(jnp.float32)

    # Input handed to the kernel pre-flattened: (B*S, C).
    p_flat = jnp.transpose(x.reshape(B, C, S), (0, 2, 1)).reshape(B * S, C)

    kernel = make_kernel(L, num_heads, C, BB, S)

    def wfull(shape):
        nd = len(shape)
        return pl.BlockSpec(shape, lambda i, _nd=nd: (0,) * _nd)

    weights = (lin_w, params["lin_b"], qkv_w, qkv_b,
               out_w, params["out_b"], fc1_w, fc2_w, mask_k, mask_v)

    flops = (2 * B * S * C * C
             + L * (2 * B * S * C * NQ
                    + 2 * B * S * C * num_heads * S
                    + 4 * B * S * num_heads * S * C
                    + 2 * B * S * C * C
                    + 4 * B * S * C * C))
    transcendentals = L * B * S * (num_heads * S + C)
    bytes_accessed = int(p_flat.size * 4 + B * S * C * 4 +
                         sum(w.size * w.dtype.itemsize for w in weights))

    grid_spec = pltpu.PrefetchScalarGridSpec(
        num_scalar_prefetch=0,
        grid=(B // BB,),
        in_specs=[
            pl.BlockSpec((BB * S, C), lambda i: (i, 0)),            # p (flat)
            wfull((C, C)), wfull((1, C)),                           # linear
            wfull((L, C, NQ)), wfull((L, 1, NQ)),                   # fused qkv
            wfull((L, C, C)), wfull((L, 1, C)),                     # out_proj
            wfull((L, C, C)), wfull((L, C, C)),                     # fc1, fc2
            wfull((C, num_heads * S)), wfull((num_heads * S, C)),   # masks
        ],
        out_specs=pl.BlockSpec((BB, OUT_SUB, 128), lambda i: (i, 0, 0)),
        scratch_shapes=[pltpu.VMEM((BB * S, C), jnp.float32)],
    )

    out = pl.pallas_call(
        kernel,
        out_shape=jax.ShapeDtypeStruct((B, OUT_SUB, 128), jnp.float32),
        grid_spec=grid_spec,
        compiler_params=pltpu.CompilerParams(
            dimension_semantics=("parallel",)),
        cost_estimate=pl.CostEstimate(
            flops=flops, transcendentals=transcendentals,
            bytes_accessed=bytes_accessed),
    )(p_flat, *weights)

    # Undo the lane-dense packing (cheap XLA work):
    # (B, OUT_SUB, 128) -> (B, S, C) -> (B, C, S) -> (B, C, H, W)
    out = out.reshape(B, OUT_SUB, PACK, C).transpose(0, 2, 1, 3).reshape(B, S, C)
    return out.transpose(0, 2, 1).reshape(B, C, H, W)


def ref_forward(x, params, num_heads):
    """Pure-JAX f32 reference of the original module's forward pass."""
    B, C, H, W = x.shape
    S = H * W
    hd = C // num_heads
    scale = hd ** -0.5
    p = jnp.transpose(x.reshape(B, C, S), (0, 2, 1))
    xcur = p + p @ params["lin_w"] + params["lin_b"]
    L = params["qw"].shape[0]
    for l in range(L):
        q = xcur @ params["qw"][l]
        k = xcur @ params["kw"][l]
        v = xcur @ params["vw"][l]
        w_in, b_in = params["in_w"][l], params["in_b"][l]
        q2 = q @ w_in[:, :C] + b_in[:, :C]
        k2 = k @ w_in[:, C:2 * C] + b_in[:, C:2 * C]
        v2 = v @ w_in[:, 2 * C:] + b_in[:, 2 * C:]
        qh = q2.reshape(B, S, num_heads, hd).transpose(0, 2, 1, 3) * scale
        kh = k2.reshape(B, S, num_heads, hd).transpose(0, 2, 1, 3)
        vh = v2.reshape(B, S, num_heads, hd).transpose(0, 2, 1, 3)
        s = jnp.einsum('bhqd,bhkd->bhqk', qh, kh)
        a = jax.nn.softmax(s, axis=-1)
        o = jnp.einsum('bhqk,bhkd->bhqd', a, vh).transpose(0, 2, 1, 3).reshape(B, S, C)
        o = o @ params["out_w"][l] + params["out_b"][l]
        xcur = o + xcur
        xcur = (xcur @ params["fc1_w"][l]) @ params["fc2_w"][l] + xcur
    return jnp.transpose(xcur, (0, 2, 1)).reshape(B, C, H, W)


def init_params(key, C, num_layers):
    std = 0.05
    ks = jax.random.split(key, 12)
    L = num_layers
    return {
        "lin_w": std * jax.random.normal(ks[0], (C, C), jnp.float32),
        "lin_b": std * jax.random.normal(ks[1], (1, C), jnp.float32),
        "qw":    std * jax.random.normal(ks[2], (L, C, C), jnp.float32),
        "kw":    std * jax.random.normal(ks[3], (L, C, C), jnp.float32),
        "vw":    std * jax.random.normal(ks[4], (L, C, C), jnp.float32),
        "in_w":  std * jax.random.normal(ks[5], (L, C, 3 * C), jnp.float32),
        "in_b":  std * jax.random.normal(ks[6], (L, 1, 3 * C), jnp.float32),
        "out_w": std * jax.random.normal(ks[7], (L, C, C), jnp.float32),
        "out_b": std * jax.random.normal(ks[8], (L, 1, C), jnp.float32),
        "fc1_w": std * jax.random.normal(ks[9], (L, C, C), jnp.float32),
        "fc2_w": std * jax.random.normal(ks[10], (L, C, C), jnp.float32),
    }


if __name__ == "__main__":
    B, C, H, W = 2, 32, 8, 8          # c1 == c2 == 32 -> conv branch is None
    num_heads, num_layers = 4, 2

    key = jax.random.PRNGKey(0)
    kx, kp = jax.random.split(key)
    x = jax.random.normal(kx, (B, C, H, W), jnp.float32)
    params = init_params(kp, C, num_layers)

    out = transformer_block(x, params, num_heads)
    out = jax.block_until_ready(out)

    ref = ref_forward(x, params, num_heads)
    ref = jax.block_until_ready(ref)

    assert out.shape == (B, C, H, W)
    assert jnp.all(jnp.isfinite(out)), "non-finite output"
    max_diff = float(jnp.max(jnp.abs(out.astype(jnp.float32) - ref)))
    # bf16 matmul operands (f32 accumulation) + approx reciprocal vs the
    # pure-f32 reference: relaxed absolute tolerance.
    assert max_diff < 2e-2, f"mismatch vs reference: {max_diff}"
    print("KERNEL_OK")
</pallas_src>

<mosaic_0001>
module attributes {stable_mosaic.version = 11 : i64} {
  func.func @kernel(%arg0: i32, %arg1: memref<128x32xf32, #tpu.memory_space<vmem>>, %arg2: memref<32x32xbf16, #tpu.memory_space<vmem>>, %arg3: memref<1x32xf32, #tpu.memory_space<vmem>>, %arg4: memref<2x32x128xbf16, #tpu.memory_space<vmem>>, %arg5: memref<2x1x128xf32, #tpu.memory_space<vmem>>, %arg6: memref<2x32x32xbf16, #tpu.memory_space<vmem>>, %arg7: memref<2x1x32xf32, #tpu.memory_space<vmem>>, %arg8: memref<2x32x32xbf16, #tpu.memory_space<vmem>>, %arg9: memref<2x32x32xbf16, #tpu.memory_space<vmem>>, %arg10: memref<32x256xf32, #tpu.memory_space<vmem>>, %arg11: memref<256x32xf32, #tpu.memory_space<vmem>>, %arg12: memref<2x16x128xf32, #tpu.memory_space<vmem>>, %arg13: memref<128x32xf32, #tpu.memory_space<vmem>>) attributes {dimension_semantics = [#tpu.dimension_semantics<parallel>], iteration_bounds = array<i64: 1>, scalar_prefetch = 0 : i64, scratch_operands = 1 : i64, tpu.core_type = #tpu.core_type<tc>, window_params = [{transform_indices = @transform_0, window_bounds = array<i64: 128, 32>}, {pipeline_mode = #tpu.pipeline_mode<synchronous>, transform_indices = @transform_1, window_bounds = array<i64: 32, 32>}, {pipeline_mode = #tpu.pipeline_mode<synchronous>, transform_indices = @transform_2, window_bounds = array<i64: 1, 32>}, {pipeline_mode = #tpu.pipeline_mode<synchronous>, transform_indices = @transform_3, window_bounds = array<i64: 2, 32, 128>}, {pipeline_mode = #tpu.pipeline_mode<synchronous>, transform_indices = @transform_4, window_bounds = array<i64: 2, 1, 128>}, {pipeline_mode = #tpu.pipeline_mode<synchronous>, transform_indices = @transform_5, window_bounds = array<i64: 2, 32, 32>}, {pipeline_mode = #tpu.pipeline_mode<synchronous>, transform_indices = @transform_6, window_bounds = array<i64: 2, 1, 32>}, {pipeline_mode = #tpu.pipeline_mode<synchronous>, transform_indices = @transform_7, window_bounds = array<i64: 2, 32, 32>}, {pipeline_mode = #tpu.pipeline_mode<synchronous>, transform_indices = @transform_8, window_bounds = array<i64: 2, 32, 32>}, {pipeline_mode = #tpu.pipeline_mode<synchronous>, transform_indices = @transform_9, window_bounds = array<i64: 32, 256>}, {pipeline_mode = #tpu.pipeline_mode<synchronous>, transform_indices = @transform_10, window_bounds = array<i64: 256, 32>}, {transform_indices = @transform_11, window_bounds = array<i64: 2, 16, 128>}]} {
    %c0 = arith.constant 0 : index
    %c0_0 = arith.constant 0 : index
    %0 = vector.load %arg10[%c0, %c0_0] : memref<32x256xf32, #tpu.memory_space<vmem>>, vector<32x256xf32>
    %c0_1 = arith.constant 0 : index
    %c0_2 = arith.constant 0 : index
    %1 = vector.load %arg11[%c0_1, %c0_2] : memref<256x32xf32, #tpu.memory_space<vmem>>, vector<256x32xf32>
    %2 = arith.truncf %1 : vector<256x32xf32> to vector<256x32xbf16>
    %c0_3 = arith.constant 0 : index
    %c0_4 = arith.constant 0 : index
    %3 = vector.load %arg1[%c0_3, %c0_4] : memref<128x32xf32, #tpu.memory_space<vmem>>, vector<128x32xf32>
    %4 = arith.truncf %3 : vector<128x32xf32> to vector<128x32xbf16>
    %c0_5 = arith.constant 0 : index
    %c0_6 = arith.constant 0 : index
    %5 = vector.load %arg2[%c0_5, %c0_6] : memref<32x32xbf16, #tpu.memory_space<vmem>>, vector<32x32xbf16>
    %cst = arith.constant dense<0.000000e+00> : vector<128x32xf32>
    %6 = tpu.matmul %4, %5, %cst {dimension_numbers = #tpu.dot_dimension_numbers<[1], [0], [0], [1], [0, 0, 1, 1], [], []>} : vector<128x32xbf16>, vector<32x32xbf16>, vector<128x32xf32> -> vector<128x32xf32>
    %7 = arith.addf %3, %6 : vector<128x32xf32>
    %c0_7 = arith.constant 0 : index
    %c0_8 = arith.constant 0 : index
    %8 = vector.load %arg3[%c0_7, %c0_8] : memref<1x32xf32, #tpu.memory_space<vmem>>, vector<1x32xf32>
    %9 = vector.broadcast %8 : vector<1x32xf32> to vector<128x32xf32>
    %10 = arith.addf %7, %9 : vector<128x32xf32>
    %11 = arith.truncf %10 : vector<128x32xf32> to vector<128x32xbf16>
    %c0_9 = arith.constant 0 : index
    %c0_10 = arith.constant 0 : index
    %c0_11 = arith.constant 0 : index
    %12 = vector.load %arg4[%c0_9, %c0_10, %c0_11] : memref<2x32x128xbf16, #tpu.memory_space<vmem>>, vector<1x32x128xbf16>
    %13 = vector.shape_cast %12 : vector<1x32x128xbf16> to vector<32x128xbf16>
    %cst_12 = arith.constant dense<0.000000e+00> : vector<128x128xf32>
    %14 = tpu.matmul %11, %13, %cst_12 {dimension_numbers = #tpu.dot_dimension_numbers<[1], [0], [0], [1], [0, 0, 1, 1], [], []>} : vector<128x32xbf16>, vector<32x128xbf16>, vector<128x128xf32> -> vector<128x128xf32>
    %c0_13 = arith.constant 0 : index
    %c0_14 = arith.constant 0 : index
    %c0_15 = arith.constant 0 : index
    %15 = vector.load %arg5[%c0_13, %c0_14, %c0_15] : memref<2x1x128xf32, #tpu.memory_space<vmem>>, vector<1x1x128xf32>
    %16 = vector.shape_cast %15 : vector<1x1x128xf32> to vector<1x128xf32>
    %17 = vector.broadcast %16 : vector<1x128xf32> to vector<128x128xf32>
    %18 = arith.addf %14, %17 : vector<128x128xf32>
    %19 = vector.extract_strided_slice %18 {offsets = [0, 0], sizes = [128, 32], strides = [1, 1]} : vector<128x128xf32> to vector<128x32xf32>
    %20 = arith.truncf %19 : vector<128x32xf32> to vector<128x32xbf16>
    %21 = vector.extract_strided_slice %18 {offsets = [0, 32], sizes = [128, 32], strides = [1, 1]} : vector<128x128xf32> to vector<128x32xf32>
    %22 = vector.extract_strided_slice %18 {offsets = [0, 64], sizes = [128, 32], strides = [1, 1]} : vector<128x128xf32> to vector<128x32xf32>
    %23 = vector.extract_strided_slice %20 {offsets = [0, 0], sizes = [64, 32], strides = [1, 1]} : vector<128x32xbf16> to vector<64x32xbf16>
    %24 = vector.extract_strided_slice %21 {offsets = [0, 0], sizes = [64, 32], strides = [1, 1]} : vector<128x32xf32> to vector<64x32xf32>
    %25 = tpu.transpose %24, [1, 0] : vector<64x32xf32> -> vector<32x64xf32>
    %26 = vector.extract_strided_slice %22 {offsets = [0, 0], sizes = [64, 32], strides = [1, 1]} : vector<128x32xf32> to vector<64x32xf32>
    %27 = tpu.concatenate %25, %25, %25, %25 in 1 : vector<32x64xf32>, vector<32x64xf32>, vector<32x64xf32>, vector<32x64xf32> -> vector<32x256xf32>
    %28 = arith.mulf %27, %0 : vector<32x256xf32>
    %29 = arith.truncf %28 : vector<32x256xf32> to vector<32x256xbf16>
    %30 = tpu.concatenate %26, %26, %26, %26 in 0 : vector<64x32xf32>, vector<64x32xf32>, vector<64x32xf32>, vector<64x32xf32> -> vector<256x32xf32>
    %31 = arith.mulf %30, %1 : vector<256x32xf32>
    %32 = arith.truncf %31 : vector<256x32xf32> to vector<256x32xbf16>
    %cst_16 = arith.constant dense<0.000000e+00> : vector<64x256xf32>
    %33 = tpu.matmul %23, %29, %cst_16 {dimension_numbers = #tpu.dot_dimension_numbers<[1], [0], [0], [1], [0, 0, 1, 1], [], []>} : vector<64x32xbf16>, vector<32x256xbf16>, vector<64x256xf32> -> vector<64x256xf32>
    %cst_17 = arith.constant dense<0xFF800000> : vector<64xf32>
    %34 = vector.multi_reduction <maximumf>, %33, %cst_17 [1] : vector<64x256xf32> to vector<64xf32>
    %35 = vector.shape_cast %34 : vector<64xf32> to vector<64x1xf32>
    %36 = vector.broadcast %35 : vector<64x1xf32> to vector<64x256xf32>
    %37 = arith.subf %33, %36 : vector<64x256xf32>
    %38 = math.exp %37 : vector<64x256xf32>
    %39 = arith.truncf %38 : vector<64x256xf32> to vector<64x256xbf16>
    %cst_18 = arith.constant dense<0.000000e+00> : vector<64x32xf32>
    %40 = tpu.matmul %39, %2, %cst_18 {dimension_numbers = #tpu.dot_dimension_numbers<[1], [0], [0], [1], [0, 0, 1, 1], [], []>} : vector<64x256xbf16>, vector<256x32xbf16>, vector<64x32xf32> -> vector<64x32xf32>
    %cst_19 = arith.constant 1.000000e-30 : f32
    %41 = vector.broadcast %cst_19 : f32 to vector<64x32xf32>
    %42 = arith.maximumf %40, %41 : vector<64x32xf32>
    %cst_20 = arith.constant dense<0.000000e+00> : vector<64x32xf32>
    %43 = tpu.matmul %39, %32, %cst_20 {dimension_numbers = #tpu.dot_dimension_numbers<[1], [0], [0], [1], [0, 0, 1, 1], [], []>} : vector<64x256xbf16>, vector<256x32xbf16>, vector<64x32xf32> -> vector<64x32xf32>
    %44 = tpu.reciprocal %42 {approx = true} : vector<64x32xf32> -> vector<64x32xf32>
    %45 = arith.mulf %43, %44 : vector<64x32xf32>
    %c0_21 = arith.constant 0 : index
    %c0_22 = arith.constant 0 : index
    %46 = vector.load %arg13[%c0_21, %c0_22] : memref<128x32xf32, #tpu.memory_space<vmem>>, vector<64x32xf32>
    tpu.vector_store %arg13[%c0_21, %c0_22], %45 {strides = array<i32>} : memref<128x32xf32, #tpu.memory_space<vmem>>, vector<64x32xf32>,
    %47 = vector.extract_strided_slice %20 {offsets = [64, 0], sizes = [64, 32], strides = [1, 1]} : vector<128x32xbf16> to vector<64x32xbf16>
    %48 = vector.extract_strided_slice %21 {offsets = [64, 0], sizes = [64, 32], strides = [1, 1]} : vector<128x32xf32> to vector<64x32xf32>
    %49 = tpu.transpose %48, [1, 0] : vector<64x32xf32> -> vector<32x64xf32>
    %50 = vector.extract_strided_slice %22 {offsets = [64, 0], sizes = [64, 32], strides = [1, 1]} : vector<128x32xf32> to vector<64x32xf32>
    %51 = tpu.concatenate %49, %49, %49, %49 in 1 : vector<32x64xf32>, vector<32x64xf32>, vector<32x64xf32>, vector<32x64xf32> -> vector<32x256xf32>
    %52 = arith.mulf %51, %0 : vector<32x256xf32>
    %53 = arith.truncf %52 : vector<32x256xf32> to vector<32x256xbf16>
    %54 = tpu.concatenate %50, %50, %50, %50 in 0 : vector<64x32xf32>, vector<64x32xf32>, vector<64x32xf32>, vector<64x32xf32> -> vector<256x32xf32>
    %55 = arith.mulf %54, %1 : vector<256x32xf32>
    %56 = arith.truncf %55 : vector<256x32xf32> to vector<256x32xbf16>
    %cst_23 = arith.constant dense<0.000000e+00> : vector<64x256xf32>
    %57 = tpu.matmul %47, %53, %cst_23 {dimension_numbers = #tpu.dot_dimension_numbers<[1], [0], [0], [1], [0, 0, 1, 1], [], []>} : vector<64x32xbf16>, vector<32x256xbf16>, vector<64x256xf32> -> vector<64x256xf32>
    %cst_24 = arith.constant dense<0xFF800000> : vector<64xf32>
    %58 = vector.multi_reduction <maximumf>, %57, %cst_24 [1] : vector<64x256xf32> to vector<64xf32>
    %59 = vector.shape_cast %58 : vector<64xf32> to vector<64x1xf32>
    %60 = vector.broadcast %59 : vector<64x1xf32> to vector<64x256xf32>
    %61 = arith.subf %57, %60 : vector<64x256xf32>
    %62 = math.exp %61 : vector<64x256xf32>
    %63 = arith.truncf %62 : vector<64x256xf32> to vector<64x256xbf16>
    %cst_25 = arith.constant dense<0.000000e+00> : vector<64x32xf32>
    %64 = tpu.matmul %63, %2, %cst_25 {dimension_numbers = #tpu.dot_dimension_numbers<[1], [0], [0], [1], [0, 0, 1, 1], [], []>} : vector<64x256xbf16>, vector<256x32xbf16>, vector<64x32xf32> -> vector<64x32xf32>
    %cst_26 = arith.constant 1.000000e-30 : f32
    %65 = vector.broadcast %cst_26 : f32 to vector<64x32xf32>
    %66 = arith.maximumf %64, %65 : vector<64x32xf32>
    %cst_27 = arith.constant dense<0.000000e+00> : vector<64x32xf32>
    %67 = tpu.matmul %63, %56, %cst_27 {dimension_numbers = #tpu.dot_dimension_numbers<[1], [0], [0], [1], [0, 0, 1, 1], [], []>} : vector<64x256xbf16>, vector<256x32xbf16>, vector<64x32xf32> -> vector<64x32xf32>
    %68 = tpu.reciprocal %66 {approx = true} : vector<64x32xf32> -> vector<64x32xf32>
    %69 = arith.mulf %67, %68 : vector<64x32xf32>
    %c64 = arith.constant 64 : index
    %c0_28 = arith.constant 0 : index
    %70 = vector.load %arg13[%c64, %c0_28] : memref<128x32xf32, #tpu.memory_space<vmem>>, vector<64x32xf32>
    tpu.vector_store %arg13[%c64, %c0_28], %69 {strides = array<i32>} : memref<128x32xf32, #tpu.memory_space<vmem>>, vector<64x32xf32>,
    %c0_29 = arith.constant 0 : index
    %c0_30 = arith.constant 0 : index
    %71 = vector.load %arg13[%c0_29, %c0_30] : memref<128x32xf32, #tpu.memory_space<vmem>>, vector<128x32xf32>
    %72 = arith.truncf %71 : vector<128x32xf32> to vector<128x32xbf16>
    %c0_31 = arith.constant 0 : index
    %c0_32 = arith.constant 0 : index
    %c0_33 = arith.constant 0 : index
    %73 = vector.load %arg6[%c0_31, %c0_32, %c0_33] : memref<2x32x32xbf16, #tpu.memory_space<vmem>>, vector<1x32x32xbf16>
    %74 = vector.shape_cast %73 : vector<1x32x32xbf16> to vector<32x32xbf16>
    %cst_34 = arith.constant dense<0.000000e+00> : vector<128x32xf32>
    %75 = tpu.matmul %72, %74, %cst_34 {dimension_numbers = #tpu.dot_dimension_numbers<[1], [0], [0], [1], [0, 0, 1, 1], [], []>} : vector<128x32xbf16>, vector<32x32xbf16>, vector<128x32xf32> -> vector<128x32xf32>
    %76 = arith.addf %10, %75 : vector<128x32xf32>
    %c0_35 = arith.constant 0 : index
    %c0_36 = arith.constant 0 : index
    %c0_37 = arith.constant 0 : index
    %77 = vector.load %arg7[%c0_35, %c0_36, %c0_37] : memref<2x1x32xf32, #tpu.memory_space<vmem>>, vector<1x1x32xf32>
    %78 = vector.shape_cast %77 : vector<1x1x32xf32> to vector<1x32xf32>
    %79 = vector.broadcast %78 : vector<1x32xf32> to vector<128x32xf32>
    %80 = arith.addf %76, %79 : vector<128x32xf32>
    %81 = arith.truncf %80 : vector<128x32xf32> to vector<128x32xbf16>
    %c0_38 = arith.constant 0 : index
    %c0_39 = arith.constant 0 : index
    %c0_40 = arith.constant 0 : index
    %82 = vector.load %arg8[%c0_38, %c0_39, %c0_40] : memref<2x32x32xbf16, #tpu.memory_space<vmem>>, vector<1x32x32xbf16>
    %83 = vector.shape_cast %82 : vector<1x32x32xbf16> to vector<32x32xbf16>
    %cst_41 = arith.constant dense<0.000000e+00> : vector<128x32xf32>
    %84 = tpu.matmul %81, %83, %cst_41 {dimension_numbers = #tpu.dot_dimension_numbers<[1], [0], [0], [1], [0, 0, 1, 1], [], []>} : vector<128x32xbf16>, vector<32x32xbf16>, vector<128x32xf32> -> vector<128x32xf32>
    %85 = arith.truncf %84 : vector<128x32xf32> to vector<128x32xbf16>
    %c0_42 = arith.constant 0 : index
    %c0_43 = arith.constant 0 : index
    %c0_44 = arith.constant 0 : index
    %86 = vector.load %arg9[%c0_42, %c0_43, %c0_44] : memref<2x32x32xbf16, #tpu.memory_space<vmem>>, vector<1x32x32xbf16>
    %87 = vector.shape_cast %86 : vector<1x32x32xbf16> to vector<32x32xbf16>
    %cst_45 = arith.constant dense<0.000000e+00> : vector<128x32xf32>
    %88 = tpu.matmul %85, %87, %cst_45 {dimension_numbers = #tpu.dot_dimension_numbers<[1], [0], [0], [1], [0, 0, 1, 1], [], []>} : vector<128x32xbf16>, vector<32x32xbf16>, vector<128x32xf32> -> vector<128x32xf32>
    %89 = arith.addf %80, %88 : vector<128x32xf32>
    %90 = arith.truncf %89 : vector<128x32xf32> to vector<128x32xbf16>
    %c1 = arith.constant 1 : index
    %c0_46 = arith.constant 0 : index
    %c0_47 = arith.constant 0 : index
    %91 = vector.load %arg4[%c1, %c0_46, %c0_47] : memref<2x32x128xbf16, #tpu.memory_space<vmem>>, vector<1x32x128xbf16>
    %92 = vector.shape_cast %91 : vector<1x32x128xbf16> to vector<32x128xbf16>
    %cst_48 = arith.constant dense<0.000000e+00> : vector<128x128xf32>
    %93 = tpu.matmul %90, %92, %cst_48 {dimension_numbers = #tpu.dot_dimension_numbers<[1], [0], [0], [1], [0, 0, 1, 1], [], []>} : vector<128x32xbf16>, vector<32x128xbf16>, vector<128x128xf32> -> vector<128x128xf32>
    %c1_49 = arith.constant 1 : index
    %c0_50 = arith.constant 0 : index
    %c0_51 = arith.constant 0 : index
    %94 = vector.load %arg5[%c1_49, %c0_50, %c0_51] : memref<2x1x128xf32, #tpu.memory_space<vmem>>, vector<1x1x128xf32>
    %95 = vector.shape_cast %94 : vector<1x1x128xf32> to vector<1x128xf32>
    %96 = vector.broadcast %95 : vector<1x128xf32> to vector<128x128xf32>
    %97 = arith.addf %93, %96 : vector<128x128xf32>
    %98 = vector.extract_strided_slice %97 {offsets = [0, 0], sizes = [128, 32], strides = [1, 1]} : vector<128x128xf32> to vector<128x32xf32>
    %99 = arith.truncf %98 : vector<128x32xf32> to vector<128x32xbf16>
    %100 = vector.extract_strided_slice %97 {offsets = [0, 32], sizes = [128, 32], strides = [1, 1]} : vector<128x128xf32> to vector<128x32xf32>
    %101 = vector.extract_strided_slice %97 {offsets = [0, 64], sizes = [128, 32], strides = [1, 1]} : vector<128x128xf32> to vector<128x32xf32>
    %102 = vector.extract_strided_slice %99 {offsets = [0, 0], sizes = [64, 32], strides = [1, 1]} : vector<128x32xbf16> to vector<64x32xbf16>
    %103 = vector.extract_strided_slice %100 {offsets = [0, 0], sizes = [64, 32], strides = [1, 1]} : vector<128x32xf32> to vector<64x32xf32>
    %104 = tpu.transpose %103, [1, 0] : vector<64x32xf32> -> vector<32x64xf32>
    %105 = vector.extract_strided_slice %101 {offsets = [0, 0], sizes = [64, 32], strides = [1, 1]} : vector<128x32xf32> to vector<64x32xf32>
    %106 = tpu.concatenate %104, %104, %104, %104 in 1 : vector<32x64xf32>, vector<32x64xf32>, vector<32x64xf32>, vector<32x64xf32> -> vector<32x256xf32>
    %107 = arith.mulf %106, %0 : vector<32x256xf32>
    %108 = arith.truncf %107 : vector<32x256xf32> to vector<32x256xbf16>
    %109 = tpu.concatenate %105, %105, %105, %105 in 0 : vector<64x32xf32>, vector<64x32xf32>, vector<64x32xf32>, vector<64x32xf32> -> vector<256x32xf32>
    %110 = arith.mulf %109, %1 : vector<256x32xf32>
    %111 = arith.truncf %110 : vector<256x32xf32> to vector<256x32xbf16>
    %cst_52 = arith.constant dense<0.000000e+00> : vector<64x256xf32>
    %112 = tpu.matmul %102, %108, %cst_52 {dimension_numbers = #tpu.dot_dimension_numbers<[1], [0], [0], [1], [0, 0, 1, 1], [], []>} : vector<64x32xbf16>, vector<32x256xbf16>, vector<64x256xf32> -> vector<64x256xf32>
    %cst_53 = arith.constant dense<0xFF800000> : vector<64xf32>
    %113 = vector.multi_reduction <maximumf>, %112, %cst_53 [1] : vector<64x256xf32> to vector<64xf32>
    %114 = vector.shape_cast %113 : vector<64xf32> to vector<64x1xf32>
    %115 = vector.broadcast %114 : vector<64x1xf32> to vector<64x256xf32>
    %116 = arith.subf %112, %115 : vector<64x256xf32>
    %117 = math.exp %116 : vector<64x256xf32>
    %118 = arith.truncf %117 : vector<64x256xf32> to vector<64x256xbf16>
    %cst_54 = arith.constant dense<0.000000e+00> : vector<64x32xf32>
    %119 = tpu.matmul %118, %2, %cst_54 {dimension_numbers = #tpu.dot_dimension_numbers<[1], [0], [0], [1], [0, 0, 1, 1], [], []>} : vector<64x256xbf16>, vector<256x32xbf16>, vector<64x32xf32> -> vector<64x32xf32>
    %cst_55 = arith.constant 1.000000e-30 : f32
    %120 = vector.broadcast %cst_55 : f32 to vector<64x32xf32>
    %121 = arith.maximumf %119, %120 : vector<64x32xf32>
    %cst_56 = arith.constant dense<0.000000e+00> : vector<64x32xf32>
    %122 = tpu.matmul %118, %111, %cst_56 {dimension_numbers = #tpu.dot_dimension_numbers<[1], [0], [0], [1], [0, 0, 1, 1], [], []>} : vector<64x256xbf16>, vector<256x32xbf16>, vector<64x32xf32> -> vector<64x32xf32>
    %123 = tpu.reciprocal %121 {approx = true} : vector<64x32xf32> -> vector<64x32xf32>
    %124 = arith.mulf %122, %123 : vector<64x32xf32>
    %c0_57 = arith.constant 0 : index
    %c0_58 = arith.constant 0 : index
    %125 = vector.load %arg13[%c0_57, %c0_58] : memref<128x32xf32, #tpu.memory_space<vmem>>, vector<64x32xf32>
    tpu.vector_store %arg13[%c0_57, %c0_58], %124 {strides = array<i32>} : memref<128x32xf32, #tpu.memory_space<vmem>>, vector<64x32xf32>,
    %126 = vector.extract_strided_slice %99 {offsets = [64, 0], sizes = [64, 32], strides = [1, 1]} : vector<128x32xbf16> to vector<64x32xbf16>
    %127 = vector.extract_strided_slice %100 {offsets = [64, 0], sizes = [64, 32], strides = [1, 1]} : vector<128x32xf32> to vector<64x32xf32>
    %128 = tpu.transpose %127, [1, 0] : vector<64x32xf32> -> vector<32x64xf32>
    %129 = vector.extract_strided_slice %101 {offsets = [64, 0], sizes = [64, 32], strides = [1, 1]} : vector<128x32xf32> to vector<64x32xf32>
    %130 = tpu.concatenate %128, %128, %128, %128 in 1 : vector<32x64xf32>, vector<32x64xf32>, vector<32x64xf32>, vector<32x64xf32> -> vector<32x256xf32>
    %131 = arith.mulf %130, %0 : vector<32x256xf32>
    %132 = arith.truncf %131 : vector<32x256xf32> to vector<32x256xbf16>
    %133 = tpu.concatenate %129, %129, %129, %129 in 0 : vector<64x32xf32>, vector<64x32xf32>, vector<64x32xf32>, vector<64x32xf32> -> vector<256x32xf32>
    %134 = arith.mulf %133, %1 : vector<256x32xf32>
    %135 = arith.truncf %134 : vector<256x32xf32> to vector<256x32xbf16>
    %cst_59 = arith.constant dense<0.000000e+00> : vector<64x256xf32>
    %136 = tpu.matmul %126, %132, %cst_59 {dimension_numbers = #tpu.dot_dimension_numbers<[1], [0], [0], [1], [0, 0, 1, 1], [], []>} : vector<64x32xbf16>, vector<32x256xbf16>, vector<64x256xf32> -> vector<64x256xf32>
    %cst_60 = arith.constant dense<0xFF800000> : vector<64xf32>
    %137 = vector.multi_reduction <maximumf>, %136, %cst_60 [1] : vector<64x256xf32> to vector<64xf32>
    %138 = vector.shape_cast %137 : vector<64xf32> to vector<64x1xf32>
    %139 = vector.broadcast %138 : vector<64x1xf32> to vector<64x256xf32>
    %140 = arith.subf %136, %139 : vector<64x256xf32>
    %141 = math.exp %140 : vector<64x256xf32>
    %142 = arith.truncf %141 : vector<64x256xf32> to vector<64x256xbf16>
    %cst_61 = arith.constant dense<0.000000e+00> : vector<64x32xf32>
    %143 = tpu.matmul %142, %2, %cst_61 {dimension_numbers = #tpu.dot_dimension_numbers<[1], [0], [0], [1], [0, 0, 1, 1], [], []>} : vector<64x256xbf16>, vector<256x32xbf16>, vector<64x32xf32> -> vector<64x32xf32>
    %cst_62 = arith.constant 1.000000e-30 : f32
    %144 = vector.broadcast %cst_62 : f32 to vector<64x32xf32>
    %145 = arith.maximumf %143, %144 : vector<64x32xf32>
    %cst_63 = arith.constant dense<0.000000e+00> : vector<64x32xf32>
    %146 = tpu.matmul %142, %135, %cst_63 {dimension_numbers = #tpu.dot_dimension_numbers<[1], [0], [0], [1], [0, 0, 1, 1], [], []>} : vector<64x256xbf16>, vector<256x32xbf16>, vector<64x32xf32> -> vector<64x32xf32>
    %147 = tpu.reciprocal %145 {approx = true} : vector<64x32xf32> -> vector<64x32xf32>
    %148 = arith.mulf %146, %147 : vector<64x32xf32>
    %c64_64 = arith.constant 64 : index
    %c0_65 = arith.constant 0 : index
    %149 = vector.load %arg13[%c64_64, %c0_65] : memref<128x32xf32, #tpu.memory_space<vmem>>, vector<64x32xf32>
    tpu.vector_store %arg13[%c64_64, %c0_65], %148 {strides = array<i32>} : memref<128x32xf32, #tpu.memory_space<vmem>>, vector<64x32xf32>,
    %c0_66 = arith.constant 0 : index
    %c0_67 = arith.constant 0 : index
    %150 = vector.load %arg13[%c0_66, %c0_67] : memref<128x32xf32, #tpu.memory_space<vmem>>, vector<128x32xf32>
    %151 = arith.truncf %150 : vector<128x32xf32> to vector<128x32xbf16>
    %c1_68 = arith.constant 1 : index
    %c0_69 = arith.constant 0 : index
    %c0_70 = arith.constant 0 : index
    %152 = vector.load %arg6[%c1_68, %c0_69, %c0_70] : memref<2x32x32xbf16, #tpu.memory_space<vmem>>, vector<1x32x32xbf16>
    %153 = vector.shape_cast %152 : vector<1x32x32xbf16> to vector<32x32xbf16>
    %cst_71 = arith.constant dense<0.000000e+00> : vector<128x32xf32>
    %154 = tpu.matmul %151, %153, %cst_71 {dimension_numbers = #tpu.dot_dimension_numbers<[1], [0], [0], [1], [0, 0, 1, 1], [], []>} : vector<128x32xbf16>, vector<32x32xbf16>, vector<128x32xf32> -> vector<128x32xf32>
    %155 = arith.addf %89, %154 : vector<128x32xf32>
    %c1_72 = arith.constant 1 : index
    %c0_73 = arith.constant 0 : index
    %c0_74 = arith.constant 0 : index
    %156 = vector.load %arg7[%c1_72, %c0_73, %c0_74] : memref<2x1x32xf32, #tpu.memory_space<vmem>>, vector<1x1x32xf32>
    %157 = vector.shape_cast %156 : vector<1x1x32xf32> to vector<1x32xf32>
    %158 = vector.broadcast %157 : vector<1x32xf32> to vector<128x32xf32>
    %159 = arith.addf %155, %158 : vector<128x32xf32>
    %160 = arith.truncf %159 : vector<128x32xf32> to vector<128x32xbf16>
    %c1_75 = arith.constant 1 : index
    %c0_76 = arith.constant 0 : index
    %c0_77 = arith.constant 0 : index
    %161 = vector.load %arg8[%c1_75, %c0_76, %c0_77] : memref<2x32x32xbf16, #tpu.memory_space<vmem>>, vector<1x32x32xbf16>
    %162 = vector.shape_cast %161 : vector<1x32x32xbf16> to vector<32x32xbf16>
    %cst_78 = arith.constant dense<0.000000e+00> : vector<128x32xf32>
    %163 = tpu.matmul %160, %162, %cst_78 {dimension_numbers = #tpu.dot_dimension_numbers<[1], [0], [0], [1], [0, 0, 1, 1], [], []>} : vector<128x32xbf16>, vector<32x32xbf16>, vector<128x32xf32> -> vector<128x32xf32>
    %164 = arith.truncf %163 : vector<128x32xf32> to vector<128x32xbf16>
    %c1_79 = arith.constant 1 : index
    %c0_80 = arith.constant 0 : index
    %c0_81 = arith.constant 0 : index
    %165 = vector.load %arg9[%c1_79, %c0_80, %c0_81] : memref<2x32x32xbf16, #tpu.memory_space<vmem>>, vector<1x32x32xbf16>
    %166 = vector.shape_cast %165 : vector<1x32x32xbf16> to vector<32x32xbf16>
    %cst_82 = arith.constant dense<0.000000e+00> : vector<128x32xf32>
    %167 = tpu.matmul %164, %166, %cst_82 {dimension_numbers = #tpu.dot_dimension_numbers<[1], [0], [0], [1], [0, 0, 1, 1], [], []>} : vector<128x32xbf16>, vector<32x32xbf16>, vector<128x32xf32> -> vector<128x32xf32>
    %168 = arith.addf %159, %167 : vector<128x32xf32>
    %169 = vector.extract_strided_slice %168 {offsets = [0, 0], sizes = [16, 32], strides = [1, 1]} : vector<128x32xf32> to vector<16x32xf32>
    %170 = vector.extract_strided_slice %168 {offsets = [16, 0], sizes = [16, 32], strides = [1, 1]} : vector<128x32xf32> to vector<16x32xf32>
    %171 = vector.extract_strided_slice %168 {offsets = [32, 0], sizes = [16, 32], strides = [1, 1]} : vector<128x32xf32> to vector<16x32xf32>
    %172 = vector.extract_strided_slice %168 {offsets = [48, 0], sizes = [16, 32], strides = [1, 1]} : vector<128x32xf32> to vector<16x32xf32>
    %173 = tpu.concatenate %169, %170, %171, %172 in 1 : vector<16x32xf32>, vector<16x32xf32>, vector<16x32xf32>, vector<16x32xf32> -> vector<16x128xf32>
    %c0_83 = arith.constant 0 : index
    %c0_84 = arith.constant 0 : index
    %c0_85 = arith.constant 0 : index
    %174 = vector.load %arg12[%c0_83, %c0_84, %c0_85] : memref<2x16x128xf32, #tpu.memory_space<vmem>>, vector<1x16x128xf32>
    %175 = vector.shape_cast %174 : vector<1x16x128xf32> to vector<16x128xf32>
    %176 = vector.shape_cast %173 : vector<16x128xf32> to vector<1x16x128xf32>
    tpu.vector_store %arg12[%c0_83, %c0_84, %c0_85], %176 {strides = array<i32>} : memref<2x16x128xf32, #tpu.memory_space<vmem>>, vector<1x16x128xf32>,
    %177 = vector.extract_strided_slice %168 {offsets = [64, 0], sizes = [16, 32], strides = [1, 1]} : vector<128x32xf32> to vector<16x32xf32>
    %178 = vector.extract_strided_slice %168 {offsets = [80, 0], sizes = [16, 32], strides = [1, 1]} : vector<128x32xf32> to vector<16x32xf32>
    %179 = vector.extract_strided_slice %168 {offsets = [96, 0], sizes = [16, 32], strides = [1, 1]} : vector<128x32xf32> to vector<16x32xf32>
    %180 = vector.extract_strided_slice %168 {offsets = [112, 0], sizes = [16, 32], strides = [1, 1]} : vector<128x32xf32> to vector<16x32xf32>
    %181 = tpu.concatenate %177, %178, %179, %180 in 1 : vector<16x32xf32>, vector<16x32xf32>, vector<16x32xf32>, vector<16x32xf32> -> vector<16x128xf32>
    %c1_86 = arith.constant 1 : index
    %c0_87 = arith.constant 0 : index
    %c0_88 = arith.constant 0 : index
    %182 = vector.load %arg12[%c1_86, %c0_87, %c0_88] : memref<2x16x128xf32, #tpu.memory_space<vmem>>, vector<1x16x128xf32>
    %183 = vector.shape_cast %182 : vector<1x16x128xf32> to vector<16x128xf32>
    %184 = vector.shape_cast %181 : vector<16x128xf32> to vector<1x16x128xf32>
    tpu.vector_store %arg12[%c1_86, %c0_87, %c0_88], %184 {strides = array<i32>} : memref<2x16x128xf32, #tpu.memory_space<vmem>>, vector<1x16x128xf32>,
    return
  }
  func.func @transform_0(%arg0: i32) -> (i32, i32) {
    %c0_i32 = arith.constant 0 : i32
    %c0_i32_0 = arith.constant 0 : i32
    return %arg0, %c0_i32 : i32, i32
  }
  func.func @transform_1(%arg0: i32) -> (i32, i32) {
    %c0_i32 = arith.constant 0 : i32
    %c0_i32_0 = arith.constant 0 : i32
    %c0_i32_1 = arith.constant 0 : i32
    return %c0_i32, %c0_i32_0 : i32, i32
  }
  func.func @transform_2(%arg0: i32) -> (i32, i32) {
    %c0_i32 = arith.constant 0 : i32
    %c0_i32_0 = arith.constant 0 : i32
    %c0_i32_1 = arith.constant 0 : i32
    return %c0_i32, %c0_i32_0 : i32, i32
  }
  func.func @transform_3(%arg0: i32) -> (i32, i32, i32) {
    %c0_i32 = arith.constant 0 : i32
    %c0_i32_0 = arith.constant 0 : i32
    %c0_i32_1 = arith.constant 0 : i32
    %c0_i32_2 = arith.constant 0 : i32
    return %c0_i32, %c0_i32_0, %c0_i32_1 : i32, i32, i32
  }
  func.func @transform_4(%arg0: i32) -> (i32, i32, i32) {
    %c0_i32 = arith.constant 0 : i32
    %c0_i32_0 = arith.constant 0 : i32
    %c0_i32_1 = arith.constant 0 : i32
    %c0_i32_2 = arith.constant 0 : i32
    return %c0_i32, %c0_i32_0, %c0_i32_1 : i32, i32, i32
  }
  func.func @transform_5(%arg0: i32) -> (i32, i32, i32) {
    %c0_i32 = arith.constant 0 : i32
    %c0_i32_0 = arith.constant 0 : i32
    %c0_i32_1 = arith.constant 0 : i32
    %c0_i32_2 = arith.constant 0 : i32
    return %c0_i32, %c0_i32_0, %c0_i32_1 : i32, i32, i32
  }
  func.func @transform_6(%arg0: i32) -> (i32, i32, i32) {
    %c0_i32 = arith.constant 0 : i32
    %c0_i32_0 = arith.constant 0 : i32
    %c0_i32_1 = arith.constant 0 : i32
    %c0_i32_2 = arith.constant 0 : i32
    return %c0_i32, %c0_i32_0, %c0_i32_1 : i32, i32, i32
  }
  func.func @transform_7(%arg0: i32) -> (i32, i32, i32) {
    %c0_i32 = arith.constant 0 : i32
    %c0_i32_0 = arith.constant 0 : i32
    %c0_i32_1 = arith.constant 0 : i32
    %c0_i32_2 = arith.constant 0 : i32
    return %c0_i32, %c0_i32_0, %c0_i32_1 : i32, i32, i32
  }
  func.func @transform_8(%arg0: i32) -> (i32, i32, i32) {
    %c0_i32 = arith.constant 0 : i32
    %c0_i32_0 = arith.constant 0 : i32
    %c0_i32_1 = arith.constant 0 : i32
    %c0_i32_2 = arith.constant 0 : i32
    return %c0_i32, %c0_i32_0, %c0_i32_1 : i32, i32, i32
  }
  func.func @transform_9(%arg0: i32) -> (i32, i32) {
    %c0_i32 = arith.constant 0 : i32
    %c0_i32_0 = arith.constant 0 : i32
    %c0_i32_1 = arith.constant 0 : i32
    return %c0_i32, %c0_i32_0 : i32, i32
  }
  func.func @transform_10(%arg0: i32) -> (i32, i32) {
    %c0_i32 = arith.constant 0 : i32
    %c0_i32_0 = arith.constant 0 : i32
    %c0_i32_1 = arith.constant 0 : i32
    return %c0_i32, %c0_i32_0 : i32, i32
  }
  func.func @transform_11(%arg0: i32) -> (i32, i32, i32) {
    %c0_i32 = arith.constant 0 : i32
    %c0_i32_0 = arith.constant 0 : i32
    %c0_i32_1 = arith.constant 0 : i32
    return %arg0, %c0_i32, %c0_i32_0 : i32, i32, i32
  }
}

</mosaic_0001>

<llo_original>
// kernel: tpu_custom_call.1
$region0: #{tpu_custom_call.1}
  #allocation0 [shape = 'u32[]', space=smem, size = 0x4, offset = 0x4, fixed_abs, tag = 'smem constant byte address 0x4 - core index']
  #allocation1 [shape = 'u32[144,128]{1,0:T(1,128)}', space=vmem, size = 0x12000, scoped, tag = 'internal scratch']
  #allocation2 [shape = 'f32[128,32]{1,0:T(8,128)}', space=vmem, size = 0x10000, scoped, tag = 'scratch operand']
  %s0 = inlined_call_operand.vmem [shape: f32[128,32], index: 0, kind: input, shape index: {}]
  %s1 = inlined_call_operand.vmem [shape: bf16[32,32], index: 1, kind: input, shape index: {}]
  %s2 = inlined_call_operand.vmem [shape: f32[1,32], index: 2, kind: input, shape index: {}]
  %s3 = inlined_call_operand.vmem [shape: bf16[2,32,128], index: 3, kind: input, shape index: {}]
  %s4 = inlined_call_operand.vmem [shape: f32[2,1,128], index: 4, kind: input, shape index: {}]
  %s5 = inlined_call_operand.vmem [shape: bf16[2,32,32], index: 5, kind: input, shape index: {}]
  %s6 = inlined_call_operand.vmem [shape: f32[2,1,32], index: 6, kind: input, shape index: {}]
  %s7 = inlined_call_operand.vmem [shape: bf16[2,32,32], index: 7, kind: input, shape index: {}]
  %s8 = inlined_call_operand.vmem [shape: bf16[2,32,32], index: 8, kind: input, shape index: {}]
  %s9 = inlined_call_operand.vmem [shape: f32[32,256], index: 9, kind: input, shape index: {}]
  %s10 = inlined_call_operand.vmem [shape: f32[256,32], index: 10, kind: input, shape index: {}]
  %s11 = inlined_call_operand.hbm [shape: f32[2,16,128], index: 11, kind: output, shape index: {}]
  %s12 = sld [smem:[#allocation0]]
  $region54: #{tpu_custom_call.1} parent=0
    _
  %s14 = ssub.s32 1, %s12
  %s15 = scalar_select 0, %s14, %s12
  $region1: #{tpu_custom_call.1} parent=0
    #allocation3 [shape = 'u8[16384]{0}', space=vmem, size = 0x4000, scoped, tag = 'output window, operand 0, single buffered']
    #allocation4 [shape = 's32[1]{0}', space=sflag, size = 0x4, scoped, tag = 'scoped memory for tpu_custom_call.1']
    %16 = vsyncpa [#allocation4], 0
    // Predicated region
    $region2: #{tpu_custom_call.1} parent=1 // pred_check
      _
    $region3: #{tpu_custom_call.1} parent=1 // pred_check_branch
      %18 = sbr.rel (0) target = $region5
    $region4: #{tpu_custom_call.1} parent=1 // pred_region
      _
    $region5: #{tpu_custom_call.1} parent=1 // pred_fallthru
      _
    // Predicated region
    $region6: #{tpu_custom_call.1} parent=1 // pred_check
      _
    $region7: #{tpu_custom_call.1} parent=1 // pred_check_branch
      %20 = sbr.rel (0) target = $region9
    $region8: #{tpu_custom_call.1} parent=1 // pred_region
      _
    $region9: #{tpu_custom_call.1} parent=1 // pred_fallthru
      _
    // Predicated region
    $region10: #{tpu_custom_call.1} parent=1 // pred_check
      _
    $region11: #{tpu_custom_call.1} parent=1 // pred_check_branch
      %22 = sbr.rel (0) target = $region13
    $region12: #{tpu_custom_call.1} parent=1 // pred_region
      _
    $region13: #{tpu_custom_call.1} parent=1 // pred_fallthru
      _
    // Predicated region
    $region14: #{tpu_custom_call.1} parent=1 // pred_check
      _
    $region15: #{tpu_custom_call.1} parent=1 // pred_check_branch
      %24 = sbr.rel (0) target = $region17
    $region16: #{tpu_custom_call.1} parent=1 // pred_region
      _
    $region17: #{tpu_custom_call.1} parent=1 // pred_fallthru
      _
    // Predicated region
    $region18: #{tpu_custom_call.1} parent=1 // pred_check
      _
    $region19: #{tpu_custom_call.1} parent=1 // pred_check_branch
      %26 = sbr.rel (0) target = $region21
    $region20: #{tpu_custom_call.1} parent=1 // pred_region
      _
    $region21: #{tpu_custom_call.1} parent=1 // pred_fallthru
      _
    // Predicated region
    $region22: #{tpu_custom_call.1} parent=1 // pred_check
      _
    $region23: #{tpu_custom_call.1} parent=1 // pred_check_branch
      %28 = sbr.rel (0) target = $region25
    $region24: #{tpu_custom_call.1} parent=1 // pred_region
      _
    $region25: #{tpu_custom_call.1} parent=1 // pred_fallthru
      _
    // Predicated region
    $region26: #{tpu_custom_call.1} parent=1 // pred_check
      _
    $region27: #{tpu_custom_call.1} parent=1 // pred_check_branch
      %30 = sbr.rel (0) target = $region29
    $region28: #{tpu_custom_call.1} parent=1 // pred_region
      _
    $region29: #{tpu_custom_call.1} parent=1 // pred_fallthru
      _
    // Predicated region
    $region30: #{tpu_custom_call.1} parent=1 // pred_check
      _
    $region31: #{tpu_custom_call.1} parent=1 // pred_check_branch
      %32 = sbr.rel (0) target = $region33
    $region32: #{tpu_custom_call.1} parent=1 // pred_region
      _
    $region33: #{tpu_custom_call.1} parent=1 // pred_fallthru
      _
    // Predicated region
    $region34: #{tpu_custom_call.1} parent=1 // pred_check
      _
    $region35: #{tpu_custom_call.1} parent=1 // pred_check_branch
      %34 = sbr.rel (0) target = $region37
    $region36: #{tpu_custom_call.1} parent=1 // pred_region
      _
    $region37: #{tpu_custom_call.1} parent=1 // pred_fallthru
      _
    // Predicated region
    $region38: #{tpu_custom_call.1} parent=1 // pred_check
      _
    $region39: #{tpu_custom_call.1} parent=1 // pred_check_branch
      %36 = sbr.rel (0) target = $region41
    $region40: #{tpu_custom_call.1} parent=1 // pred_region
      _
    $region41: #{tpu_custom_call.1} parent=1 // pred_fallthru
      _
    // Predicated region
    $region42: #{tpu_custom_call.1} parent=1 // pred_check
      _
    $region43: #{tpu_custom_call.1} parent=1 // pred_check_branch
      %38 = sbr.rel (0) target = $region45
    $region44: #{tpu_custom_call.1} parent=1 // pred_region
      _
    $region45: #{tpu_custom_call.1} parent=1 // pred_fallthru
      _
    %v40 = vld [vmem:[%s9] sm:$0xff]
    %v41 = vld [vmem:[%s9 + $0x8] sm:$0xff]
    %v42 = vld [vmem:[%s9 + $0x10] sm:$0xff]
    %v43 = vld [vmem:[%s9 + $0x18] sm:$0xff]
    %v44 = vld [vmem:[%s9 + $0x20] sm:$0xff]
    %v45 = vld [vmem:[%s9 + $0x28] sm:$0xff]
    %v46 = vld [vmem:[%s9 + $0x30] sm:$0xff]
    %v47 = vld [vmem:[%s9 + $0x38] sm:$0xff]
    %v48 = vld [vmem:[%s10] sm:$0xff]
    %v49 = vld [vmem:[%s10 + $0x8] sm:$0xff]
    %v50 = vld [vmem:[%s10 + $0x10] sm:$0xff]
    %v51 = vld [vmem:[%s10 + $0x18] sm:$0xff]
    %v52 = vld [vmem:[%s10 + $0x20] sm:$0xff]
    %v53 = vld [vmem:[%s10 + $0x28] sm:$0xff]
    %v54 = vld [vmem:[%s10 + $0x30] sm:$0xff]
    %v55 = vld [vmem:[%s10 + $0x38] sm:$0xff]
    %v56 = vld [vmem:[%s10 + $0x40] sm:$0xff]
    %v57 = vld [vmem:[%s10 + $0x48] sm:$0xff]
    %v58 = vld [vmem:[%s10 + $0x50] sm:$0xff]
    %v59 = vld [vmem:[%s10 + $0x58] sm:$0xff]
    %v60 = vld [vmem:[%s10 + $0x60] sm:$0xff]
    %v61 = vld [vmem:[%s10 + $0x68] sm:$0xff]
    %v62 = vld [vmem:[%s10 + $0x70] sm:$0xff]
    %v63 = vld [vmem:[%s10 + $0x78] sm:$0xff]
    %v64 = vld [vmem:[%s10 + $0x80] sm:$0xff]
    %v65 = vld [vmem:[%s10 + $0x88] sm:$0xff]
    %v66 = vld [vmem:[%s10 + $0x90] sm:$0xff]
    %v67 = vld [vmem:[%s10 + $0x98] sm:$0xff]
    %v68 = vld [vmem:[%s10 + $0xa0] sm:$0xff]
    %v69 = vld [vmem:[%s10 + $0xa8] sm:$0xff]
    %v70 = vld [vmem:[%s10 + $0xb0] sm:$0xff]
    %v71 = vld [vmem:[%s10 + $0xb8] sm:$0xff]
    %v72 = vld [vmem:[%s10 + $0xc0] sm:$0xff]
    %v73 = vld [vmem:[%s10 + $0xc8] sm:$0xff]
    %v74 = vld [vmem:[%s10 + $0xd0] sm:$0xff]
    %v75 = vld [vmem:[%s10 + $0xd8] sm:$0xff]
    %v76 = vld [vmem:[%s10 + $0xe0] sm:$0xff]
    %v77 = vld [vmem:[%s10 + $0xe8] sm:$0xff]
    %v78 = vld [vmem:[%s10 + $0xf0] sm:$0xff]
    %v79 = vld [vmem:[%s10 + $0xf8] sm:$0xff]
    %v80 = vpack.c.bf16 %v49, %v48
    %v81 = vpack.c.bf16 %v51, %v50
    %v82 = vpack.c.bf16 %v53, %v52
    %v83 = vpack.c.bf16 %v55, %v54
    %v84 = vpack.c.bf16 %v57, %v56
    %v85 = vpack.c.bf16 %v59, %v58
    %v86 = vpack.c.bf16 %v61, %v60
    %v87 = vpack.c.bf16 %v63, %v62
    %v88 = vpack.c.bf16 %v65, %v64
    %v89 = vpack.c.bf16 %v67, %v66
    %v90 = vpack.c.bf16 %v69, %v68
    %v91 = vpack.c.bf16 %v71, %v70
    %v92 = vpack.c.bf16 %v73, %v72
    %v93 = vpack.c.bf16 %v75, %v74
    %v94 = vpack.c.bf16 %v77, %v76
    %v95 = vpack.c.bf16 %v79, %v78
    %v96 = vld [vmem:[%s0] sm:$0xff]
    %v97 = vld [vmem:[%s0 + $0x8] sm:$0xff]
    %v98 = vld [vmem:[%s0 + $0x10] sm:$0xff]
    %v99 = vld [vmem:[%s0 + $0x18] sm:$0xff]
    %v100 = vld [vmem:[%s0 + $0x20] sm:$0xff]
    %v101 = vld [vmem:[%s0 + $0x28] sm:$0xff]
    %v102 = vld [vmem:[%s0 + $0x30] sm:$0xff]
    %v103 = vld [vmem:[%s0 + $0x38] sm:$0xff]
    %v104 = vld [vmem:[%s0 + $0x40] sm:$0xff]
    %v105 = vld [vmem:[%s0 + $0x48] sm:$0xff]
    %v106 = vld [vmem:[%s0 + $0x50] sm:$0xff]
    %v107 = vld [vmem:[%s0 + $0x58] sm:$0xff]
    %v108 = vld [vmem:[%s0 + $0x60] sm:$0xff]
    %v109 = vld [vmem:[%s0 + $0x68] sm:$0xff]
    %v110 = vld [vmem:[%s0 + $0x70] sm:$0xff]
    %v111 = vld [vmem:[%s0 + $0x78] sm:$0xff]
    %v112 = vpack.c.bf16 %v97, %v96
    %v113 = vpack.c.bf16 %v99, %v98
    %v114 = vpack.c.bf16 %v101, %v100
    %v115 = vpack.c.bf16 %v103, %v102
    %v116 = vpack.c.bf16 %v105, %v104
    %v117 = vpack.c.bf16 %v107, %v106
    %v118 = vpack.c.bf16 %v109, %v108
    %v119 = vpack.c.bf16 %v111, %v110
    %v120 = vld [vmem:[%s1] sm:$0xf]
    %v121 = vld [vmem:[%s1 + $0x4] sm:$0xf]
    %v122 = vld [vmem:[%s1 + $0x8] sm:$0xf]
    %v123 = vld [vmem:[%s1 + $0xc] sm:$0xf]
    %v128 = vunpack.c.l.b16 %v120
    %v129 = vunpack.c.l.b16 %v121
    %v130 = vunpack.c.l.b16 %v122
    %v131 = vunpack.c.l.b16 %v123
    %v132 = vpack.c.b16 %v129, %v128
    %v133 = vpack.c.b16 %v131, %v130
    %vm136 = vcmask 261120
    %v138 = vsel %vm136, %v112, 0
    %v141 = vsel %vm136, %v113, 0
    %v144 = vsel %vm136, %v114, 0
    %v147 = vsel %vm136, %v115, 0
    %v150 = vsel %vm136, %v116, 0
    %v153 = vsel %vm136, %v117, 0
    %v156 = vsel %vm136, %v118, 0
    %v159 = vsel %vm136, %v119, 0
    %161 = vmatprep.subr.bf16.mxu0 0
    %162 = vmatpush1.bf16.msra.mxu0 0
    %163 = vmatprep.subr.bf16.mxu0 0
    %164 = vmatpush1.bf16.msra.mxu0 0
    %165 = vmatprep.subr.bf16.mxu0 0
    %166 = vmatpush1.bf16.msra.mxu0 0
    %167 = vmatprep.subr.bf16.mxu0 0
    %168 = vmatpush1.bf16.msra.mxu0 0
    %169 = vmatprep.subr.bf16.mxu0 0
    %170 = vmatpush1.bf16.msra.mxu0 0
    %171 = vmatprep.subr.bf16.mxu0 0
    %172 = vmatpush1.bf16.msra.mxu0 0
    %173 = vmatprep.subr.bf16.mxu0 0
    %174 = vmatpush1.bf16.msra.mxu0 %v133
    %175 = vmatprep.subr.bf16.mxu0 0
    %176 = vmatpush1.bf16.msra.mxu0 %v132
    %177 = vmatprep.subr.bf16.mxu0 0
    %178 = vmatpush2.bf16.msra.mxu0 0
    %179 = vmatprep.subr.bf16.mxu0 0
    %180 = vmatpush2.bf16.msra.mxu0 0
    %181 = vmatprep.subr.bf16.mxu0 0
    %182 = vmatpush2.bf16.msra.mxu0 0
    %183 = vmatprep.subr.bf16.mxu0 0
    %184 = vmatpush2.bf16.msra.mxu0 0
    %185 = vmatprep.subr.bf16.mxu0 0
    %186 = vmatpush2.bf16.msra.mxu0 0
    %187 = vmatprep.subr.bf16.mxu0 0
    %188 = vmatpush2.bf16.msra.mxu0 0
    %189 = vmatprep.subr.bf16.mxu0 0
    %190 = vmatpush2.bf16.msra.mxu0 0
    %191 = vmatprep.subr.bf16.mxu0 0
    %192 = vmatpush2.bf16.msra.mxu0 0
    %193 = vmatprep.mubr.bf16.mxu0 0
    %194 = vmatmul.mubr.bf16.gmra.mxu0 %v138
    %v195 = vpop.f32.mrf.mxu0
    %v196 = vadd.f32 0.0, %v195
    %v197 = vpop.f32.mrf.mxu0
    %v198 = vpop.f32.mrf.mxu0
    %v199 = vadd.f32 0.0, %v198
    %v200 = vpop.f32.mrf.mxu0
    %201 = vmatprep.mubr.bf16.mxu0 0
    %202 = vmatmul.mubr.bf16.gmra.mxu0 %v141
    %v203 = vpop.f32.mrf.mxu0
    %v204 = vadd.f32 0.0, %v203
    %v205 = vpop.f32.mrf.mxu0
    %v206 = vpop.f32.mrf.mxu0
    %v207 = vadd.f32 0.0, %v206
    %v208 = vpop.f32.mrf.mxu0
    %209 = vmatprep.mubr.bf16.mxu0 0
    %210 = vmatmul.mubr.bf16.gmra.mxu0 %v144
    %v211 = vpop.f32.mrf.mxu0
    %v212 = vadd.f32 0.0, %v211
    %v213 = vpop.f32.mrf.mxu0
    %v214 = vpop.f32.mrf.mxu0
    %v215 = vadd.f32 0.0, %v214
    %v216 = vpop.f32.mrf.mxu0
    %217 = vmatprep.mubr.bf16.mxu0 0
    %218 = vmatmul.mubr.bf16.gmra.mxu0 %v147
    %v219 = vpop.f32.mrf.mxu0
    %v220 = vadd.f32 0.0, %v219
    %v221 = vpop.f32.mrf.mxu0
    %v222 = vpop.f32.mrf.mxu0
    %v223 = vadd.f32 0.0, %v222
    %v224 = vpop.f32.mrf.mxu0
    %225 = vmatprep.mubr.bf16.mxu0 0
    %226 = vmatmul.mubr.bf16.gmra.mxu0 %v150
    %v227 = vpop.f32.mrf.mxu0
    %v228 = vadd.f32 0.0, %v227
    %v229 = vpop.f32.mrf.mxu0
    %v230 = vpop.f32.mrf.mxu0
    %v231 = vadd.f32 0.0, %v230
    %v232 = vpop.f32.mrf.mxu0
    %233 = vmatprep.mubr.bf16.mxu0 0
    %234 = vmatmul.mubr.bf16.gmra.mxu0 %v153
    %v235 = vpop.f32.mrf.mxu0
    %v236 = vadd.f32 0.0, %v235
    %v237 = vpop.f32.mrf.mxu0
    %v238 = vpop.f32.mrf.mxu0
    %v239 = vadd.f32 0.0, %v238
    %v240 = vpop.f32.mrf.mxu0
    %241 = vmatprep.mubr.bf16.mxu0 0
    %242 = vmatmul.mubr.bf16.gmra.mxu0 %v156
    %v243 = vpop.f32.mrf.mxu0
    %v244 = vadd.f32 0.0, %v243
    %v245 = vpop.f32.mrf.mxu0
    %v246 = vpop.f32.mrf.mxu0
    %v247 = vadd.f32 0.0, %v246
    %v248 = vpop.f32.mrf.mxu0
    %249 = vmatprep.mubr.bf16.mxu0 0
    %250 = vmatmul.mubr.bf16.gmra.mxu0 %v159
    %v251 = vpop.f32.mrf.mxu0
    %v252 = vadd.f32 0.0, %v251
    %v253 = vpop.f32.mrf.mxu0
    %v254 = vpop.f32.mrf.mxu0
    %v255 = vadd.f32 0.0, %v254
    %v256 = vpop.f32.mrf.mxu0
    %257 = vdwg.mxu0
    %v258 = vadd.f32 %v96, %v196
    %v259 = vadd.f32 %v97, %v199
    %v260 = vadd.f32 %v98, %v204
    %v261 = vadd.f32 %v99, %v207
    %v262 = vadd.f32 %v100, %v212
    %v263 = vadd.f32 %v101, %v215
    %v264 = vadd.f32 %v102, %v220
    %v265 = vadd.f32 %v103, %v223
    %v266 = vadd.f32 %v104, %v228
    %v267 = vadd.f32 %v105, %v231
    %v268 = vadd.f32 %v106, %v236
    %v269 = vadd.f32 %v107, %v239
    %v270 = vadd.f32 %v108, %v244
    %v271 = vadd.f32 %v109, %v247
    %v272 = vadd.f32 %v110, %v252
    %v273 = vadd.f32 %v111, %v255
    %v274 = vld [vmem:[%s2] sm:$0x1]
    %v276 = vlaneseq
    %v277 = vshrl.u32 %v276, 7
    %v278 = vsub.s32 0, %v277
    %v279 = vrot.slane %v274, %v278
    %v281 = vadd.f32 %v258, %v279
    %v282 = vadd.f32 %v259, %v279
    %v283 = vadd.f32 %v260, %v279
    %v284 = vadd.f32 %v261, %v279
    %v285 = vadd.f32 %v262, %v279
    %v286 = vadd.f32 %v263, %v279
    %v287 = vadd.f32 %v264, %v279
    %v288 = vadd.f32 %v265, %v279
    %v289 = vadd.f32 %v266, %v279
    %v290 = vadd.f32 %v267, %v279
    %v291 = vadd.f32 %v268, %v279
    %v292 = vadd.f32 %v269, %v279
    %v293 = vadd.f32 %v270, %v279
    %v294 = vadd.f32 %v271, %v279
    %v295 = vadd.f32 %v272, %v279
    %v296 = vadd.f32 %v273, %v279
    %v297 = vpack.c.bf16 %v282, %v281
    %v298 = vpack.c.bf16 %v284, %v283
    %v299 = vpack.c.bf16 %v286, %v285
    %v300 = vpack.c.bf16 %v288, %v287
    %v301 = vpack.c.bf16 %v290, %v289
    %v302 = vpack.c.bf16 %v292, %v291
    %v303 = vpack.c.bf16 %v294, %v293
    %v304 = vpack.c.bf16 %v296, %v295
    %v305 = vld [vmem:[%s3] sm:$0xf]
    %v306 = vld [vmem:[%s3 + $0x4] sm:$0xf]
    %v307 = vld [vmem:[%s3 + $0x8] sm:$0xf]
    %v308 = vld [vmem:[%s3 + $0xc] sm:$0xf]
    %v309 = vld [vmem:[%s4] sm:$0x1]
    %v311 = vlaneseq
    %v312 = vshrl.u32 %v311, 7
    %v313 = vsub.s32 0, %v312
    %v314 = vrot.slane %v309, %v313
    %v320 = vunpack.c.l.b16 %v305
    %v321 = vunpack.c.l.b16 %v306
    %v322 = vunpack.c.l.b16 %v307
    %v323 = vunpack.c.l.b16 %v308
    %v324 = vpack.c.b16 %v321, %v320
    %v325 = vpack.c.b16 %v323, %v322
    %v329 = vsel %vm136, %v297, 0
    %v332 = vsel %vm136, %v298, 0
    %v335 = vsel %vm136, %v299, 0
    %v338 = vsel %vm136, %v300, 0
    %v341 = vsel %vm136, %v301, 0
    %v344 = vsel %vm136, %v302, 0
    %v347 = vsel %vm136, %v303, 0
    %v350 = vsel %vm136, %v304, 0
    %352 = vmatprep.subr.bf16.mxu0 0
    %353 = vmatpush1.bf16.msra.mxu0 0
    %354 = vmatprep.subr.bf16.mxu0 0
    %355 = vmatpush1.bf16.msra.mxu0 0
    %356 = vmatprep.subr.bf16.mxu0 0
    %357 = vmatpush1.bf16.msra.mxu0 0
    %358 = vmatprep.subr.bf16.mxu0 0
    %359 = vmatpush1.bf16.msra.mxu0 0
    %360 = vmatprep.subr.bf16.mxu0 0
    %361 = vmatpush1.bf16.msra.mxu0 0
    %362 = vmatprep.subr.bf16.mxu0 0
    %363 = vmatpush1.bf16.msra.mxu0 0
    %364 = vmatprep.subr.bf16.mxu0 0
    %365 = vmatpush1.bf16.msra.mxu0 %v325
    %366 = vmatprep.subr.bf16.mxu0 0
    %367 = vmatpush1.bf16.msra.mxu0 %v324
    %368 = vmatprep.subr.bf16.mxu0 0
    %369 = vmatpush2.bf16.msra.mxu0 0
    %370 = vmatprep.subr.bf16.mxu0 0
    %371 = vmatpush2.bf16.msra.mxu0 0
    %372 = vmatprep.subr.bf16.mxu0 0
    %373 = vmatpush2.bf16.msra.mxu0 0
    %374 = vmatprep.subr.bf16.mxu0 0
    %375 = vmatpush2.bf16.msra.mxu0 0
    %376 = vmatprep.subr.bf16.mxu0 0
    %377 = vmatpush2.bf16.msra.mxu0 0
    %378 = vmatprep.subr.bf16.mxu0 0
    %379 = vmatpush2.bf16.msra.mxu0 0
    %380 = vmatprep.subr.bf16.mxu0 0
    %381 = vmatpush2.bf16.msra.mxu0 0
    %382 = vmatprep.subr.bf16.mxu0 0
    %383 = vmatpush2.bf16.msra.mxu0 0
    %384 = vmatprep.mubr.bf16.mxu0 0
    %385 = vmatmul.mubr.bf16.gmra.mxu0 %v329
    %v386 = vpop.f32.mrf.mxu0
    %v387 = vadd.f32 %v314, %v386
    %v388 = vpop.f32.mrf.mxu0
    %v389 = vpop.f32.mrf.mxu0
    %v390 = vadd.f32 %v314, %v389
    %v391 = vpop.f32.mrf.mxu0
    %392 = vmatprep.mubr.bf16.mxu0 0
    %393 = vmatmul.mubr.bf16.gmra.mxu0 %v332
    %v394 = vpop.f32.mrf.mxu0
    %v395 = vadd.f32 %v314, %v394
    %v396 = vpop.f32.mrf.mxu0
    %v397 = vpop.f32.mrf.mxu0
    %v398 = vadd.f32 %v314, %v397
    %v399 = vpop.f32.mrf.mxu0
    %400 = vmatprep.mubr.bf16.mxu0 0
    %401 = vmatmul.mubr.bf16.gmra.mxu0 %v335
    %v402 = vpop.f32.mrf.mxu0
    %v403 = vadd.f32 %v314, %v402
    %v404 = vpop.f32.mrf.mxu0
    %v405 = vpop.f32.mrf.mxu0
    %v406 = vadd.f32 %v314, %v405
    %v407 = vpop.f32.mrf.mxu0
    %408 = vmatprep.mubr.bf16.mxu0 0
    %409 = vmatmul.mubr.bf16.gmra.mxu0 %v338
    %v410 = vpop.f32.mrf.mxu0
    %v411 = vadd.f32 %v314, %v410
    %v412 = vpop.f32.mrf.mxu0
    %v413 = vpop.f32.mrf.mxu0
    %v414 = vadd.f32 %v314, %v413
    %v415 = vpop.f32.mrf.mxu0
    %416 = vmatprep.mubr.bf16.mxu0 0
    %417 = vmatmul.mubr.bf16.gmra.mxu0 %v341
    %v418 = vpop.f32.mrf.mxu0
    %v419 = vadd.f32 %v314, %v418
    %v420 = vpop.f32.mrf.mxu0
    %v421 = vpop.f32.mrf.mxu0
    %v422 = vadd.f32 %v314, %v421
    %v423 = vpop.f32.mrf.mxu0
    %424 = vmatprep.mubr.bf16.mxu0 0
    %425 = vmatmul.mubr.bf16.gmra.mxu0 %v344
    %v426 = vpop.f32.mrf.mxu0
    %v427 = vadd.f32 %v314, %v426
    %v428 = vpop.f32.mrf.mxu0
    %v429 = vpop.f32.mrf.mxu0
    %v430 = vadd.f32 %v314, %v429
    %v431 = vpop.f32.mrf.mxu0
    %432 = vmatprep.mubr.bf16.mxu0 0
    %433 = vmatmul.mubr.bf16.gmra.mxu0 %v347
    %v434 = vpop.f32.mrf.mxu0
    %v435 = vadd.f32 %v314, %v434
    %v436 = vpop.f32.mrf.mxu0
    %v437 = vpop.f32.mrf.mxu0
    %v438 = vadd.f32 %v314, %v437
    %v439 = vpop.f32.mrf.mxu0
    %440 = vmatprep.mubr.bf16.mxu0 0
    %441 = vmatmul.mubr.bf16.gmra.mxu0 %v350
    %v442 = vpop.f32.mrf.mxu0
    %v443 = vadd.f32 %v314, %v442
    %v444 = vpop.f32.mrf.mxu0
    %v445 = vpop.f32.mrf.mxu0
    %v446 = vadd.f32 %v314, %v445
    %v447 = vpop.f32.mrf.mxu0
    %448 = vdwg.mxu0
    %v449 = vpack.c.bf16 %v390, %v387
    %v450 = vpack.c.bf16 %v398, %v395
    %v451 = vpack.c.bf16 %v406, %v403
    %v452 = vpack.c.bf16 %v414, %v411
    %v453 = vpack.c.bf16 %v422, %v419
    %v454 = vpack.c.bf16 %v430, %v427
    %v455 = vpack.c.bf16 %v438, %v435
    %v456 = vpack.c.bf16 %v446, %v443
    %465 = vrot.lane.b32.xlu0 %v387, 96
    %v466 = vpop.permute.xlu0 %465
    %467 = vrot.lane.b32.xlu0 %v390, 96
    %v468 = vpop.permute.xlu0 %467
    %469 = vrot.lane.b32.xlu0 %v395, 96
    %v470 = vpop.permute.xlu0 %469
    %471 = vrot.lane.b32.xlu0 %v398, 96
    %v472 = vpop.permute.xlu0 %471
    %473 = vrot.lane.b32.xlu0 %v403, 96
    %v474 = vpop.permute.xlu0 %473
    %475 = vrot.lane.b32.xlu0 %v406, 96
    %v476 = vpop.permute.xlu0 %475
    %477 = vrot.lane.b32.xlu0 %v411, 96
    %v478 = vpop.permute.xlu0 %477
    %479 = vrot.lane.b32.xlu0 %v414, 96
    %v480 = vpop.permute.xlu0 %479
    %489 = vxpose.xlu0.b32.start [1/16] %v466, 128
    %490 = vxpose.xlu0.b32.cont [2/16] %v468, 128
    %491 = vxpose.xlu0.b32.cont [3/16] %v470, 128
    %492 = vxpose.xlu0.b32.cont [4/16] %v472, 128
    %493 = vxpose.xlu0.b32.cont [5/16] %v474, 128
    %494 = vxpose.xlu0.b32.cont [6/16] %v476, 128
    %495 = vxpose.xlu0.b32.cont [7/16] %v478, 128
    %496 = vxpose.xlu0.b32.cont [8/16] %v480, 128
    %497 = vxpose.xlu0.b32.cont [9/16] 0.0, 128
    %498 = vxpose.xlu0.b32.cont [10/16] 0.0, 128
    %499 = vxpose.xlu0.b32.cont [11/16] 0.0, 128
    %500 = vxpose.xlu0.b32.cont [12/16] 0.0, 128
    %501 = vxpose.xlu0.b32.cont [13/16] 0.0, 128
    %502 = vxpose.xlu0.b32.cont [14/16] 0.0, 128
    %503 = vxpose.xlu0.b32.cont [15/16] 0.0, 128
    %504 = vxpose.xlu0.b32.end [16/16] 0.0, 128
    %v505 = vpop.trf.xlu0
    %v506 = vpop.trf.xlu0
    %v507 = vpop.trf.xlu0
    %v508 = vpop.trf.xlu0
    %v509 = vpop.trf.xlu0
    %v510 = vpop.trf.xlu0
    %v511 = vpop.trf.xlu0
    %v512 = vpop.trf.xlu0
    %v513 = vpop.trf.xlu0
    %v514 = vpop.trf.xlu0
    %v515 = vpop.trf.xlu0
    %v516 = vpop.trf.xlu0
    %v517 = vpop.trf.xlu0
    %v518 = vpop.trf.xlu0
    %v519 = vpop.trf.xlu0
    %v520 = vpop.trf.xlu0
    %525 = vrot.lane.b32.xlu0 %v505, 64
    %v526 = vpop.permute.xlu0 %525
    %527 = vrot.lane.b32.xlu0 %v506, 64
    %v528 = vpop.permute.xlu0 %527
    %529 = vrot.lane.b32.xlu0 %v507, 64
    %v530 = vpop.permute.xlu0 %529
    %531 = vrot.lane.b32.xlu0 %v508, 64
    %v532 = vpop.permute.xlu0 %531
    %vm537 = vcmask 523264
    %v538 = vsel %vm537, %v505, %v526
    %v539 = vsel %vm537, %v506, %v528
    %v540 = vsel %vm537, %v507, %v530
    %v541 = vsel %vm537, %v508, %v532
    %v542 = vmul.f32 %v538, %v40
    %v543 = vmul.f32 %v538, %v41
    %v544 = vmul.f32 %v539, %v42
    %v545 = vmul.f32 %v539, %v43
    %v546 = vmul.f32 %v540, %v44
    %v547 = vmul.f32 %v540, %v45
    %v548 = vmul.f32 %v541, %v46
    %v549 = vmul.f32 %v541, %v47
    %v550 = vpack.c.bf16 %v544, %v542
    %v551 = vpack.c.bf16 %v545, %v543
    %v552 = vpack.c.bf16 %v548, %v546
    %v553 = vpack.c.bf16 %v549, %v547
    %586 = vrot.lane.b32.xlu0 %v48, 64
    %v587 = vpop.permute.xlu0 %586
    %588 = vrot.lane.b32.xlu0 %v49, 64
    %v589 = vpop.permute.xlu0 %588
    %590 = vrot.lane.b32.xlu0 %v50, 64
    %v591 = vpop.permute.xlu0 %590
    %592 = vrot.lane.b32.xlu0 %v51, 64
    %v593 = vpop.permute.xlu0 %592
    %594 = vrot.lane.b32.xlu0 %v52, 64
    %v595 = vpop.permute.xlu0 %594
    %596 = vrot.lane.b32.xlu0 %v53, 64
    %v597 = vpop.permute.xlu0 %596
    %598 = vrot.lane.b32.xlu0 %v54, 64
    %v599 = vpop.permute.xlu0 %598
    %600 = vrot.lane.b32.xlu0 %v55, 64
    %v601 = vpop.permute.xlu0 %600
    %602 = vrot.lane.b32.xlu0 %v56, 64
    %v603 = vpop.permute.xlu0 %602
    %604 = vrot.lane.b32.xlu0 %v57, 64
    %v605 = vpop.permute.xlu0 %604
    %606 = vrot.lane.b32.xlu0 %v58, 64
    %v607 = vpop.permute.xlu0 %606
    %608 = vrot.lane.b32.xlu0 %v59, 64
    %v609 = vpop.permute.xlu0 %608
    %610 = vrot.lane.b32.xlu0 %v60, 64
    %v611 = vpop.permute.xlu0 %610
    %612 = vrot.lane.b32.xlu0 %v61, 64
    %v613 = vpop.permute.xlu0 %612
    %614 = vrot.lane.b32.xlu0 %v62, 64
    %v615 = vpop.permute.xlu0 %614
    %616 = vrot.lane.b32.xlu0 %v63, 64
    %v617 = vpop.permute.xlu0 %616
    %618 = vrot.lane.b32.xlu0 %v64, 64
    %v619 = vpop.permute.xlu0 %618
    %620 = vrot.lane.b32.xlu0 %v65, 64
    %v621 = vpop.permute.xlu0 %620
    %622 = vrot.lane.b32.xlu0 %v66, 64
    %v623 = vpop.permute.xlu0 %622
    %624 = vrot.lane.b32.xlu0 %v67, 64
    %v625 = vpop.permute.xlu0 %624
    %626 = vrot.lane.b32.xlu0 %v68, 64
    %v627 = vpop.permute.xlu0 %626
    %628 = vrot.lane.b32.xlu0 %v69, 64
    %v629 = vpop.permute.xlu0 %628
    %630 = vrot.lane.b32.xlu0 %v70, 64
    %v631 = vpop.permute.xlu0 %630
    %632 = vrot.lane.b32.xlu0 %v71, 64
    %v633 = vpop.permute.xlu0 %632
    %634 = vrot.lane.b32.xlu0 %v72, 64
    %v635 = vpop.permute.xlu0 %634
    %636 = vrot.lane.b32.xlu0 %v73, 64
    %v637 = vpop.permute.xlu0 %636
    %638 = vrot.lane.b32.xlu0 %v74, 64
    %v639 = vpop.permute.xlu0 %638
    %640 = vrot.lane.b32.xlu0 %v75, 64
    %v641 = vpop.permute.xlu0 %640
    %642 = vrot.lane.b32.xlu0 %v76, 64
    %v643 = vpop.permute.xlu0 %642
    %644 = vrot.lane.b32.xlu0 %v77, 64
    %v645 = vpop.permute.xlu0 %644
    %646 = vrot.lane.b32.xlu0 %v78, 64
    %v647 = vpop.permute.xlu0 %646
    %648 = vrot.lane.b32.xlu0 %v79, 64
    %v649 = vpop.permute.xlu0 %648
    %v682 = vmul.f32 %v387, %v587
    %v683 = vmul.f32 %v390, %v589
    %v684 = vmul.f32 %v395, %v591
    %v685 = vmul.f32 %v398, %v593
    %v686 = vmul.f32 %v403, %v595
    %v687 = vmul.f32 %v406, %v597
    %v688 = vmul.f32 %v411, %v599
    %v689 = vmul.f32 %v414, %v601
    %v690 = vmul.f32 %v387, %v603
    %v691 = vmul.f32 %v390, %v605
    %v692 = vmul.f32 %v395, %v607
    %v693 = vmul.f32 %v398, %v609
    %v694 = vmul.f32 %v403, %v611
    %v695 = vmul.f32 %v406, %v613
    %v696 = vmul.f32 %v411, %v615
    %v697 = vmul.f32 %v414, %v617
    %v698 = vmul.f32 %v387, %v619
    %v699 = vmul.f32 %v390, %v621
    %v700 = vmul.f32 %v395, %v623
    %v701 = vmul.f32 %v398, %v625
    %v702 = vmul.f32 %v403, %v627
    %v703 = vmul.f32 %v406, %v629
    %v704 = vmul.f32 %v411, %v631
    %v705 = vmul.f32 %v414, %v633
    %v706 = vmul.f32 %v387, %v635
    %v707 = vmul.f32 %v390, %v637
    %v708 = vmul.f32 %v395, %v639
    %v709 = vmul.f32 %v398, %v641
    %v710 = vmul.f32 %v403, %v643
    %v711 = vmul.f32 %v406, %v645
    %v712 = vmul.f32 %v411, %v647
    %v713 = vmul.f32 %v414, %v649
    %v714 = vpack.c.bf16 %v683, %v682
    %v715 = vpack.c.bf16 %v685, %v684
    %v716 = vpack.c.bf16 %v687, %v686
    %v717 = vpack.c.bf16 %v689, %v688
    %v718 = vpack.c.bf16 %v691, %v690
    %v719 = vpack.c.bf16 %v693, %v692
    %v720 = vpack.c.bf16 %v695, %v694
    %v721 = vpack.c.bf16 %v697, %v696
    %v722 = vpack.c.bf16 %v699, %v698
    %v723 = vpack.c.bf16 %v701, %v700
    %v724 = vpack.c.bf16 %v703, %v702
    %v725 = vpack.c.bf16 %v705, %v704
    %v726 = vpack.c.bf16 %v707, %v706
    %v727 = vpack.c.bf16 %v709, %v708
    %v728 = vpack.c.bf16 %v711, %v710
    %v729 = vpack.c.bf16 %v713, %v712
    %v731 = vsel %vm136, %v449, 0
    %v734 = vsel %vm136, %v450, 0
    %v737 = vsel %vm136, %v451, 0
    %v740 = vsel %vm136, %v452, 0
    %742 = vmatprep.subr.bf16.mxu0 0
    %743 = vmatpush1.bf16.msra.mxu0 0
    %744 = vmatprep.subr.bf16.mxu0 0
    %745 = vmatpush1.bf16.msra.mxu0 0
    %746 = vmatprep.subr.bf16.mxu0 0
    %747 = vmatpush1.bf16.msra.mxu0 0
    %748 = vmatprep.subr.bf16.mxu0 0
    %749 = vmatpush1.bf16.msra.mxu0 0
    %750 = vmatprep.subr.bf16.mxu0 0
    %751 = vmatpush1.bf16.msra.mxu0 0
    %752 = vmatprep.subr.bf16.mxu0 0
    %753 = vmatpush1.bf16.msra.mxu0 0
    %754 = vmatprep.subr.bf16.mxu0 %v553
    %755 = vmatpush1.bf16.msra.mxu0 %v552
    %756 = vmatprep.subr.bf16.mxu0 %v551
    %757 = vmatpush1.bf16.msra.mxu0 %v550
    %758 = vmatprep.subr.bf16.mxu0 0
    %759 = vmatpush2.bf16.msra.mxu0 0
    %760 = vmatprep.subr.bf16.mxu0 0
    %761 = vmatpush2.bf16.msra.mxu0 0
    %762 = vmatprep.subr.bf16.mxu0 0
    %763 = vmatpush2.bf16.msra.mxu0 0
    %764 = vmatprep.subr.bf16.mxu0 0
    %765 = vmatpush2.bf16.msra.mxu0 0
    %766 = vmatprep.subr.bf16.mxu0 0
    %767 = vmatpush2.bf16.msra.mxu0 0
    %768 = vmatprep.subr.bf16.mxu0 0
    %769 = vmatpush2.bf16.msra.mxu0 0
    %770 = vmatprep.subr.bf16.mxu0 0
    %771 = vmatpush2.bf16.msra.mxu0 0
    %772 = vmatprep.subr.bf16.mxu0 0
    %773 = vmatpush2.bf16.msra.mxu0 0
    %774 = vmatprep.mubr.bf16.mxu0 0
    %775 = vmatmul.mubr.bf16.gmra.mxu0 %v731
    %v776 = vpop.f32.mrf.mxu0
    %v777 = vadd.f32 0.0, %v776
    %v778 = vpop.f32.mrf.mxu0
    %v779 = vadd.f32 0.0, %v778
    %v780 = vpop.f32.mrf.mxu0
    %v781 = vadd.f32 0.0, %v780
    %v782 = vpop.f32.mrf.mxu0
    %v783 = vadd.f32 0.0, %v782
    %784 = vmatprep.mubr.bf16.mxu0 0
    %785 = vmatmul.mubr.bf16.gmra.mxu0 %v734
    %v786 = vpop.f32.mrf.mxu0
    %v787 = vadd.f32 0.0, %v786
    %v788 = vpop.f32.mrf.mxu0
    %v789 = vadd.f32 0.0, %v788
    %v790 = vpop.f32.mrf.mxu0
    %v791 = vadd.f32 0.0, %v790
    %v792 = vpop.f32.mrf.mxu0
    %v793 = vadd.f32 0.0, %v792
    %794 = vmatprep.mubr.bf16.mxu0 0
    %795 = vmatmul.mubr.bf16.gmra.mxu0 %v737
    %v796 = vpop.f32.mrf.mxu0
    %v797 = vadd.f32 0.0, %v796
    %v798 = vpop.f32.mrf.mxu0
    %v799 = vadd.f32 0.0, %v798
    %v800 = vpop.f32.mrf.mxu0
    %v801 = vadd.f32 0.0, %v800
    %v802 = vpop.f32.mrf.mxu0
    %v803 = vadd.f32 0.0, %v802
    %804 = vmatprep.mubr.bf16.mxu0 0
    %805 = vmatmul.mubr.bf16.gmra.mxu0 %v740
    %v806 = vpop.f32.mrf.mxu0
    %v807 = vadd.f32 0.0, %v806
    %v808 = vpop.f32.mrf.mxu0
    %v809 = vadd.f32 0.0, %v808
    %v810 = vpop.f32.mrf.mxu0
    %v811 = vadd.f32 0.0, %v810
    %v812 = vpop.f32.mrf.mxu0
    %v813 = vadd.f32 0.0, %v812
    %814 = vdwg.mxu0
    %v815 = vmax.f32 %v777, %v779
    %816 = vmax.xlane.f32.xlu0 %v815
    %v817 = vpop.xlane.xlu0 %816
    %v818 = vmax.f32 %v781, %v783
    %819 = vmax.xlane.f32.xlu0 %v818
    %v820 = vpop.xlane.xlu0 %819
    %v821 = vmax.f32 %v787, %v789
    %822 = vmax.xlane.f32.xlu0 %v821
    %v823 = vpop.xlane.xlu0 %822
    %v824 = vmax.f32 %v791, %v793
    %825 = vmax.xlane.f32.xlu0 %v824
    %v826 = vpop.xlane.xlu0 %825
    %v827 = vmax.f32 %v797, %v799
    %828 = vmax.xlane.f32.xlu0 %v827
    %v829 = vpop.xlane.xlu0 %828
    %v830 = vmax.f32 %v801, %v803
    %831 = vmax.xlane.f32.xlu0 %v830
    %v832 = vpop.xlane.xlu0 %831
    %v833 = vmax.f32 %v807, %v809
    %834 = vmax.xlane.f32.xlu0 %v833
    %v835 = vpop.xlane.xlu0 %834
    %v836 = vmax.f32 %v811, %v813
    %837 = vmax.xlane.f32.xlu0 %v836
    %v838 = vpop.xlane.xlu0 %837
    %v839 = vsub.f32 %v777, %v817
    %v840 = vsub.f32 %v779, %v817
    %v841 = vsub.f32 %v781, %v820
    %v842 = vsub.f32 %v783, %v820
    %v843 = vsub.f32 %v787, %v823
    %v844 = vsub.f32 %v789, %v823
    %v845 = vsub.f32 %v791, %v826
    %v846 = vsub.f32 %v793, %v826
    %v847 = vsub.f32 %v797, %v829
    %v848 = vsub.f32 %v799, %v829
    %v849 = vsub.f32 %v801, %v832
    %v850 = vsub.f32 %v803, %v832
    %v851 = vsub.f32 %v807, %v835
    %v852 = vsub.f32 %v809, %v835
    %v853 = vsub.f32 %v811, %v838
    %v854 = vsub.f32 %v813, %v838
    %v855 = vmul.f32 %v839, 1.442695
    %v856 = vpow.pop %v855
    %v857 = vmul.f32 %v840, 1.442695
    %v858 = vpow.pop %v857
    %v859 = vmul.f32 %v841, 1.442695
    %v860 = vpow.pop %v859
    %v861 = vmul.f32 %v842, 1.442695
    %v862 = vpow.pop %v861
    %v863 = vmul.f32 %v843, 1.442695
    %v864 = vpow.pop %v863
    %v865 = vmul.f32 %v844, 1.442695
    %v866 = vpow.pop %v865
    %v867 = vmul.f32 %v845, 1.442695
    %v868 = vpow.pop %v867
    %v869 = vmul.f32 %v846, 1.442695
    %v870 = vpow.pop %v869
    %v871 = vmul.f32 %v847, 1.442695
    %v872 = vpow.pop %v871
    %v873 = vmul.f32 %v848, 1.442695
    %v874 = vpow.pop %v873
    %v875 = vmul.f32 %v849, 1.442695
    %v876 = vpow.pop %v875
    %v877 = vmul.f32 %v850, 1.442695
    %v878 = vpow.pop %v877
    %v879 = vmul.f32 %v851, 1.442695
    %v880 = vpow.pop %v879
    %v881 = vmul.f32 %v852, 1.442695
    %v882 = vpow.pop %v881
    %v883 = vmul.f32 %v853, 1.442695
    %v884 = vpow.pop %v883
    %v885 = vmul.f32 %v854, 1.442695
    %v886 = vpow.pop %v885
    %v887 = vpack.c.bf16 %v860, %v856
    %v888 = vpack.c.bf16 %v862, %v858
    %v889 = vpack.c.bf16 %v868, %v864
    %v890 = vpack.c.bf16 %v870, %v866
    %v891 = vpack.c.bf16 %v876, %v872
    %v892 = vpack.c.bf16 %v878, %v874
    %v893 = vpack.c.bf16 %v884, %v880
    %v894 = vpack.c.bf16 %v886, %v882
    %895 = vmatprep.subr.bf16.mxu0 0
    %896 = vmatpush1.bf16.msra.mxu0 %v87
    %897 = vmatprep.subr.bf16.mxu0 0
    %898 = vmatpush1.bf16.msra.mxu0 %v86
    %899 = vmatprep.subr.bf16.mxu0 0
    %900 = vmatpush1.bf16.msra.mxu0 %v85
    %901 = vmatprep.subr.bf16.mxu0 0
    %902 = vmatpush1.bf16.msra.mxu0 %v84
    %903 = vmatprep.subr.bf16.mxu0 0
    %904 = vmatpush1.bf16.msra.mxu0 %v83
    %905 = vmatprep.subr.bf16.mxu0 0
    %906 = vmatpush1.bf16.msra.mxu0 %v82
    %907 = vmatprep.subr.bf16.mxu0 0
    %908 = vmatpush1.bf16.msra.mxu0 %v81
    %909 = vmatprep.subr.bf16.mxu0 0
    %910 = vmatpush1.bf16.msra.mxu0 %v80
    %911 = vmatprep.subr.bf16.mxu0 0
    %912 = vmatpush2.bf16.msra.mxu0 %v95
    %913 = vmatprep.subr.bf16.mxu0 0
    %914 = vmatpush2.bf16.msra.mxu0 %v94
    %915 = vmatprep.subr.bf16.mxu0 0
    %916 = vmatpush2.bf16.msra.mxu0 %v93
    %917 = vmatprep.subr.bf16.mxu0 0
    %918 = vmatpush2.bf16.msra.mxu0 %v92
    %919 = vmatprep.subr.bf16.mxu0 0
    %920 = vmatpush2.bf16.msra.mxu0 %v91
    %921 = vmatprep.subr.bf16.mxu0 0
    %922 = vmatpush2.bf16.msra.mxu0 %v90
    %923 = vmatprep.subr.bf16.mxu0 0
    %924 = vmatpush2.bf16.msra.mxu0 %v89
    %925 = vmatprep.subr.bf16.mxu0 0
    %926 = vmatpush2.bf16.msra.mxu0 %v88
    %927 = vmatprep.mubr.bf16.mxu0 %v888
    %928 = vmatmul.mubr.bf16.gmra.mxu0 %v887
    %v929 = vpop.f32.mrf.mxu0
    %v930 = vadd.f32 0.0, %v929
    %v931 = vpop.f32.mrf.mxu0
    %v932 = vpop.f32.mrf.mxu0
    %v933 = vadd.f32 0.0, %v932
    %v934 = vpop.f32.mrf.mxu0
    %935 = vmatprep.mubr.bf16.mxu0 %v890
    %936 = vmatmul.mubr.bf16.gmra.mxu0 %v889
    %v937 = vpop.f32.mrf.mxu0
    %v938 = vadd.f32 0.0, %v937
    %v939 = vpop.f32.mrf.mxu0
    %v940 = vpop.f32.mrf.mxu0
    %v941 = vadd.f32 0.0, %v940
    %v942 = vpop.f32.mrf.mxu0
    %943 = vmatprep.mubr.bf16.mxu0 %v892
    %944 = vmatmul.mubr.bf16.gmra.mxu0 %v891
    %v945 = vpop.f32.mrf.mxu0
    %v946 = vadd.f32 0.0, %v945
    %v947 = vpop.f32.mrf.mxu0
    %v948 = vpop.f32.mrf.mxu0
    %v949 = vadd.f32 0.0, %v948
    %v950 = vpop.f32.mrf.mxu0
    %951 = vmatprep.mubr.bf16.mxu0 %v894
    %952 = vmatmul.mubr.bf16.gmra.mxu0 %v893
    %v953 = vpop.f32.mrf.mxu0
    %v954 = vadd.f32 0.0, %v953
    %v955 = vpop.f32.mrf.mxu0
    %v956 = vpop.f32.mrf.mxu0
    %v957 = vadd.f32 0.0, %v956
    %v958 = vpop.f32.mrf.mxu0
    %959 = vdwg.mxu0
    %v960 = vmax.f32 %v930, 1e-30
    %v961 = vmax.f32 %v933, 1e-30
    %v962 = vmax.f32 %v938, 1e-30
    %v963 = vmax.f32 %v941, 1e-30
    %v964 = vmax.f32 %v946, 1e-30
    %v965 = vmax.f32 %v949, 1e-30
    %v966 = vmax.f32 %v954, 1e-30
    %v967 = vmax.f32 %v957, 1e-30
    %984 = vrot.lane.b32.xlu0 %v714, 64
    %v985 = vpop.permute.xlu0 %984
    %986 = vrot.lane.b32.xlu0 %v715, 64
    %v987 = vpop.permute.xlu0 %986
    %988 = vrot.lane.b32.xlu0 %v716, 64
    %v989 = vpop.permute.xlu0 %988
    %990 = vrot.lane.b32.xlu0 %v717, 64
    %v991 = vpop.permute.xlu0 %990
    %992 = vrot.lane.b32.xlu0 %v718, 64
    %v993 = vpop.permute.xlu0 %992
    %994 = vrot.lane.b32.xlu0 %v719, 64
    %v995 = vpop.permute.xlu0 %994
    %996 = vrot.lane.b32.xlu0 %v720, 64
    %v997 = vpop.permute.xlu0 %996
    %998 = vrot.lane.b32.xlu0 %v721, 64
    %v999 = vpop.permute.xlu0 %998
    %1000 = vrot.lane.b32.xlu0 %v722, 64
    %v1001 = vpop.permute.xlu0 %1000
    %1002 = vrot.lane.b32.xlu0 %v723, 64
    %v1003 = vpop.permute.xlu0 %1002
    %1004 = vrot.lane.b32.xlu0 %v724, 64
    %v1005 = vpop.permute.xlu0 %1004
    %1006 = vrot.lane.b32.xlu0 %v725, 64
    %v1007 = vpop.permute.xlu0 %1006
    %1008 = vrot.lane.b32.xlu0 %v726, 64
    %v1009 = vpop.permute.xlu0 %1008
    %1010 = vrot.lane.b32.xlu0 %v727, 64
    %v1011 = vpop.permute.xlu0 %1010
    %1012 = vrot.lane.b32.xlu0 %v728, 64
    %v1013 = vpop.permute.xlu0 %1012
    %1014 = vrot.lane.b32.xlu0 %v729, 64
    %v1015 = vpop.permute.xlu0 %1014
    %1032 = vmatprep.subr.bf16.mxu0 0
    %1033 = vmatpush1.bf16.msra.mxu0 %v999
    %1034 = vmatprep.subr.bf16.mxu0 0
    %1035 = vmatpush1.bf16.msra.mxu0 %v997
    %1036 = vmatprep.subr.bf16.mxu0 0
    %1037 = vmatpush1.bf16.msra.mxu0 %v995
    %1038 = vmatprep.subr.bf16.mxu0 0
    %1039 = vmatpush1.bf16.msra.mxu0 %v993
    %1040 = vmatprep.subr.bf16.mxu0 0
    %1041 = vmatpush1.bf16.msra.mxu0 %v991
    %1042 = vmatprep.subr.bf16.mxu0 0
    %1043 = vmatpush1.bf16.msra.mxu0 %v989
    %1044 = vmatprep.subr.bf16.mxu0 0
    %1045 = vmatpush1.bf16.msra.mxu0 %v987
    %1046 = vmatprep.subr.bf16.mxu0 0
    %1047 = vmatpush1.bf16.msra.mxu0 %v985
    %1048 = vmatprep.subr.bf16.mxu0 0
    %1049 = vmatpush2.bf16.msra.mxu0 %v1015
    %1050 = vmatprep.subr.bf16.mxu0 0
    %1051 = vmatpush2.bf16.msra.mxu0 %v1013
    %1052 = vmatprep.subr.bf16.mxu0 0
    %1053 = vmatpush2.bf16.msra.mxu0 %v1011
    %1054 = vmatprep.subr.bf16.mxu0 0
    %1055 = vmatpush2.bf16.msra.mxu0 %v1009
    %1056 = vmatprep.subr.bf16.mxu0 0
    %1057 = vmatpush2.bf16.msra.mxu0 %v1007
    %1058 = vmatprep.subr.bf16.mxu0 0
    %1059 = vmatpush2.bf16.msra.mxu0 %v1005
    %1060 = vmatprep.subr.bf16.mxu0 0
    %1061 = vmatpush2.bf16.msra.mxu0 %v1003
    %1062 = vmatprep.subr.bf16.mxu0 0
    %1063 = vmatpush2.bf16.msra.mxu0 %v1001
    %1064 = vmatprep.mubr.bf16.mxu0 %v888
    %1065 = vmatmul.mubr.bf16.gmra.mxu0 %v887
    %v1066 = vpop.f32.mrf.mxu0
    %v1067 = vadd.f32 0.0, %v1066
    %v1068 = vpop.f32.mrf.mxu0
    %v1069 = vpop.f32.mrf.mxu0
    %v1070 = vadd.f32 0.0, %v1069
    %v1071 = vpop.f32.mrf.mxu0
    %1072 = vmatprep.mubr.bf16.mxu0 %v890
    %1073 = vmatmul.mubr.bf16.gmra.mxu0 %v889
    %v1074 = vpop.f32.mrf.mxu0
    %v1075 = vadd.f32 0.0, %v1074
    %v1076 = vpop.f32.mrf.mxu0
    %v1077 = vpop.f32.mrf.mxu0
    %v1078 = vadd.f32 0.0, %v1077
    %v1079 = vpop.f32.mrf.mxu0
    %1080 = vmatprep.mubr.bf16.mxu0 %v892
    %1081 = vmatmul.mubr.bf16.gmra.mxu0 %v891
    %v1082 = vpop.f32.mrf.mxu0
    %v1083 = vadd.f32 0.0, %v1082
    %v1084 = vpop.f32.mrf.mxu0
    %v1085 = vpop.f32.mrf.mxu0
    %v1086 = vadd.f32 0.0, %v1085
    %v1087 = vpop.f32.mrf.mxu0
    %1088 = vmatprep.mubr.bf16.mxu0 %v894
    %1089 = vmatmul.mubr.bf16.gmra.mxu0 %v893
    %v1090 = vpop.f32.mrf.mxu0
    %v1091 = vadd.f32 0.0, %v1090
    %v1092 = vpop.f32.mrf.mxu0
    %v1093 = vpop.f32.mrf.mxu0
    %v1094 = vadd.f32 0.0, %v1093
    %v1095 = vpop.f32.mrf.mxu0
    %1096 = vdwg.mxu0
    %v1097 = vrcp.pop %v960
    %v1098 = vrcp.pop %v961
    %v1099 = vrcp.pop %v962
    %v1100 = vrcp.pop %v963
    %v1101 = vrcp.pop %v964
    %v1102 = vrcp.pop %v965
    %v1103 = vrcp.pop %v966
    %v1104 = vrcp.pop %v967
    %v1105 = vmul.f32 %v1067, %v1097
    %v1106 = vmul.f32 %v1070, %v1098
    %v1107 = vmul.f32 %v1075, %v1099
    %v1108 = vmul.f32 %v1078, %v1100
    %v1109 = vmul.f32 %v1083, %v1101
    %v1110 = vmul.f32 %v1086, %v1102
    %v1111 = vmul.f32 %v1091, %v1103
    %v1112 = vmul.f32 %v1094, %v1104
    %1113 = vst.msk [vmem:[#allocation2] sm:$0xff] %vm136, %v1105
    %1114 = vst.msk [vmem:[#allocation2 + $0x8] sm:$0xff] %vm136, %v1106
    %1115 = vst.msk [vmem:[#allocation2 + $0x10] sm:$0xff] %vm136, %v1107
    %1116 = vst.msk [vmem:[#allocation2 + $0x18] sm:$0xff] %vm136, %v1108
    %1117 = vst.msk [vmem:[#allocation2 + $0x20] sm:$0xff] %vm136, %v1109
    %1118 = vst.msk [vmem:[#allocation2 + $0x28] sm:$0xff] %vm136, %v1110
    %1119 = vst.msk [vmem:[#allocation2 + $0x30] sm:$0xff] %vm136, %v1111
    %1120 = vst.msk [vmem:[#allocation2 + $0x38] sm:$0xff] %vm136, %v1112
    %1129 = vrot.lane.b32.xlu0 %v419, 96
    %v1130 = vpop.permute.xlu0 %1129
    %1131 = vrot.lane.b32.xlu0 %v422, 96
    %v1132 = vpop.permute.xlu0 %1131
    %1133 = vrot.lane.b32.xlu0 %v427, 96
    %v1134 = vpop.permute.xlu0 %1133
    %1135 = vrot.lane.b32.xlu0 %v430, 96
    %v1136 = vpop.permute.xlu0 %1135
    %1137 = vrot.lane.b32.xlu0 %v435, 96
    %v1138 = vpop.permute.xlu0 %1137
    %1139 = vrot.lane.b32.xlu0 %v438, 96
    %v1140 = vpop.permute.xlu0 %1139
    %1141 = vrot.lane.b32.xlu0 %v443, 96
    %v1142 = vpop.permute.xlu0 %1141
    %1143 = vrot.lane.b32.xlu0 %v446, 96
    %v1144 = vpop.permute.xlu0 %1143
    %1153 = vxpose.xlu0.b32.start [1/16] %v1130, 128
    %1154 = vxpose.xlu0.b32.cont [2/16] %v1132, 128
    %1155 = vxpose.xlu0.b32.cont [3/16] %v1134, 128
    %1156 = vxpose.xlu0.b32.cont [4/16] %v1136, 128
    %1157 = vxpose.xlu0.b32.cont [5/16] %v1138, 128
    %1158 = vxpose.xlu0.b32.cont [6/16] %v1140, 128
    %1159 = vxpose.xlu0.b32.cont [7/16] %v1142, 128
    %1160 = vxpose.xlu0.b32.cont [8/16] %v1144, 128
    %1161 = vxpose.xlu0.b32.cont [9/16] 0.0, 128
    %1162 = vxpose.xlu0.b32.cont [10/16] 0.0, 128
    %1163 = vxpose.xlu0.b32.cont [11/16] 0.0, 128
    %1164 = vxpose.xlu0.b32.cont [12/16] 0.0, 128
    %1165 = vxpose.xlu0.b32.cont [13/16] 0.0, 128
    %1166 = vxpose.xlu0.b32.cont [14/16] 0.0, 128
    %1167 = vxpose.xlu0.b32.cont [15/16] 0.0, 128
    %1168 = vxpose.xlu0.b32.end [16/16] 0.0, 128
    %v1169 = vpop.trf.xlu0
    %v1170 = vpop.trf.xlu0
    %v1171 = vpop.trf.xlu0
    %v1172 = vpop.trf.xlu0
    %v1173 = vpop.trf.xlu0
    %v1174 = vpop.trf.xlu0
    %v1175 = vpop.trf.xlu0
    %v1176 = vpop.trf.xlu0
    %v1177 = vpop.trf.xlu0
    %v1178 = vpop.trf.xlu0
    %v1179 = vpop.trf.xlu0
    %v1180 = vpop.trf.xlu0
    %v1181 = vpop.trf.xlu0
    %v1182 = vpop.trf.xlu0
    %v1183 = vpop.trf.xlu0
    %v1184 = vpop.trf.xlu0
    %1189 = vrot.lane.b32.xlu0 %v1169, 64
    %v1190 = vpop.permute.xlu0 %1189
    %1191 = vrot.lane.b32.xlu0 %v1170, 64
    %v1192 = vpop.permute.xlu0 %1191
    %1193 = vrot.lane.b32.xlu0 %v1171, 64
    %v1194 = vpop.permute.xlu0 %1193
    %1195 = vrot.lane.b32.xlu0 %v1172, 64
    %v1196 = vpop.permute.xlu0 %1195
    %v1201 = vsel %vm537, %v1169, %v1190
    %v1202 = vsel %vm537, %v1170, %v1192
    %v1203 = vsel %vm537, %v1171, %v1194
    %v1204 = vsel %vm537, %v1172, %v1196
    %v1205 = vmul.f32 %v1201, %v40
    %v1206 = vmul.f32 %v1201, %v41
    %v1207 = vmul.f32 %v1202, %v42
    %v1208 = vmul.f32 %v1202, %v43
    %v1209 = vmul.f32 %v1203, %v44
    %v1210 = vmul.f32 %v1203, %v45
    %v1211 = vmul.f32 %v1204, %v46
    %v1212 = vmul.f32 %v1204, %v47
    %v1213 = vpack.c.bf16 %v1207, %v1205
    %v1214 = vpack.c.bf16 %v1208, %v1206
    %v1215 = vpack.c.bf16 %v1211, %v1209
    %v1216 = vpack.c.bf16 %v1212, %v1210
    %v1217 = vmul.f32 %v419, %v587
    %v1218 = vmul.f32 %v422, %v589
    %v1219 = vmul.f32 %v427, %v591
    %v1220 = vmul.f32 %v430, %v593
    %v1221 = vmul.f32 %v435, %v595
    %v1222 = vmul.f32 %v438, %v597
    %v1223 = vmul.f32 %v443, %v599
    %v1224 = vmul.f32 %v446, %v601
    %v1225 = vmul.f32 %v419, %v603
    %v1226 = vmul.f32 %v422, %v605
    %v1227 = vmul.f32 %v427, %v607
    %v1228 = vmul.f32 %v430, %v609
    %v1229 = vmul.f32 %v435, %v611
    %v1230 = vmul.f32 %v438, %v613
    %v1231 = vmul.f32 %v443, %v615
    %v1232 = vmul.f32 %v446, %v617
    %v1233 = vmul.f32 %v419, %v619
    %v1234 = vmul.f32 %v422, %v621
    %v1235 = vmul.f32 %v427, %v623
    %v1236 = vmul.f32 %v430, %v625
    %v1237 = vmul.f32 %v435, %v627
    %v1238 = vmul.f32 %v438, %v629
    %v1239 = vmul.f32 %v443, %v631
    %v1240 = vmul.f32 %v446, %v633
    %v1241 = vmul.f32 %v419, %v635
    %v1242 = vmul.f32 %v422, %v637
    %v1243 = vmul.f32 %v427, %v639
    %v1244 = vmul.f32 %v430, %v641
    %v1245 = vmul.f32 %v435, %v643
    %v1246 = vmul.f32 %v438, %v645
    %v1247 = vmul.f32 %v443, %v647
    %v1248 = vmul.f32 %v446, %v649
    %v1249 = vpack.c.bf16 %v1218, %v1217
    %v1250 = vpack.c.bf16 %v1220, %v1219
    %v1251 = vpack.c.bf16 %v1222, %v1221
    %v1252 = vpack.c.bf16 %v1224, %v1223
    %v1253 = vpack.c.bf16 %v1226, %v1225
    %v1254 = vpack.c.bf16 %v1228, %v1227
    %v1255 = vpack.c.bf16 %v1230, %v1229
    %v1256 = vpack.c.bf16 %v1232, %v1231
    %v1257 = vpack.c.bf16 %v1234, %v1233
    %v1258 = vpack.c.bf16 %v1236, %v1235
    %v1259 = vpack.c.bf16 %v1238, %v1237
    %v1260 = vpack.c.bf16 %v1240, %v1239
    %v1261 = vpack.c.bf16 %v1242, %v1241
    %v1262 = vpack.c.bf16 %v1244, %v1243
    %v1263 = vpack.c.bf16 %v1246, %v1245
    %v1264 = vpack.c.bf16 %v1248, %v1247
    %v1266 = vsel %vm136, %v453, 0
    %v1269 = vsel %vm136, %v454, 0
    %v1272 = vsel %vm136, %v455, 0
    %v1275 = vsel %vm136, %v456, 0
    %1277 = vmatprep.subr.bf16.mxu0 0
    %1278 = vmatpush1.bf16.msra.mxu0 0
    %1279 = vmatprep.subr.bf16.mxu0 0
    %1280 = vmatpush1.bf16.msra.mxu0 0
    %1281 = vmatprep.subr.bf16.mxu0 0
    %1282 = vmatpush1.bf16.msra.mxu0 0
    %1283 = vmatprep.subr.bf16.mxu0 0
    %1284 = vmatpush1.bf16.msra.mxu0 0
    %1285 = vmatprep.subr.bf16.mxu0 0
    %1286 = vmatpush1.bf16.msra.mxu0 0
    %1287 = vmatprep.subr.bf16.mxu0 0
    %1288 = vmatpush1.bf16.msra.mxu0 0
    %1289 = vmatprep.subr.bf16.mxu0 %v1216
    %1290 = vmatpush1.bf16.msra.mxu0 %v1215
    %1291 = vmatprep.subr.bf16.mxu0 %v1214
    %1292 = vmatpush1.bf16.msra.mxu0 %v1213
    %1293 = vmatprep.subr.bf16.mxu0 0
    %1294 = vmatpush2.bf16.msra.mxu0 0
    %1295 = vmatprep.subr.bf16.mxu0 0
    %1296 = vmatpush2.bf16.msra.mxu0 0
    %1297 = vmatprep.subr.bf16.mxu0 0
    %1298 = vmatpush2.bf16.msra.mxu0 0
    %1299 = vmatprep.subr.bf16.mxu0 0
    %1300 = vmatpush2.bf16.msra.mxu0 0
    %1301 = vmatprep.subr.bf16.mxu0 0
    %1302 = vmatpush2.bf16.msra.mxu0 0
    %1303 = vmatprep.subr.bf16.mxu0 0
    %1304 = vmatpush2.bf16.msra.mxu0 0
    %1305 = vmatprep.subr.bf16.mxu0 0
    %1306 = vmatpush2.bf16.msra.mxu0 0
    %1307 = vmatprep.subr.bf16.mxu0 0
    %1308 = vmatpush2.bf16.msra.mxu0 0
    %1309 = vmatprep.mubr.bf16.mxu0 0
    %1310 = vmatmul.mubr.bf16.gmra.mxu0 %v1266
    %v1311 = vpop.f32.mrf.mxu0
    %v1312 = vadd.f32 0.0, %v1311
    %v1313 = vpop.f32.mrf.mxu0
    %v1314 = vadd.f32 0.0, %v1313
    %v1315 = vpop.f32.mrf.mxu0
    %v1316 = vadd.f32 0.0, %v1315
    %v1317 = vpop.f32.mrf.mxu0
    %v1318 = vadd.f32 0.0, %v1317
    %1319 = vmatprep.mubr.bf16.mxu0 0
    %1320 = vmatmul.mubr.bf16.gmra.mxu0 %v1269
    %v1321 = vpop.f32.mrf.mxu0
    %v1322 = vadd.f32 0.0, %v1321
    %v1323 = vpop.f32.mrf.mxu0
    %v1324 = vadd.f32 0.0, %v1323
    %v1325 = vpop.f32.mrf.mxu0
    %v1326 = vadd.f32 0.0, %v1325
    %v1327 = vpop.f32.mrf.mxu0
    %v1328 = vadd.f32 0.0, %v1327
    %1329 = vmatprep.mubr.bf16.mxu0 0
    %1330 = vmatmul.mubr.bf16.gmra.mxu0 %v1272
    %v1331 = vpop.f32.mrf.mxu0
    %v1332 = vadd.f32 0.0, %v1331
    %v1333 = vpop.f32.mrf.mxu0
    %v1334 = vadd.f32 0.0, %v1333
    %v1335 = vpop.f32.mrf.mxu0
    %v1336 = vadd.f32 0.0, %v1335
    %v1337 = vpop.f32.mrf.mxu0
    %v1338 = vadd.f32 0.0, %v1337
    %1339 = vmatprep.mubr.bf16.mxu0 0
    %1340 = vmatmul.mubr.bf16.gmra.mxu0 %v1275
    %v1341 = vpop.f32.mrf.mxu0
    %v1342 = vadd.f32 0.0, %v1341
    %v1343 = vpop.f32.mrf.mxu0
    %v1344 = vadd.f32 0.0, %v1343
    %v1345 = vpop.f32.mrf.mxu0
    %v1346 = vadd.f32 0.0, %v1345
    %v1347 = vpop.f32.mrf.mxu0
    %v1348 = vadd.f32 0.0, %v1347
    %1349 = vdwg.mxu0
    %v1350 = vmax.f32 %v1312, %v1314
    %1351 = vmax.xlane.f32.xlu0 %v1350
    %v1352 = vpop.xlane.xlu0 %1351
    %v1353 = vmax.f32 %v1316, %v1318
    %1354 = vmax.xlane.f32.xlu0 %v1353
    %v1355 = vpop.xlane.xlu0 %1354
    %v1356 = vmax.f32 %v1322, %v1324
    %1357 = vmax.xlane.f32.xlu0 %v1356
    %v1358 = vpop.xlane.xlu0 %1357
    %v1359 = vmax.f32 %v1326, %v1328
    %1360 = vmax.xlane.f32.xlu0 %v1359
    %v1361 = vpop.xlane.xlu0 %1360
    %v1362 = vmax.f32 %v1332, %v1334
    %1363 = vmax.xlane.f32.xlu0 %v1362
    %v1364 = vpop.xlane.xlu0 %1363
    %v1365 = vmax.f32 %v1336, %v1338
    %1366 = vmax.xlane.f32.xlu0 %v1365
    %v1367 = vpop.xlane.xlu0 %1366
    %v1368 = vmax.f32 %v1342, %v1344
    %1369 = vmax.xlane.f32.xlu0 %v1368
    %v1370 = vpop.xlane.xlu0 %1369
    %v1371 = vmax.f32 %v1346, %v1348
    %1372 = vmax.xlane.f32.xlu0 %v1371
    %v1373 = vpop.xlane.xlu0 %1372
    %v1374 = vsub.f32 %v1312, %v1352
    %v1375 = vsub.f32 %v1314, %v1352
    %v1376 = vsub.f32 %v1316, %v1355
    %v1377 = vsub.f32 %v1318, %v1355
    %v1378 = vsub.f32 %v1322, %v1358
    %v1379 = vsub.f32 %v1324, %v1358
    %v1380 = vsub.f32 %v1326, %v1361
    %v1381 = vsub.f32 %v1328, %v1361
    %v1382 = vsub.f32 %v1332, %v1364
    %v1383 = vsub.f32 %v1334, %v1364
    %v1384 = vsub.f32 %v1336, %v1367
    %v1385 = vsub.f32 %v1338, %v1367
    %v1386 = vsub.f32 %v1342, %v1370
    %v1387 = vsub.f32 %v1344, %v1370
    %v1388 = vsub.f32 %v1346, %v1373
    %v1389 = vsub.f32 %v1348, %v1373
    %v1390 = vmul.f32 %v1374, 1.442695
    %v1391 = vpow.pop %v1390
    %v1392 = vmul.f32 %v1375, 1.442695
    %v1393 = vpow.pop %v1392
    %v1394 = vmul.f32 %v1376, 1.442695
    %v1395 = vpow.pop %v1394
    %v1396 = vmul.f32 %v1377, 1.442695
    %v1397 = vpow.pop %v1396
    %v1398 = vmul.f32 %v1378, 1.442695
    %v1399 = vpow.pop %v1398
    %v1400 = vmul.f32 %v1379, 1.442695
    %v1401 = vpow.pop %v1400
    %v1402 = vmul.f32 %v1380, 1.442695
    %v1403 = vpow.pop %v1402
    %v1404 = vmul.f32 %v1381, 1.442695
    %v1405 = vpow.pop %v1404
    %v1406 = vmul.f32 %v1382, 1.442695
    %v1407 = vpow.pop %v1406
    %v1408 = vmul.f32 %v1383, 1.442695
    %v1409 = vpow.pop %v1408
    %v1410 = vmul.f32 %v1384, 1.442695
    %v1411 = vpow.pop %v1410
    %v1412 = vmul.f32 %v1385, 1.442695
    %v1413 = vpow.pop %v1412
    %v1414 = vmul.f32 %v1386, 1.442695
    %v1415 = vpow.pop %v1414
    %v1416 = vmul.f32 %v1387, 1.442695
    %v1417 = vpow.pop %v1416
    %v1418 = vmul.f32 %v1388, 1.442695
    %v1419 = vpow.pop %v1418
    %v1420 = vmul.f32 %v1389, 1.442695
    %v1421 = vpow.pop %v1420
    %v1422 = vpack.c.bf16 %v1395, %v1391
    %v1423 = vpack.c.bf16 %v1397, %v1393
    %v1424 = vpack.c.bf16 %v1403, %v1399
    %v1425 = vpack.c.bf16 %v1405, %v1401
    %v1426 = vpack.c.bf16 %v1411, %v1407
    %v1427 = vpack.c.bf16 %v1413, %v1409
    %v1428 = vpack.c.bf16 %v1419, %v1415
    %v1429 = vpack.c.bf16 %v1421, %v1417
    %1430 = vmatprep.subr.bf16.mxu0 0
    %1431 = vmatpush1.bf16.msra.mxu0 %v87
    %1432 = vmatprep.subr.bf16.mxu0 0
    %1433 = vmatpush1.bf16.msra.mxu0 %v86
    %1434 = vmatprep.subr.bf16.mxu0 0
    %1435 = vmatpush1.bf16.msra.mxu0 %v85
    %1436 = vmatprep.subr.bf16.mxu0 0
    %1437 = vmatpush1.bf16.msra.mxu0 %v84
    %1438 = vmatprep.subr.bf16.mxu0 0
    %1439 = vmatpush1.bf16.msra.mxu0 %v83
    %1440 = vmatprep.subr.bf16.mxu0 0
    %1441 = vmatpush1.bf16.msra.mxu0 %v82
    %1442 = vmatprep.subr.bf16.mxu0 0
    %1443 = vmatpush1.bf16.msra.mxu0 %v81
    %1444 = vmatprep.subr.bf16.mxu0 0
    %1445 = vmatpush1.bf16.msra.mxu0 %v80
    %1446 = vmatprep.subr.bf16.mxu0 0
    %1447 = vmatpush2.bf16.msra.mxu0 %v95
    %1448 = vmatprep.subr.bf16.mxu0 0
    %1449 = vmatpush2.bf16.msra.mxu0 %v94
    %1450 = vmatprep.subr.bf16.mxu0 0
    %1451 = vmatpush2.bf16.msra.mxu0 %v93
    %1452 = vmatprep.subr.bf16.mxu0 0
    %1453 = vmatpush2.bf16.msra.mxu0 %v92
    %1454 = vmatprep.subr.bf16.mxu0 0
    %1455 = vmatpush2.bf16.msra.mxu0 %v91
    %1456 = vmatprep.subr.bf16.mxu0 0
    %1457 = vmatpush2.bf16.msra.mxu0 %v90
    %1458 = vmatprep.subr.bf16.mxu0 0
    %1459 = vmatpush2.bf16.msra.mxu0 %v89
    %1460 = vmatprep.subr.bf16.mxu0 0
    %1461 = vmatpush2.bf16.msra.mxu0 %v88
    %1462 = vmatprep.mubr.bf16.mxu0 %v1423
    %1463 = vmatmul.mubr.bf16.gmra.mxu0 %v1422
    %v1464 = vpop.f32.mrf.mxu0
    %v1465 = vadd.f32 0.0, %v1464
    %v1466 = vpop.f32.mrf.mxu0
    %v1467 = vpop.f32.mrf.mxu0
    %v1468 = vadd.f32 0.0, %v1467
    %v1469 = vpop.f32.mrf.mxu0
    %1470 = vmatprep.mubr.bf16.mxu0 %v1425
    %1471 = vmatmul.mubr.bf16.gmra.mxu0 %v1424
    %v1472 = vpop.f32.mrf.mxu0
    %v1473 = vadd.f32 0.0, %v1472
    %v1474 = vpop.f32.mrf.mxu0
    %v1475 = vpop.f32.mrf.mxu0
    %v1476 = vadd.f32 0.0, %v1475
    %v1477 = vpop.f32.mrf.mxu0
    %1478 = vmatprep.mubr.bf16.mxu0 %v1427
    %1479 = vmatmul.mubr.bf16.gmra.mxu0 %v1426
    %v1480 = vpop.f32.mrf.mxu0
    %v1481 = vadd.f32 0.0, %v1480
    %v1482 = vpop.f32.mrf.mxu0
    %v1483 = vpop.f32.mrf.mxu0
    %v1484 = vadd.f32 0.0, %v1483
    %v1485 = vpop.f32.mrf.mxu0
    %1486 = vmatprep.mubr.bf16.mxu0 %v1429
    %1487 = vmatmul.mubr.bf16.gmra.mxu0 %v1428
    %v1488 = vpop.f32.mrf.mxu0
    %v1489 = vadd.f32 0.0, %v1488
    %v1490 = vpop.f32.mrf.mxu0
    %v1491 = vpop.f32.mrf.mxu0
    %v1492 = vadd.f32 0.0, %v1491
    %v1493 = vpop.f32.mrf.mxu0
    %1494 = vdwg.mxu0
    %v1495 = vmax.f32 %v1465, 1e-30
    %v1496 = vmax.f32 %v1468, 1e-30
    %v1497 = vmax.f32 %v1473, 1e-30
    %v1498 = vmax.f32 %v1476, 1e-30
    %v1499 = vmax.f32 %v1481, 1e-30
    %v1500 = vmax.f32 %v1484, 1e-30
    %v1501 = vmax.f32 %v1489, 1e-30
    %v1502 = vmax.f32 %v1492, 1e-30
    %1519 = vrot.lane.b32.xlu0 %v1249, 64
    %v1520 = vpop.permute.xlu0 %1519
    %1521 = vrot.lane.b32.xlu0 %v1250, 64
    %v1522 = vpop.permute.xlu0 %1521
    %1523 = vrot.lane.b32.xlu0 %v1251, 64
    %v1524 = vpop.permute.xlu0 %1523
    %1525 = vrot.lane.b32.xlu0 %v1252, 64
    %v1526 = vpop.permute.xlu0 %1525
    %1527 = vrot.lane.b32.xlu0 %v1253, 64
    %v1528 = vpop.permute.xlu0 %1527
    %1529 = vrot.lane.b32.xlu0 %v1254, 64
    %v1530 = vpop.permute.xlu0 %1529
    %1531 = vrot.lane.b32.xlu0 %v1255, 64
    %v1532 = vpop.permute.xlu0 %1531
    %1533 = vrot.lane.b32.xlu0 %v1256, 64
    %v1534 = vpop.permute.xlu0 %1533
    %1535 = vrot.lane.b32.xlu0 %v1257, 64
    %v1536 = vpop.permute.xlu0 %1535
    %1537 = vrot.lane.b32.xlu0 %v1258, 64
    %v1538 = vpop.permute.xlu0 %1537
    %1539 = vrot.lane.b32.xlu0 %v1259, 64
    %v1540 = vpop.permute.xlu0 %1539
    %1541 = vrot.lane.b32.xlu0 %v1260, 64
    %v1542 = vpop.permute.xlu0 %1541
    %1543 = vrot.lane.b32.xlu0 %v1261, 64
    %v1544 = vpop.permute.xlu0 %1543
    %1545 = vrot.lane.b32.xlu0 %v1262, 64
    %v1546 = vpop.permute.xlu0 %1545
    %1547 = vrot.lane.b32.xlu0 %v1263, 64
    %v1548 = vpop.permute.xlu0 %1547
    %1549 = vrot.lane.b32.xlu0 %v1264, 64
    %v1550 = vpop.permute.xlu0 %1549
    %1567 = vmatprep.subr.bf16.mxu0 0
    %1568 = vmatpush1.bf16.msra.mxu0 %v1534
    %1569 = vmatprep.subr.bf16.mxu0 0
    %1570 = vmatpush1.bf16.msra.mxu0 %v1532
    %1571 = vmatprep.subr.bf16.mxu0 0
    %1572 = vmatpush1.bf16.msra.mxu0 %v1530
    %1573 = vmatprep.subr.bf16.mxu0 0
    %1574 = vmatpush1.bf16.msra.mxu0 %v1528
    %1575 = vmatprep.subr.bf16.mxu0 0
    %1576 = vmatpush1.bf16.msra.mxu0 %v1526
    %1577 = vmatprep.subr.bf16.mxu0 0
    %1578 = vmatpush1.bf16.msra.mxu0 %v1524
    %1579 = vmatprep.subr.bf16.mxu0 0
    %1580 = vmatpush1.bf16.msra.mxu0 %v1522
    %1581 = vmatprep.subr.bf16.mxu0 0
    %1582 = vmatpush1.bf16.msra.mxu0 %v1520
    %1583 = vmatprep.subr.bf16.mxu0 0
    %1584 = vmatpush2.bf16.msra.mxu0 %v1550
    %1585 = vmatprep.subr.bf16.mxu0 0
    %1586 = vmatpush2.bf16.msra.mxu0 %v1548
    %1587 = vmatprep.subr.bf16.mxu0 0
    %1588 = vmatpush2.bf16.msra.mxu0 %v1546
    %1589 = vmatprep.subr.bf16.mxu0 0
    %1590 = vmatpush2.bf16.msra.mxu0 %v1544
    %1591 = vmatprep.subr.bf16.mxu0 0
    %1592 = vmatpush2.bf16.msra.mxu0 %v1542
    %1593 = vmatprep.subr.bf16.mxu0 0
    %1594 = vmatpush2.bf16.msra.mxu0 %v1540
    %1595 = vmatprep.subr.bf16.mxu0 0
    %1596 = vmatpush2.bf16.msra.mxu0 %v1538
    %1597 = vmatprep.subr.bf16.mxu0 0
    %1598 = vmatpush2.bf16.msra.mxu0 %v1536
    %1599 = vmatprep.mubr.bf16.mxu0 %v1423
    %1600 = vmatmul.mubr.bf16.gmra.mxu0 %v1422
    %v1601 = vpop.f32.mrf.mxu0
    %v1602 = vadd.f32 0.0, %v1601
    %v1603 = vpop.f32.mrf.mxu0
    %v1604 = vpop.f32.mrf.mxu0
    %v1605 = vadd.f32 0.0, %v1604
    %v1606 = vpop.f32.mrf.mxu0
    %1607 = vmatprep.mubr.bf16.mxu0 %v1425
    %1608 = vmatmul.mubr.bf16.gmra.mxu0 %v1424
    %v1609 = vpop.f32.mrf.mxu0
    %v1610 = vadd.f32 0.0, %v1609
    %v1611 = vpop.f32.mrf.mxu0
    %v1612 = vpop.f32.mrf.mxu0
    %v1613 = vadd.f32 0.0, %v1612
    %v1614 = vpop.f32.mrf.mxu0
    %1615 = vmatprep.mubr.bf16.mxu0 %v1427
    %1616 = vmatmul.mubr.bf16.gmra.mxu0 %v1426
    %v1617 = vpop.f32.mrf.mxu0
    %v1618 = vadd.f32 0.0, %v1617
    %v1619 = vpop.f32.mrf.mxu0
    %v1620 = vpop.f32.mrf.mxu0
    %v1621 = vadd.f32 0.0, %v1620
    %v1622 = vpop.f32.mrf.mxu0
    %1623 = vmatprep.mubr.bf16.mxu0 %v1429
    %1624 = vmatmul.mubr.bf16.gmra.mxu0 %v1428
    %v1625 = vpop.f32.mrf.mxu0
    %v1626 = vadd.f32 0.0, %v1625
    %v1627 = vpop.f32.mrf.mxu0
    %v1628 = vpop.f32.mrf.mxu0
    %v1629 = vadd.f32 0.0, %v1628
    %v1630 = vpop.f32.mrf.mxu0
    %1631 = vdwg.mxu0
    %v1632 = vrcp.pop %v1495
    %v1633 = vrcp.pop %v1496
    %v1634 = vrcp.pop %v1497
    %v1635 = vrcp.pop %v1498
    %v1636 = vrcp.pop %v1499
    %v1637 = vrcp.pop %v1500
    %v1638 = vrcp.pop %v1501
    %v1639 = vrcp.pop %v1502
    %v1640 = vmul.f32 %v1602, %v1632
    %v1641 = vmul.f32 %v1605, %v1633
    %v1642 = vmul.f32 %v1610, %v1634
    %v1643 = vmul.f32 %v1613, %v1635
    %v1644 = vmul.f32 %v1618, %v1636
    %v1645 = vmul.f32 %v1621, %v1637
    %v1646 = vmul.f32 %v1626, %v1638
    %v1647 = vmul.f32 %v1629, %v1639
    %1648 = vst.msk [vmem:[#allocation2 + $0x40] sm:$0xff] %vm136, %v1640
    %1649 = vst.msk [vmem:[#allocation2 + $0x48] sm:$0xff] %vm136, %v1641
    %1650 = vst.msk [vmem:[#allocation2 + $0x50] sm:$0xff] %vm136, %v1642
    %1651 = vst.msk [vmem:[#allocation2 + $0x58] sm:$0xff] %vm136, %v1643
    %1652 = vst.msk [vmem:[#allocation2 + $0x60] sm:$0xff] %vm136, %v1644
    %1653 = vst.msk [vmem:[#allocation2 + $0x68] sm:$0xff] %vm136, %v1645
    %1654 = vst.msk [vmem:[#allocation2 + $0x70] sm:$0xff] %vm136, %v1646
    %1655 = vst.msk [vmem:[#allocation2 + $0x78] sm:$0xff] %vm136, %v1647
    %v1656 = vld [vmem:[#allocation2] sm:$0xff]
    %v1657 = vld [vmem:[#allocation2 + $0x8] sm:$0xff]
    %v1658 = vld [vmem:[#allocation2 + $0x10] sm:$0xff]
    %v1659 = vld [vmem:[#allocation2 + $0x18] sm:$0xff]
    %v1660 = vld [vmem:[#allocation2 + $0x20] sm:$0xff]
    %v1661 = vld [vmem:[#allocation2 + $0x28] sm:$0xff]
    %v1662 = vld [vmem:[#allocation2 + $0x30] sm:$0xff]
    %v1663 = vld [vmem:[#allocation2 + $0x38] sm:$0xff]
    %v1664 = vld [vmem:[#allocation2 + $0x40] sm:$0xff]
    %v1665 = vld [vmem:[#allocation2 + $0x48] sm:$0xff]
    %v1666 = vld [vmem:[#allocation2 + $0x50] sm:$0xff]
    %v1667 = vld [vmem:[#allocation2 + $0x58] sm:$0xff]
    %v1668 = vld [vmem:[#allocation2 + $0x60] sm:$0xff]
    %v1669 = vld [vmem:[#allocation2 + $0x68] sm:$0xff]
    %v1670 = vld [vmem:[#allocation2 + $0x70] sm:$0xff]
    %v1671 = vld [vmem:[#allocation2 + $0x78] sm:$0xff]
    %v1672 = vpack.c.bf16 %v1657, %v1656
    %v1673 = vpack.c.bf16 %v1659, %v1658
    %v1674 = vpack.c.bf16 %v1661, %v1660
    %v1675 = vpack.c.bf16 %v1663, %v1662
    %v1676 = vpack.c.bf16 %v1665, %v1664
    %v1677 = vpack.c.bf16 %v1667, %v1666
    %v1678 = vpack.c.bf16 %v1669, %v1668
    %v1679 = vpack.c.bf16 %v1671, %v1670
    %v1680 = vld [vmem:[%s5] sm:$0xf]
    %v1681 = vld [vmem:[%s5 + $0x4] sm:$0xf]
    %v1682 = vld [vmem:[%s5 + $0x8] sm:$0xf]
    %v1683 = vld [vmem:[%s5 + $0xc] sm:$0xf]
    %v1688 = vunpack.c.l.b16 %v1680
    %v1689 = vunpack.c.l.b16 %v1681
    %v1690 = vunpack.c.l.b16 %v1682
    %v1691 = vunpack.c.l.b16 %v1683
    %v1692 = vpack.c.b16 %v1689, %v1688
    %v1693 = vpack.c.b16 %v1691, %v1690
    %v1697 = vsel %vm136, %v1672, 0
    %v1700 = vsel %vm136, %v1673, 0
    %v1703 = vsel %vm136, %v1674, 0
    %v1706 = vsel %vm136, %v1675, 0
    %v1709 = vsel %vm136, %v1676, 0
    %v1712 = vsel %vm136, %v1677, 0
    %v1715 = vsel %vm136, %v1678, 0
    %v1718 = vsel %vm136, %v1679, 0
    %1720 = vmatprep.subr.bf16.mxu0 0
    %1721 = vmatpush1.bf16.msra.mxu0 0
    %1722 = vmatprep.subr.bf16.mxu0 0
    %1723 = vmatpush1.bf16.msra.mxu0 0
    %1724 = vmatprep.subr.bf16.mxu0 0
    %1725 = vmatpush1.bf16.msra.mxu0 0
    %1726 = vmatprep.subr.bf16.mxu0 0
    %1727 = vmatpush1.bf16.msra.mxu0 0
    %1728 = vmatprep.subr.bf16.mxu0 0
    %1729 = vmatpush1.bf16.msra.mxu0 0
    %1730 = vmatprep.subr.bf16.mxu0 0
    %1731 = vmatpush1.bf16.msra.mxu0 0
    %1732 = vmatprep.subr.bf16.mxu0 0
    %1733 = vmatpush1.bf16.msra.mxu0 %v1693
    %1734 = vmatprep.subr.bf16.mxu0 0
    %1735 = vmatpush1.bf16.msra.mxu0 %v1692
    %1736 = vmatprep.subr.bf16.mxu0 0
    %1737 = vmatpush2.bf16.msra.mxu0 0
    %1738 = vmatprep.subr.bf16.mxu0 0
    %1739 = vmatpush2.bf16.msra.mxu0 0
    %1740 = vmatprep.subr.bf16.mxu0 0
    %1741 = vmatpush2.bf16.msra.mxu0 0
    %1742 = vmatprep.subr.bf16.mxu0 0
    %1743 = vmatpush2.bf16.msra.mxu0 0
    %1744 = vmatprep.subr.bf16.mxu0 0
    %1745 = vmatpush2.bf16.msra.mxu0 0
    %1746 = vmatprep.subr.bf16.mxu0 0
    %1747 = vmatpush2.bf16.msra.mxu0 0
    %1748 = vmatprep.subr.bf16.mxu0 0
    %1749 = vmatpush2.bf16.msra.mxu0 0
    %1750 = vmatprep.subr.bf16.mxu0 0
    %1751 = vmatpush2.bf16.msra.mxu0 0
    %1752 = vmatprep.mubr.bf16.mxu0 0
    %1753 = vmatmul.mubr.bf16.gmra.mxu0 %v1697
    %v1754 = vpop.f32.mrf.mxu0
    %v1755 = vadd.f32 0.0, %v1754
    %v1756 = vpop.f32.mrf.mxu0
    %v1757 = vpop.f32.mrf.mxu0
    %v1758 = vadd.f32 0.0, %v1757
    %v1759 = vpop.f32.mrf.mxu0
    %1760 = vmatprep.mubr.bf16.mxu0 0
    %1761 = vmatmul.mubr.bf16.gmra.mxu0 %v1700
    %v1762 = vpop.f32.mrf.mxu0
    %v1763 = vadd.f32 0.0, %v1762
    %v1764 = vpop.f32.mrf.mxu0
    %v1765 = vpop.f32.mrf.mxu0
    %v1766 = vadd.f32 0.0, %v1765
    %v1767 = vpop.f32.mrf.mxu0
    %1768 = vmatprep.mubr.bf16.mxu0 0
    %1769 = vmatmul.mubr.bf16.gmra.mxu0 %v1703
    %v1770 = vpop.f32.mrf.mxu0
    %v1771 = vadd.f32 0.0, %v1770
    %v1772 = vpop.f32.mrf.mxu0
    %v1773 = vpop.f32.mrf.mxu0
    %v1774 = vadd.f32 0.0, %v1773
    %v1775 = vpop.f32.mrf.mxu0
    %1776 = vmatprep.mubr.bf16.mxu0 0
    %1777 = vmatmul.mubr.bf16.gmra.mxu0 %v1706
    %v1778 = vpop.f32.mrf.mxu0
    %v1779 = vadd.f32 0.0, %v1778
    %v1780 = vpop.f32.mrf.mxu0
    %v1781 = vpop.f32.mrf.mxu0
    %v1782 = vadd.f32 0.0, %v1781
    %v1783 = vpop.f32.mrf.mxu0
    %1784 = vmatprep.mubr.bf16.mxu0 0
    %1785 = vmatmul.mubr.bf16.gmra.mxu0 %v1709
    %v1786 = vpop.f32.mrf.mxu0
    %v1787 = vadd.f32 0.0, %v1786
    %v1788 = vpop.f32.mrf.mxu0
    %v1789 = vpop.f32.mrf.mxu0
    %v1790 = vadd.f32 0.0, %v1789
    %v1791 = vpop.f32.mrf.mxu0
    %1792 = vmatprep.mubr.bf16.mxu0 0
    %1793 = vmatmul.mubr.bf16.gmra.mxu0 %v1712
    %v1794 = vpop.f32.mrf.mxu0
    %v1795 = vadd.f32 0.0, %v1794
    %v1796 = vpop.f32.mrf.mxu0
    %v1797 = vpop.f32.mrf.mxu0
    %v1798 = vadd.f32 0.0, %v1797
    %v1799 = vpop.f32.mrf.mxu0
    %1800 = vmatprep.mubr.bf16.mxu0 0
    %1801 = vmatmul.mubr.bf16.gmra.mxu0 %v1715
    %v1802 = vpop.f32.mrf.mxu0
    %v1803 = vadd.f32 0.0, %v1802
    %v1804 = vpop.f32.mrf.mxu0
    %v1805 = vpop.f32.mrf.mxu0
    %v1806 = vadd.f32 0.0, %v1805
    %v1807 = vpop.f32.mrf.mxu0
    %1808 = vmatprep.mubr.bf16.mxu0 0
    %1809 = vmatmul.mubr.bf16.gmra.mxu0 %v1718
    %v1810 = vpop.f32.mrf.mxu0
    %v1811 = vadd.f32 0.0, %v1810
    %v1812 = vpop.f32.mrf.mxu0
    %v1813 = vpop.f32.mrf.mxu0
    %v1814 = vadd.f32 0.0, %v1813
    %v1815 = vpop.f32.mrf.mxu0
    %1816 = vdwg.mxu0
    %v1817 = vadd.f32 %v281, %v1755
    %v1818 = vadd.f32 %v282, %v1758
    %v1819 = vadd.f32 %v283, %v1763
    %v1820 = vadd.f32 %v284, %v1766
    %v1821 = vadd.f32 %v285, %v1771
    %v1822 = vadd.f32 %v286, %v1774
    %v1823 = vadd.f32 %v287, %v1779
    %v1824 = vadd.f32 %v288, %v1782
    %v1825 = vadd.f32 %v289, %v1787
    %v1826 = vadd.f32 %v290, %v1790
    %v1827 = vadd.f32 %v291, %v1795
    %v1828 = vadd.f32 %v292, %v1798
    %v1829 = vadd.f32 %v293, %v1803
    %v1830 = vadd.f32 %v294, %v1806
    %v1831 = vadd.f32 %v295, %v1811
    %v1832 = vadd.f32 %v296, %v1814
    %v1833 = vld [vmem:[%s6] sm:$0x1]
    %v1835 = vlaneseq
    %v1836 = vshrl.u32 %v1835, 7
    %v1837 = vsub.s32 0, %v1836
    %v1838 = vrot.slane %v1833, %v1837
    %v1840 = vadd.f32 %v1817, %v1838
    %v1841 = vadd.f32 %v1818, %v1838
    %v1842 = vadd.f32 %v1819, %v1838
    %v1843 = vadd.f32 %v1820, %v1838
    %v1844 = vadd.f32 %v1821, %v1838
    %v1845 = vadd.f32 %v1822, %v1838
    %v1846 = vadd.f32 %v1823, %v1838
    %v1847 = vadd.f32 %v1824, %v1838
    %v1848 = vadd.f32 %v1825, %v1838
    %v1849 = vadd.f32 %v1826, %v1838
    %v1850 = vadd.f32 %v1827, %v1838
    %v1851 = vadd.f32 %v1828, %v1838
    %v1852 = vadd.f32 %v1829, %v1838
    %v1853 = vadd.f32 %v1830, %v1838
    %v1854 = vadd.f32 %v1831, %v1838
    %v1855 = vadd.f32 %v1832, %v1838
    %v1856 = vpack.c.bf16 %v1841, %v1840
    %v1857 = vpack.c.bf16 %v1843, %v1842
    %v1858 = vpack.c.bf16 %v1845, %v1844
    %v1859 = vpack.c.bf16 %v1847, %v1846
    %v1860 = vpack.c.bf16 %v1849, %v1848
    %v1861 = vpack.c.bf16 %v1851, %v1850
    %v1862 = vpack.c.bf16 %v1853, %v1852
    %v1863 = vpack.c.bf16 %v1855, %v1854
    %v1864 = vld [vmem:[%s7] sm:$0xf]
    %v1865 = vld [vmem:[%s7 + $0x4] sm:$0xf]
    %v1866 = vld [vmem:[%s7 + $0x8] sm:$0xf]
    %v1867 = vld [vmem:[%s7 + $0xc] sm:$0xf]
    %v1872 = vunpack.c.l.b16 %v1864
    %v1873 = vunpack.c.l.b16 %v1865
    %v1874 = vunpack.c.l.b16 %v1866
    %v1875 = vunpack.c.l.b16 %v1867
    %v1876 = vpack.c.b16 %v1873, %v1872
    %v1877 = vpack.c.b16 %v1875, %v1874
    %v1881 = vsel %vm136, %v1856, 0
    %v1884 = vsel %vm136, %v1857, 0
    %v1887 = vsel %vm136, %v1858, 0
    %v1890 = vsel %vm136, %v1859, 0
    %v1893 = vsel %vm136, %v1860, 0
    %v1896 = vsel %vm136, %v1861, 0
    %v1899 = vsel %vm136, %v1862, 0
    %v1902 = vsel %vm136, %v1863, 0
    %1904 = vmatprep.subr.bf16.mxu0 0
    %1905 = vmatpush1.bf16.msra.mxu0 0
    %1906 = vmatprep.subr.bf16.mxu0 0
    %1907 = vmatpush1.bf16.msra.mxu0 0
    %1908 = vmatprep.subr.bf16.mxu0 0
    %1909 = vmatpush1.bf16.msra.mxu0 0
    %1910 = vmatprep.subr.bf16.mxu0 0
    %1911 = vmatpush1.bf16.msra.mxu0 0
    %1912 = vmatprep.subr.bf16.mxu0 0
    %1913 = vmatpush1.bf16.msra.mxu0 0
    %1914 = vmatprep.subr.bf16.mxu0 0
    %1915 = vmatpush1.bf16.msra.mxu0 0
    %1916 = vmatprep.subr.bf16.mxu0 0
    %1917 = vmatpush1.bf16.msra.mxu0 %v1877
    %1918 = vmatprep.subr.bf16.mxu0 0
    %1919 = vmatpush1.bf16.msra.mxu0 %v1876
    %1920 = vmatprep.subr.bf16.mxu0 0
    %1921 = vmatpush2.bf16.msra.mxu0 0
    %1922 = vmatprep.subr.bf16.mxu0 0
    %1923 = vmatpush2.bf16.msra.mxu0 0
    %1924 = vmatprep.subr.bf16.mxu0 0
    %1925 = vmatpush2.bf16.msra.mxu0 0
    %1926 = vmatprep.subr.bf16.mxu0 0
    %1927 = vmatpush2.bf16.msra.mxu0 0
    %1928 = vmatprep.subr.bf16.mxu0 0
    %1929 = vmatpush2.bf16.msra.mxu0 0
    %1930 = vmatprep.subr.bf16.mxu0 0
    %1931 = vmatpush2.bf16.msra.mxu0 0
    %1932 = vmatprep.subr.bf16.mxu0 0
    %1933 = vmatpush2.bf16.msra.mxu0 0
    %1934 = vmatprep.subr.bf16.mxu0 0
    %1935 = vmatpush2.bf16.msra.mxu0 0
    %1936 = vmatprep.mubr.bf16.mxu0 0
    %1937 = vmatmul.mubr.bf16.gmra.mxu0 %v1881
    %v1938 = vpop.f32.mrf.mxu0
    %v1939 = vadd.f32 0.0, %v1938
    %v1940 = vpop.f32.mrf.mxu0
    %v1941 = vpop.f32.mrf.mxu0
    %v1942 = vadd.f32 0.0, %v1941
    %v1943 = vpop.f32.mrf.mxu0
    %1944 = vmatprep.mubr.bf16.mxu0 0
    %1945 = vmatmul.mubr.bf16.gmra.mxu0 %v1884
    %v1946 = vpop.f32.mrf.mxu0
    %v1947 = vadd.f32 0.0, %v1946
    %v1948 = vpop.f32.mrf.mxu0
    %v1949 = vpop.f32.mrf.mxu0
    %v1950 = vadd.f32 0.0, %v1949
    %v1951 = vpop.f32.mrf.mxu0
    %1952 = vmatprep.mubr.bf16.mxu0 0
    %1953 = vmatmul.mubr.bf16.gmra.mxu0 %v1887
    %v1954 = vpop.f32.mrf.mxu0
    %v1955 = vadd.f32 0.0, %v1954
    %v1956 = vpop.f32.mrf.mxu0
    %v1957 = vpop.f32.mrf.mxu0
    %v1958 = vadd.f32 0.0, %v1957
    %v1959 = vpop.f32.mrf.mxu0
    %1960 = vmatprep.mubr.bf16.mxu0 0
    %1961 = vmatmul.mubr.bf16.gmra.mxu0 %v1890
    %v1962 = vpop.f32.mrf.mxu0
    %v1963 = vadd.f32 0.0, %v1962
    %v1964 = vpop.f32.mrf.mxu0
    %v1965 = vpop.f32.mrf.mxu0
    %v1966 = vadd.f32 0.0, %v1965
    %v1967 = vpop.f32.mrf.mxu0
    %1968 = vmatprep.mubr.bf16.mxu0 0
    %1969 = vmatmul.mubr.bf16.gmra.mxu0 %v1893
    %v1970 = vpop.f32.mrf.mxu0
    %v1971 = vadd.f32 0.0, %v1970
    %v1972 = vpop.f32.mrf.mxu0
    %v1973 = vpop.f32.mrf.mxu0
    %v1974 = vadd.f32 0.0, %v1973
    %v1975 = vpop.f32.mrf.mxu0
    %1976 = vmatprep.mubr.bf16.mxu0 0
    %1977 = vmatmul.mubr.bf16.gmra.mxu0 %v1896
    %v1978 = vpop.f32.mrf.mxu0
    %v1979 = vadd.f32 0.0, %v1978
    %v1980 = vpop.f32.mrf.mxu0
    %v1981 = vpop.f32.mrf.mxu0
    %v1982 = vadd.f32 0.0, %v1981
    %v1983 = vpop.f32.mrf.mxu0
    %1984 = vmatprep.mubr.bf16.mxu0 0
    %1985 = vmatmul.mubr.bf16.gmra.mxu0 %v1899
    %v1986 = vpop.f32.mrf.mxu0
    %v1987 = vadd.f32 0.0, %v1986
    %v1988 = vpop.f32.mrf.mxu0
    %v1989 = vpop.f32.mrf.mxu0
    %v1990 = vadd.f32 0.0, %v1989
    %v1991 = vpop.f32.mrf.mxu0
    %1992 = vmatprep.mubr.bf16.mxu0 0
    %1993 = vmatmul.mubr.bf16.gmra.mxu0 %v1902
    %v1994 = vpop.f32.mrf.mxu0
    %v1995 = vadd.f32 0.0, %v1994
    %v1996 = vpop.f32.mrf.mxu0
    %v1997 = vpop.f32.mrf.mxu0
    %v1998 = vadd.f32 0.0, %v1997
    %v1999 = vpop.f32.mrf.mxu0
    %2000 = vdwg.mxu0
    %v2001 = vpack.c.bf16 %v1942, %v1939
    %v2002 = vpack.c.bf16 %v1950, %v1947
    %v2003 = vpack.c.bf16 %v1958, %v1955
    %v2004 = vpack.c.bf16 %v1966, %v1963
    %v2005 = vpack.c.bf16 %v1974, %v1971
    %v2006 = vpack.c.bf16 %v1982, %v1979
    %v2007 = vpack.c.bf16 %v1990, %v1987
    %v2008 = vpack.c.bf16 %v1998, %v1995
    %v2009 = vld [vmem:[%s8] sm:$0xf]
    %v2010 = vld [vmem:[%s8 + $0x4] sm:$0xf]
    %v2011 = vld [vmem:[%s8 + $0x8] sm:$0xf]
    %v2012 = vld [vmem:[%s8 + $0xc] sm:$0xf]
    %v2017 = vunpack.c.l.b16 %v2009
    %v2018 = vunpack.c.l.b16 %v2010
    %v2019 = vunpack.c.l.b16 %v2011
    %v2020 = vunpack.c.l.b16 %v2012
    %v2021 = vpack.c.b16 %v2018, %v2017
    %v2022 = vpack.c.b16 %v2020, %v2019
    %v2026 = vsel %vm136, %v2001, 0
    %v2029 = vsel %vm136, %v2002, 0
    %v2032 = vsel %vm136, %v2003, 0
    %v2035 = vsel %vm136, %v2004, 0
    %v2038 = vsel %vm136, %v2005, 0
    %v2041 = vsel %vm136, %v2006, 0
    %v2044 = vsel %vm136, %v2007, 0
    %v2047 = vsel %vm136, %v2008, 0
    %2049 = vmatprep.subr.bf16.mxu0 0
    %2050 = vmatpush1.bf16.msra.mxu0 0
    %2051 = vmatprep.subr.bf16.mxu0 0
    %2052 = vmatpush1.bf16.msra.mxu0 0
    %2053 = vmatprep.subr.bf16.mxu0 0
    %2054 = vmatpush1.bf16.msra.mxu0 0
    %2055 = vmatprep.subr.bf16.mxu0 0
    %2056 = vmatpush1.bf16.msra.mxu0 0
    %2057 = vmatprep.subr.bf16.mxu0 0
    %2058 = vmatpush1.bf16.msra.mxu0 0
    %2059 = vmatprep.subr.bf16.mxu0 0
    %2060 = vmatpush1.bf16.msra.mxu0 0
    %2061 = vmatprep.subr.bf16.mxu0 0
    %2062 = vmatpush1.bf16.msra.mxu0 %v2022
    %2063 = vmatprep.subr.bf16.mxu0 0
    %2064 = vmatpush1.bf16.msra.mxu0 %v2021
    %2065 = vmatprep.subr.bf16.mxu0 0
    %2066 = vmatpush2.bf16.msra.mxu0 0
    %2067 = vmatprep.subr.bf16.mxu0 0
    %2068 = vmatpush2.bf16.msra.mxu0 0
    %2069 = vmatprep.subr.bf16.mxu0 0
    %2070 = vmatpush2.bf16.msra.mxu0 0
    %2071 = vmatprep.subr.bf16.mxu0 0
    %2072 = vmatpush2.bf16.msra.mxu0 0
    %2073 = vmatprep.subr.bf16.mxu0 0
    %2074 = vmatpush2.bf16.msra.mxu0 0
    %2075 = vmatprep.subr.bf16.mxu0 0
    %2076 = vmatpush2.bf16.msra.mxu0 0
    %2077 = vmatprep.subr.bf16.mxu0 0
    %2078 = vmatpush2.bf16.msra.mxu0 0
    %2079 = vmatprep.subr.bf16.mxu0 0
    %2080 = vmatpush2.bf16.msra.mxu0 0
    %2081 = vmatprep.mubr.bf16.mxu0 0
    %2082 = vmatmul.mubr.bf16.gmra.mxu0 %v2026
    %v2083 = vpop.f32.mrf.mxu0
    %v2084 = vadd.f32 0.0, %v2083
    %v2085 = vpop.f32.mrf.mxu0
    %v2086 = vpop.f32.mrf.mxu0
    %v2087 = vadd.f32 0.0, %v2086
    %v2088 = vpop.f32.mrf.mxu0
    %2089 = vmatprep.mubr.bf16.mxu0 0
    %2090 = vmatmul.mubr.bf16.gmra.mxu0 %v2029
    %v2091 = vpop.f32.mrf.mxu0
    %v2092 = vadd.f32 0.0, %v2091
    %v2093 = vpop.f32.mrf.mxu0
    %v2094 = vpop.f32.mrf.mxu0
    %v2095 = vadd.f32 0.0, %v2094
    %v2096 = vpop.f32.mrf.mxu0
    %2097 = vmatprep.mubr.bf16.mxu0 0
    %2098 = vmatmul.mubr.bf16.gmra.mxu0 %v2032
    %v2099 = vpop.f32.mrf.mxu0
    %v2100 = vadd.f32 0.0, %v2099
    %v2101 = vpop.f32.mrf.mxu0
    %v2102 = vpop.f32.mrf.mxu0
    %v2103 = vadd.f32 0.0, %v2102
    %v2104 = vpop.f32.mrf.mxu0
    %2105 = vmatprep.mubr.bf16.mxu0 0
    %2106 = vmatmul.mubr.bf16.gmra.mxu0 %v2035
    %v2107 = vpop.f32.mrf.mxu0
    %v2108 = vadd.f32 0.0, %v2107
    %v2109 = vpop.f32.mrf.mxu0
    %v2110 = vpop.f32.mrf.mxu0
    %v2111 = vadd.f32 0.0, %v2110
    %v2112 = vpop.f32.mrf.mxu0
    %2113 = vmatprep.mubr.bf16.mxu0 0
    %2114 = vmatmul.mubr.bf16.gmra.mxu0 %v2038
    %v2115 = vpop.f32.mrf.mxu0
    %v2116 = vadd.f32 0.0, %v2115
    %v2117 = vpop.f32.mrf.mxu0
    %v2118 = vpop.f32.mrf.mxu0
    %v2119 = vadd.f32 0.0, %v2118
    %v2120 = vpop.f32.mrf.mxu0
    %2121 = vmatprep.mubr.bf16.mxu0 0
    %2122 = vmatmul.mubr.bf16.gmra.mxu0 %v2041
    %v2123 = vpop.f32.mrf.mxu0
    %v2124 = vadd.f32 0.0, %v2123
    %v2125 = vpop.f32.mrf.mxu0
    %v2126 = vpop.f32.mrf.mxu0
    %v2127 = vadd.f32 0.0, %v2126
    %v2128 = vpop.f32.mrf.mxu0
    %2129 = vmatprep.mubr.bf16.mxu0 0
    %2130 = vmatmul.mubr.bf16.gmra.mxu0 %v2044
    %v2131 = vpop.f32.mrf.mxu0
    %v2132 = vadd.f32 0.0, %v2131
    %v2133 = vpop.f32.mrf.mxu0
    %v2134 = vpop.f32.mrf.mxu0
    %v2135 = vadd.f32 0.0, %v2134
    %v2136 = vpop.f32.mrf.mxu0
    %2137 = vmatprep.mubr.bf16.mxu0 0
    %2138 = vmatmul.mubr.bf16.gmra.mxu0 %v2047
    %v2139 = vpop.f32.mrf.mxu0
    %v2140 = vadd.f32 0.0, %v2139
    %v2141 = vpop.f32.mrf.mxu0
    %v2142 = vpop.f32.mrf.mxu0
    %v2143 = vadd.f32 0.0, %v2142
    %v2144 = vpop.f32.mrf.mxu0
    %2145 = vdwg.mxu0
    %v2146 = vadd.f32 %v1840, %v2084
    %v2147 = vadd.f32 %v1841, %v2087
    %v2148 = vadd.f32 %v1842, %v2092
    %v2149 = vadd.f32 %v1843, %v2095
    %v2150 = vadd.f32 %v1844, %v2100
    %v2151 = vadd.f32 %v1845, %v2103
    %v2152 = vadd.f32 %v1846, %v2108
    %v2153 = vadd.f32 %v1847, %v2111
    %v2154 = vadd.f32 %v1848, %v2116
    %v2155 = vadd.f32 %v1849, %v2119
    %v2156 = vadd.f32 %v1850, %v2124
    %v2157 = vadd.f32 %v1851, %v2127
    %v2158 = vadd.f32 %v1852, %v2132
    %v2159 = vadd.f32 %v1853, %v2135
    %v2160 = vadd.f32 %v1854, %v2140
    %v2161 = vadd.f32 %v1855, %v2143
    %v2162 = vpack.c.bf16 %v2147, %v2146
    %v2163 = vpack.c.bf16 %v2149, %v2148
    %v2164 = vpack.c.bf16 %v2151, %v2150
    %v2165 = vpack.c.bf16 %v2153, %v2152
    %v2166 = vpack.c.bf16 %v2155, %v2154
    %v2167 = vpack.c.bf16 %v2157, %v2156
    %v2168 = vpack.c.bf16 %v2159, %v2158
    %v2169 = vpack.c.bf16 %v2161, %v2160
    %s2170 = scalar_lea.vmem %s3, 16
    %v2171 = vld [vmem:[%s2170] sm:$0xf]
    %v2172 = vld [vmem:[%s2170 + $0x4] sm:$0xf]
    %v2173 = vld [vmem:[%s2170 + $0x8] sm:$0xf]
    %v2174 = vld [vmem:[%s2170 + $0xc] sm:$0xf]
    %s2175 = scalar_lea.vmem %s4, 1
    %v2176 = vld [vmem:[%s2175] sm:$0x1]
    %v2178 = vlaneseq
    %v2179 = vshrl.u32 %v2178, 7
    %v2180 = vsub.s32 0, %v2179
    %v2181 = vrot.slane %v2176, %v2180
    %v2187 = vunpack.c.l.b16 %v2171
    %v2188 = vunpack.c.l.b16 %v2172
    %v2189 = vunpack.c.l.b16 %v2173
    %v2190 = vunpack.c.l.b16 %v2174
    %v2191 = vpack.c.b16 %v2188, %v2187
    %v2192 = vpack.c.b16 %v2190, %v2189
    %v2196 = vsel %vm136, %v2162, 0
    %v2199 = vsel %vm136, %v2163, 0
    %v2202 = vsel %vm136, %v2164, 0
    %v2205 = vsel %vm136, %v2165, 0
    %v2208 = vsel %vm136, %v2166, 0
    %v2211 = vsel %vm136, %v2167, 0
    %v2214 = vsel %vm136, %v2168, 0
    %v2217 = vsel %vm136, %v2169, 0
    %2219 = vmatprep.subr.bf16.mxu0 0
    %2220 = vmatpush1.bf16.msra.mxu0 0
    %2221 = vmatprep.subr.bf16.mxu0 0
    %2222 = vmatpush1.bf16.msra.mxu0 0
    %2223 = vmatprep.subr.bf16.mxu0 0
    %2224 = vmatpush1.bf16.msra.mxu0 0
    %2225 = vmatprep.subr.bf16.mxu0 0
    %2226 = vmatpush1.bf16.msra.mxu0 0
    %2227 = vmatprep.subr.bf16.mxu0 0
    %2228 = vmatpush1.bf16.msra.mxu0 0
    %2229 = vmatprep.subr.bf16.mxu0 0
    %2230 = vmatpush1.bf16.msra.mxu0 0
    %2231 = vmatprep.subr.bf16.mxu0 0
    %2232 = vmatpush1.bf16.msra.mxu0 %v2192
    %2233 = vmatprep.subr.bf16.mxu0 0
    %2234 = vmatpush1.bf16.msra.mxu0 %v2191
    %2235 = vmatprep.subr.bf16.mxu0 0
    %2236 = vmatpush2.bf16.msra.mxu0 0
    %2237 = vmatprep.subr.bf16.mxu0 0
    %2238 = vmatpush2.bf16.msra.mxu0 0
    %2239 = vmatprep.subr.bf16.mxu0 0
    %2240 = vmatpush2.bf16.msra.mxu0 0
    %2241 = vmatprep.subr.bf16.mxu0 0
    %2242 = vmatpush2.bf16.msra.mxu0 0
    %2243 = vmatprep.subr.bf16.mxu0 0
    %2244 = vmatpush2.bf16.msra.mxu0 0
    %2245 = vmatprep.subr.bf16.mxu0 0
    %2246 = vmatpush2.bf16.msra.mxu0 0
    %2247 = vmatprep.subr.bf16.mxu0 0
    %2248 = vmatpush2.bf16.msra.mxu0 0
    %2249 = vmatprep.subr.bf16.mxu0 0
    %2250 = vmatpush2.bf16.msra.mxu0 0
    %2251 = vmatprep.mubr.bf16.mxu0 0
    %2252 = vmatmul.mubr.bf16.gmra.mxu0 %v2196
    %v2253 = vpop.f32.mrf.mxu0
    %v2254 = vadd.f32 %v2181, %v2253
    %v2255 = vpop.f32.mrf.mxu0
    %v2256 = vpop.f32.mrf.mxu0
    %v2257 = vadd.f32 %v2181, %v2256
    %v2258 = vpop.f32.mrf.mxu0
    %2259 = vmatprep.mubr.bf16.mxu0 0
    %2260 = vmatmul.mubr.bf16.gmra.mxu0 %v2199
    %v2261 = vpop.f32.mrf.mxu0
    %v2262 = vadd.f32 %v2181, %v2261
    %v2263 = vpop.f32.mrf.mxu0
    %v2264 = vpop.f32.mrf.mxu0
    %v2265 = vadd.f32 %v2181, %v2264
    %v2266 = vpop.f32.mrf.mxu0
    %2267 = vmatprep.mubr.bf16.mxu0 0
    %2268 = vmatmul.mubr.bf16.gmra.mxu0 %v2202
    %v2269 = vpop.f32.mrf.mxu0
    %v2270 = vadd.f32 %v2181, %v2269
    %v2271 = vpop.f32.mrf.mxu0
    %v2272 = vpop.f32.mrf.mxu0
    %v2273 = vadd.f32 %v2181, %v2272
    %v2274 = vpop.f32.mrf.mxu0
    %2275 = vmatprep.mubr.bf16.mxu0 0
    %2276 = vmatmul.mubr.bf16.gmra.mxu0 %v2205
    %v2277 = vpop.f32.mrf.mxu0
    %v2278 = vadd.f32 %v2181, %v2277
    %v2279 = vpop.f32.mrf.mxu0
    %v2280 = vpop.f32.mrf.mxu0
    %v2281 = vadd.f32 %v2181, %v2280
    %v2282 = vpop.f32.mrf.mxu0
    %2283 = vmatprep.mubr.bf16.mxu0 0
    %2284 = vmatmul.mubr.bf16.gmra.mxu0 %v2208
    %v2285 = vpop.f32.mrf.mxu0
    %v2286 = vadd.f32 %v2181, %v2285
    %v2287 = vpop.f32.mrf.mxu0
    %v2288 = vpop.f32.mrf.mxu0
    %v2289 = vadd.f32 %v2181, %v2288
    %v2290 = vpop.f32.mrf.mxu0
    %2291 = vmatprep.mubr.bf16.mxu0 0
    %2292 = vmatmul.mubr.bf16.gmra.mxu0 %v2211
    %v2293 = vpop.f32.mrf.mxu0
    %v2294 = vadd.f32 %v2181, %v2293
    %v2295 = vpop.f32.mrf.mxu0
    %v2296 = vpop.f32.mrf.mxu0
    %v2297 = vadd.f32 %v2181, %v2296
    %v2298 = vpop.f32.mrf.mxu0
    %2299 = vmatprep.mubr.bf16.mxu0 0
    %2300 = vmatmul.mubr.bf16.gmra.mxu0 %v2214
    %v2301 = vpop.f32.mrf.mxu0
    %v2302 = vadd.f32 %v2181, %v2301
    %v2303 = vpop.f32.mrf.mxu0
    %v2304 = vpop.f32.mrf.mxu0
    %v2305 = vadd.f32 %v2181, %v2304
    %v2306 = vpop.f32.mrf.mxu0
    %2307 = vmatprep.mubr.bf16.mxu0 0
    %2308 = vmatmul.mubr.bf16.gmra.mxu0 %v2217
    %v2309 = vpop.f32.mrf.mxu0
    %v2310 = vadd.f32 %v2181, %v2309
    %v2311 = vpop.f32.mrf.mxu0
    %v2312 = vpop.f32.mrf.mxu0
    %v2313 = vadd.f32 %v2181, %v2312
    %v2314 = vpop.f32.mrf.mxu0
    %2315 = vdwg.mxu0
    %v2316 = vpack.c.bf16 %v2257, %v2254
    %v2317 = vpack.c.bf16 %v2265, %v2262
    %v2318 = vpack.c.bf16 %v2273, %v2270
    %v2319 = vpack.c.bf16 %v2281, %v2278
    %v2320 = vpack.c.bf16 %v2289, %v2286
    %v2321 = vpack.c.bf16 %v2297, %v2294
    %v2322 = vpack.c.bf16 %v2305, %v2302
    %v2323 = vpack.c.bf16 %v2313, %v2310
    %2332 = vrot.lane.b32.xlu0 %v2254, 96
    %v2333 = vpop.permute.xlu0 %2332
    %2334 = vrot.lane.b32.xlu0 %v2257, 96
    %v2335 = vpop.permute.xlu0 %2334
    %2336 = vrot.lane.b32.xlu0 %v2262, 96
    %v2337 = vpop.permute.xlu0 %2336
    %2338 = vrot.lane.b32.xlu0 %v2265, 96
    %v2339 = vpop.permute.xlu0 %2338
    %2340 = vrot.lane.b32.xlu0 %v2270, 96
    %v2341 = vpop.permute.xlu0 %2340
    %2342 = vrot.lane.b32.xlu0 %v2273, 96
    %v2343 = vpop.permute.xlu0 %2342
    %2344 = vrot.lane.b32.xlu0 %v2278, 96
    %v2345 = vpop.permute.xlu0 %2344
    %2346 = vrot.lane.b32.xlu0 %v2281, 96
    %v2347 = vpop.permute.xlu0 %2346
    %2356 = vxpose.xlu0.b32.start [1/16] %v2333, 128
    %2357 = vxpose.xlu0.b32.cont [2/16] %v2335, 128
    %2358 = vxpose.xlu0.b32.cont [3/16] %v2337, 128
    %2359 = vxpose.xlu0.b32.cont [4/16] %v2339, 128
    %2360 = vxpose.xlu0.b32.cont [5/16] %v2341, 128
    %2361 = vxpose.xlu0.b32.cont [6/16] %v2343, 128
    %2362 = vxpose.xlu0.b32.cont [7/16] %v2345, 128
    %2363 = vxpose.xlu0.b32.cont [8/16] %v2347, 128
    %2364 = vxpose.xlu0.b32.cont [9/16] 0.0, 128
    %2365 = vxpose.xlu0.b32.cont [10/16] 0.0, 128
    %2366 = vxpose.xlu0.b32.cont [11/16] 0.0, 128
    %2367 = vxpose.xlu0.b32.cont [12/16] 0.0, 128
    %2368 = vxpose.xlu0.b32.cont [13/16] 0.0, 128
    %2369 = vxpose.xlu0.b32.cont [14/16] 0.0, 128
    %2370 = vxpose.xlu0.b32.cont [15/16] 0.0, 128
    %2371 = vxpose.xlu0.b32.end [16/16] 0.0, 128
    %v2372 = vpop.trf.xlu0
    %v2373 = vpop.trf.xlu0
    %v2374 = vpop.trf.xlu0
    %v2375 = vpop.trf.xlu0
    %v2376 = vpop.trf.xlu0
    %v2377 = vpop.trf.xlu0
    %v2378 = vpop.trf.xlu0
    %v2379 = vpop.trf.xlu0
    %v2380 = vpop.trf.xlu0
    %v2381 = vpop.trf.xlu0
    %v2382 = vpop.trf.xlu0
    %v2383 = vpop.trf.xlu0
    %v2384 = vpop.trf.xlu0
    %v2385 = vpop.trf.xlu0
    %v2386 = vpop.trf.xlu0
    %v2387 = vpop.trf.xlu0
    %2392 = vrot.lane.b32.xlu0 %v2372, 64
    %v2393 = vpop.permute.xlu0 %2392
    %2394 = vrot.lane.b32.xlu0 %v2373, 64
    %v2395 = vpop.permute.xlu0 %2394
    %2396 = vrot.lane.b32.xlu0 %v2374, 64
    %v2397 = vpop.permute.xlu0 %2396
    %2398 = vrot.lane.b32.xlu0 %v2375, 64
    %v2399 = vpop.permute.xlu0 %2398
    %v2404 = vsel %vm537, %v2372, %v2393
    %v2405 = vsel %vm537, %v2373, %v2395
    %v2406 = vsel %vm537, %v2374, %v2397
    %v2407 = vsel %vm537, %v2375, %v2399
    %v2408 = vmul.f32 %v2404, %v40
    %v2409 = vmul.f32 %v2404, %v41
    %v2410 = vmul.f32 %v2405, %v42
    %v2411 = vmul.f32 %v2405, %v43
    %v2412 = vmul.f32 %v2406, %v44
    %v2413 = vmul.f32 %v2406, %v45
    %v2414 = vmul.f32 %v2407, %v46
    %v2415 = vmul.f32 %v2407, %v47
    %v2416 = vpack.c.bf16 %v2410, %v2408
    %v2417 = vpack.c.bf16 %v2411, %v2409
    %v2418 = vpack.c.bf16 %v2414, %v2412
    %v2419 = vpack.c.bf16 %v2415, %v2413
    %v2420 = vmul.f32 %v2254, %v587
    %v2421 = vmul.f32 %v2257, %v589
    %v2422 = vmul.f32 %v2262, %v591
    %v2423 = vmul.f32 %v2265, %v593
    %v2424 = vmul.f32 %v2270, %v595
    %v2425 = vmul.f32 %v2273, %v597
    %v2426 = vmul.f32 %v2278, %v599
    %v2427 = vmul.f32 %v2281, %v601
    %v2428 = vmul.f32 %v2254, %v603
    %v2429 = vmul.f32 %v2257, %v605
    %v2430 = vmul.f32 %v2262, %v607
    %v2431 = vmul.f32 %v2265, %v609
    %v2432 = vmul.f32 %v2270, %v611
    %v2433 = vmul.f32 %v2273, %v613
    %v2434 = vmul.f32 %v2278, %v615
    %v2435 = vmul.f32 %v2281, %v617
    %v2436 = vmul.f32 %v2254, %v619
    %v2437 = vmul.f32 %v2257, %v621
    %v2438 = vmul.f32 %v2262, %v623
    %v2439 = vmul.f32 %v2265, %v625
    %v2440 = vmul.f32 %v2270, %v627
    %v2441 = vmul.f32 %v2273, %v629
    %v2442 = vmul.f32 %v2278, %v631
    %v2443 = vmul.f32 %v2281, %v633
    %v2444 = vmul.f32 %v2254, %v635
    %v2445 = vmul.f32 %v2257, %v637
    %v2446 = vmul.f32 %v2262, %v639
    %v2447 = vmul.f32 %v2265, %v641
    %v2448 = vmul.f32 %v2270, %v643
    %v2449 = vmul.f32 %v2273, %v645
    %v2450 = vmul.f32 %v2278, %v647
    %v2451 = vmul.f32 %v2281, %v649
    %v2452 = vpack.c.bf16 %v2421, %v2420
    %v2453 = vpack.c.bf16 %v2423, %v2422
    %v2454 = vpack.c.bf16 %v2425, %v2424
    %v2455 = vpack.c.bf16 %v2427, %v2426
    %v2456 = vpack.c.bf16 %v2429, %v2428
    %v2457 = vpack.c.bf16 %v2431, %v2430
    %v2458 = vpack.c.bf16 %v2433, %v2432
    %v2459 = vpack.c.bf16 %v2435, %v2434
    %v2460 = vpack.c.bf16 %v2437, %v2436
    %v2461 = vpack.c.bf16 %v2439, %v2438
    %v2462 = vpack.c.bf16 %v2441, %v2440
    %v2463 = vpack.c.bf16 %v2443, %v2442
    %v2464 = vpack.c.bf16 %v2445, %v2444
    %v2465 = vpack.c.bf16 %v2447, %v2446
    %v2466 = vpack.c.bf16 %v2449, %v2448
    %v2467 = vpack.c.bf16 %v2451, %v2450
    %v2469 = vsel %vm136, %v2316, 0
    %v2472 = vsel %vm136, %v2317, 0
    %v2475 = vsel %vm136, %v2318, 0
    %v2478 = vsel %vm136, %v2319, 0
    %2480 = vmatprep.subr.bf16.mxu0 0
    %2481 = vmatpush1.bf16.msra.mxu0 0
    %2482 = vmatprep.subr.bf16.mxu0 0
    %2483 = vmatpush1.bf16.msra.mxu0 0
    %2484 = vmatprep.subr.bf16.mxu0 0
    %2485 = vmatpush1.bf16.msra.mxu0 0
    %2486 = vmatprep.subr.bf16.mxu0 0
    %2487 = vmatpush1.bf16.msra.mxu0 0
    %2488 = vmatprep.subr.bf16.mxu0 0
    %2489 = vmatpush1.bf16.msra.mxu0 0
    %2490 = vmatprep.subr.bf16.mxu0 0
    %2491 = vmatpush1.bf16.msra.mxu0 0
    %2492 = vmatprep.subr.bf16.mxu0 %v2419
    %2493 = vmatpush1.bf16.msra.mxu0 %v2418
    %2494 = vmatprep.subr.bf16.mxu0 %v2417
    %2495 = vmatpush1.bf16.msra.mxu0 %v2416
    %2496 = vmatprep.subr.bf16.mxu0 0
    %2497 = vmatpush2.bf16.msra.mxu0 0
    %2498 = vmatprep.subr.bf16.mxu0 0
    %2499 = vmatpush2.bf16.msra.mxu0 0
    %2500 = vmatprep.subr.bf16.mxu0 0
    %2501 = vmatpush2.bf16.msra.mxu0 0
    %2502 = vmatprep.subr.bf16.mxu0 0
    %2503 = vmatpush2.bf16.msra.mxu0 0
    %2504 = vmatprep.subr.bf16.mxu0 0
    %2505 = vmatpush2.bf16.msra.mxu0 0
    %2506 = vmatprep.subr.bf16.mxu0 0
    %2507 = vmatpush2.bf16.msra.mxu0 0
    %2508 = vmatprep.subr.bf16.mxu0 0
    %2509 = vmatpush2.bf16.msra.mxu0 0
    %2510 = vmatprep.subr.bf16.mxu0 0
    %2511 = vmatpush2.bf16.msra.mxu0 0
    %2512 = vmatprep.mubr.bf16.mxu0 0
    %2513 = vmatmul.mubr.bf16.gmra.mxu0 %v2469
    %v2514 = vpop.f32.mrf.mxu0
    %v2515 = vadd.f32 0.0, %v2514
    %v2516 = vpop.f32.mrf.mxu0
    %v2517 = vadd.f32 0.0, %v2516
    %v2518 = vpop.f32.mrf.mxu0
    %v2519 = vadd.f32 0.0, %v2518
    %v2520 = vpop.f32.mrf.mxu0
    %v2521 = vadd.f32 0.0, %v2520
    %2522 = vmatprep.mubr.bf16.mxu0 0
    %2523 = vmatmul.mubr.bf16.gmra.mxu0 %v2472
    %v2524 = vpop.f32.mrf.mxu0
    %v2525 = vadd.f32 0.0, %v2524
    %v2526 = vpop.f32.mrf.mxu0
    %v2527 = vadd.f32 0.0, %v2526
    %v2528 = vpop.f32.mrf.mxu0
    %v2529 = vadd.f32 0.0, %v2528
    %v2530 = vpop.f32.mrf.mxu0
    %v2531 = vadd.f32 0.0, %v2530
    %2532 = vmatprep.mubr.bf16.mxu0 0
    %2533 = vmatmul.mubr.bf16.gmra.mxu0 %v2475
    %v2534 = vpop.f32.mrf.mxu0
    %v2535 = vadd.f32 0.0, %v2534
    %v2536 = vpop.f32.mrf.mxu0
    %v2537 = vadd.f32 0.0, %v2536
    %v2538 = vpop.f32.mrf.mxu0
    %v2539 = vadd.f32 0.0, %v2538
    %v2540 = vpop.f32.mrf.mxu0
    %v2541 = vadd.f32 0.0, %v2540
    %2542 = vmatprep.mubr.bf16.mxu0 0
    %2543 = vmatmul.mubr.bf16.gmra.mxu0 %v2478
    %v2544 = vpop.f32.mrf.mxu0
    %v2545 = vadd.f32 0.0, %v2544
    %v2546 = vpop.f32.mrf.mxu0
    %v2547 = vadd.f32 0.0, %v2546
    %v2548 = vpop.f32.mrf.mxu0
    %v2549 = vadd.f32 0.0, %v2548
    %v2550 = vpop.f32.mrf.mxu0
    %v2551 = vadd.f32 0.0, %v2550
    %2552 = vdwg.mxu0
    %v2553 = vmax.f32 %v2515, %v2517
    %2554 = vmax.xlane.f32.xlu0 %v2553
    %v2555 = vpop.xlane.xlu0 %2554
    %v2556 = vmax.f32 %v2519, %v2521
    %2557 = vmax.xlane.f32.xlu0 %v2556
    %v2558 = vpop.xlane.xlu0 %2557
    %v2559 = vmax.f32 %v2525, %v2527
    %2560 = vmax.xlane.f32.xlu0 %v2559
    %v2561 = vpop.xlane.xlu0 %2560
    %v2562 = vmax.f32 %v2529, %v2531
    %2563 = vmax.xlane.f32.xlu0 %v2562
    %v2564 = vpop.xlane.xlu0 %2563
    %v2565 = vmax.f32 %v2535, %v2537
    %2566 = vmax.xlane.f32.xlu0 %v2565
    %v2567 = vpop.xlane.xlu0 %2566
    %v2568 = vmax.f32 %v2539, %v2541
    %2569 = vmax.xlane.f32.xlu0 %v2568
    %v2570 = vpop.xlane.xlu0 %2569
    %v2571 = vmax.f32 %v2545, %v2547
    %2572 = vmax.xlane.f32.xlu0 %v2571
    %v2573 = vpop.xlane.xlu0 %2572
    %v2574 = vmax.f32 %v2549, %v2551
    %2575 = vmax.xlane.f32.xlu0 %v2574
    %v2576 = vpop.xlane.xlu0 %2575
    %v2577 = vsub.f32 %v2515, %v2555
    %v2578 = vsub.f32 %v2517, %v2555
    %v2579 = vsub.f32 %v2519, %v2558
    %v2580 = vsub.f32 %v2521, %v2558
    %v2581 = vsub.f32 %v2525, %v2561
    %v2582 = vsub.f32 %v2527, %v2561
    %v2583 = vsub.f32 %v2529, %v2564
    %v2584 = vsub.f32 %v2531, %v2564
    %v2585 = vsub.f32 %v2535, %v2567
    %v2586 = vsub.f32 %v2537, %v2567
    %v2587 = vsub.f32 %v2539, %v2570
    %v2588 = vsub.f32 %v2541, %v2570
    %v2589 = vsub.f32 %v2545, %v2573
    %v2590 = vsub.f32 %v2547, %v2573
    %v2591 = vsub.f32 %v2549, %v2576
    %v2592 = vsub.f32 %v2551, %v2576
    %v2593 = vmul.f32 %v2577, 1.442695
    %v2594 = vpow.pop %v2593
    %v2595 = vmul.f32 %v2578, 1.442695
    %v2596 = vpow.pop %v2595
    %v2597 = vmul.f32 %v2579, 1.442695
    %v2598 = vpow.pop %v2597
    %v2599 = vmul.f32 %v2580, 1.442695
    %v2600 = vpow.pop %v2599
    %v2601 = vmul.f32 %v2581, 1.442695
    %v2602 = vpow.pop %v2601
    %v2603 = vmul.f32 %v2582, 1.442695
    %v2604 = vpow.pop %v2603
    %v2605 = vmul.f32 %v2583, 1.442695
    %v2606 = vpow.pop %v2605
    %v2607 = vmul.f32 %v2584, 1.442695
    %v2608 = vpow.pop %v2607
    %v2609 = vmul.f32 %v2585, 1.442695
    %v2610 = vpow.pop %v2609
    %v2611 = vmul.f32 %v2586, 1.442695
    %v2612 = vpow.pop %v2611
    %v2613 = vmul.f32 %v2587, 1.442695
    %v2614 = vpow.pop %v2613
    %v2615 = vmul.f32 %v2588, 1.442695
    %v2616 = vpow.pop %v2615
    %v2617 = vmul.f32 %v2589, 1.442695
    %v2618 = vpow.pop %v2617
    %v2619 = vmul.f32 %v2590, 1.442695
    %v2620 = vpow.pop %v2619
    %v2621 = vmul.f32 %v2591, 1.442695
    %v2622 = vpow.pop %v2621
    %v2623 = vmul.f32 %v2592, 1.442695
    %v2624 = vpow.pop %v2623
    %v2625 = vpack.c.bf16 %v2598, %v2594
    %v2626 = vpack.c.bf16 %v2600, %v2596
    %v2627 = vpack.c.bf16 %v2606, %v2602
    %v2628 = vpack.c.bf16 %v2608, %v2604
    %v2629 = vpack.c.bf16 %v2614, %v2610
    %v2630 = vpack.c.bf16 %v2616, %v2612
    %v2631 = vpack.c.bf16 %v2622, %v2618
    %v2632 = vpack.c.bf16 %v2624, %v2620
    %2633 = vmatprep.subr.bf16.mxu0 0
    %2634 = vmatpush1.bf16.msra.mxu0 %v87
    %2635 = vmatprep.subr.bf16.mxu0 0
    %2636 = vmatpush1.bf16.msra.mxu0 %v86
    %2637 = vmatprep.subr.bf16.mxu0 0
    %2638 = vmatpush1.bf16.msra.mxu0 %v85
    %2639 = vmatprep.subr.bf16.mxu0 0
    %2640 = vmatpush1.bf16.msra.mxu0 %v84
    %2641 = vmatprep.subr.bf16.mxu0 0
    %2642 = vmatpush1.bf16.msra.mxu0 %v83
    %2643 = vmatprep.subr.bf16.mxu0 0
    %2644 = vmatpush1.bf16.msra.mxu0 %v82
    %2645 = vmatprep.subr.bf16.mxu0 0
    %2646 = vmatpush1.bf16.msra.mxu0 %v81
    %2647 = vmatprep.subr.bf16.mxu0 0
    %2648 = vmatpush1.bf16.msra.mxu0 %v80
    %2649 = vmatprep.subr.bf16.mxu0 0
    %2650 = vmatpush2.bf16.msra.mxu0 %v95
    %2651 = vmatprep.subr.bf16.mxu0 0
    %2652 = vmatpush2.bf16.msra.mxu0 %v94
    %2653 = vmatprep.subr.bf16.mxu0 0
    %2654 = vmatpush2.bf16.msra.mxu0 %v93
    %2655 = vmatprep.subr.bf16.mxu0 0
    %2656 = vmatpush2.bf16.msra.mxu0 %v92
    %2657 = vmatprep.subr.bf16.mxu0 0
    %2658 = vmatpush2.bf16.msra.mxu0 %v91
    %2659 = vmatprep.subr.bf16.mxu0 0
    %2660 = vmatpush2.bf16.msra.mxu0 %v90
    %2661 = vmatprep.subr.bf16.mxu0 0
    %2662 = vmatpush2.bf16.msra.mxu0 %v89
    %2663 = vmatprep.subr.bf16.mxu0 0
    %2664 = vmatpush2.bf16.msra.mxu0 %v88
    %2665 = vmatprep.mubr.bf16.mxu0 %v2626
    %2666 = vmatmul.mubr.bf16.gmra.mxu0 %v2625
    %v2667 = vpop.f32.mrf.mxu0
    %v2668 = vadd.f32 0.0, %v2667
    %v2669 = vpop.f32.mrf.mxu0
    %v2670 = vpop.f32.mrf.mxu0
    %v2671 = vadd.f32 0.0, %v2670
    %v2672 = vpop.f32.mrf.mxu0
    %2673 = vmatprep.mubr.bf16.mxu0 %v2628
    %2674 = vmatmul.mubr.bf16.gmra.mxu0 %v2627
    %v2675 = vpop.f32.mrf.mxu0
    %v2676 = vadd.f32 0.0, %v2675
    %v2677 = vpop.f32.mrf.mxu0
    %v2678 = vpop.f32.mrf.mxu0
    %v2679 = vadd.f32 0.0, %v2678
    %v2680 = vpop.f32.mrf.mxu0
    %2681 = vmatprep.mubr.bf16.mxu0 %v2630
    %2682 = vmatmul.mubr.bf16.gmra.mxu0 %v2629
    %v2683 = vpop.f32.mrf.mxu0
    %v2684 = vadd.f32 0.0, %v2683
    %v2685 = vpop.f32.mrf.mxu0
    %v2686 = vpop.f32.mrf.mxu0
    %v2687 = vadd.f32 0.0, %v2686
    %v2688 = vpop.f32.mrf.mxu0
    %2689 = vmatprep.mubr.bf16.mxu0 %v2632
    %2690 = vmatmul.mubr.bf16.gmra.mxu0 %v2631
    %v2691 = vpop.f32.mrf.mxu0
    %v2692 = vadd.f32 0.0, %v2691
    %v2693 = vpop.f32.mrf.mxu0
    %v2694 = vpop.f32.mrf.mxu0
    %v2695 = vadd.f32 0.0, %v2694
    %v2696 = vpop.f32.mrf.mxu0
    %2697 = vdwg.mxu0
    %v2698 = vmax.f32 %v2668, 1e-30
    %v2699 = vmax.f32 %v2671, 1e-30
    %v2700 = vmax.f32 %v2676, 1e-30
    %v2701 = vmax.f32 %v2679, 1e-30
    %v2702 = vmax.f32 %v2684, 1e-30
    %v2703 = vmax.f32 %v2687, 1e-30
    %v2704 = vmax.f32 %v2692, 1e-30
    %v2705 = vmax.f32 %v2695, 1e-30
    %2722 = vrot.lane.b32.xlu0 %v2452, 64
    %v2723 = vpop.permute.xlu0 %2722
    %2724 = vrot.lane.b32.xlu0 %v2453, 64
    %v2725 = vpop.permute.xlu0 %2724
    %2726 = vrot.lane.b32.xlu0 %v2454, 64
    %v2727 = vpop.permute.xlu0 %2726
    %2728 = vrot.lane.b32.xlu0 %v2455, 64
    %v2729 = vpop.permute.xlu0 %2728
    %2730 = vrot.lane.b32.xlu0 %v2456, 64
    %v2731 = vpop.permute.xlu0 %2730
    %2732 = vrot.lane.b32.xlu0 %v2457, 64
    %v2733 = vpop.permute.xlu0 %2732
    %2734 = vrot.lane.b32.xlu0 %v2458, 64
    %v2735 = vpop.permute.xlu0 %2734
    %2736 = vrot.lane.b32.xlu0 %v2459, 64
    %v2737 = vpop.permute.xlu0 %2736
    %2738 = vrot.lane.b32.xlu0 %v2460, 64
    %v2739 = vpop.permute.xlu0 %2738
    %2740 = vrot.lane.b32.xlu0 %v2461, 64
    %v2741 = vpop.permute.xlu0 %2740
    %2742 = vrot.lane.b32.xlu0 %v2462, 64
    %v2743 = vpop.permute.xlu0 %2742
    %2744 = vrot.lane.b32.xlu0 %v2463, 64
    %v2745 = vpop.permute.xlu0 %2744
    %2746 = vrot.lane.b32.xlu0 %v2464, 64
    %v2747 = vpop.permute.xlu0 %2746
    %2748 = vrot.lane.b32.xlu0 %v2465, 64
    %v2749 = vpop.permute.xlu0 %2748
    %2750 = vrot.lane.b32.xlu0 %v2466, 64
    %v2751 = vpop.permute.xlu0 %2750
    %2752 = vrot.lane.b32.xlu0 %v2467, 64
    %v2753 = vpop.permute.xlu0 %2752
    %2770 = vmatprep.subr.bf16.mxu0 0
    %2771 = vmatpush1.bf16.msra.mxu0 %v2737
    %2772 = vmatprep.subr.bf16.mxu0 0
    %2773 = vmatpush1.bf16.msra.mxu0 %v2735
    %2774 = vmatprep.subr.bf16.mxu0 0
    %2775 = vmatpush1.bf16.msra.mxu0 %v2733
    %2776 = vmatprep.subr.bf16.mxu0 0
    %2777 = vmatpush1.bf16.msra.mxu0 %v2731
    %2778 = vmatprep.subr.bf16.mxu0 0
    %2779 = vmatpush1.bf16.msra.mxu0 %v2729
    %2780 = vmatprep.subr.bf16.mxu0 0
    %2781 = vmatpush1.bf16.msra.mxu0 %v2727
    %2782 = vmatprep.subr.bf16.mxu0 0
    %2783 = vmatpush1.bf16.msra.mxu0 %v2725
    %2784 = vmatprep.subr.bf16.mxu0 0
    %2785 = vmatpush1.bf16.msra.mxu0 %v2723
    %2786 = vmatprep.subr.bf16.mxu0 0
    %2787 = vmatpush2.bf16.msra.mxu0 %v2753
    %2788 = vmatprep.subr.bf16.mxu0 0
    %2789 = vmatpush2.bf16.msra.mxu0 %v2751
    %2790 = vmatprep.subr.bf16.mxu0 0
    %2791 = vmatpush2.bf16.msra.mxu0 %v2749
    %2792 = vmatprep.subr.bf16.mxu0 0
    %2793 = vmatpush2.bf16.msra.mxu0 %v2747
    %2794 = vmatprep.subr.bf16.mxu0 0
    %2795 = vmatpush2.bf16.msra.mxu0 %v2745
    %2796 = vmatprep.subr.bf16.mxu0 0
    %2797 = vmatpush2.bf16.msra.mxu0 %v2743
    %2798 = vmatprep.subr.bf16.mxu0 0
    %2799 = vmatpush2.bf16.msra.mxu0 %v2741
    %2800 = vmatprep.subr.bf16.mxu0 0
    %2801 = vmatpush2.bf16.msra.mxu0 %v2739
    %2802 = vmatprep.mubr.bf16.mxu0 %v2626
    %2803 = vmatmul.mubr.bf16.gmra.mxu0 %v2625
    %v2804 = vpop.f32.mrf.mxu0
    %v2805 = vadd.f32 0.0, %v2804
    %v2806 = vpop.f32.mrf.mxu0
    %v2807 = vpop.f32.mrf.mxu0
    %v2808 = vadd.f32 0.0, %v2807
    %v2809 = vpop.f32.mrf.mxu0
    %2810 = vmatprep.mubr.bf16.mxu0 %v2628
    %2811 = vmatmul.mubr.bf16.gmra.mxu0 %v2627
    %v2812 = vpop.f32.mrf.mxu0
    %v2813 = vadd.f32 0.0, %v2812
    %v2814 = vpop.f32.mrf.mxu0
    %v2815 = vpop.f32.mrf.mxu0
    %v2816 = vadd.f32 0.0, %v2815
    %v2817 = vpop.f32.mrf.mxu0
    %2818 = vmatprep.mubr.bf16.mxu0 %v2630
    %2819 = vmatmul.mubr.bf16.gmra.mxu0 %v2629
    %v2820 = vpop.f32.mrf.mxu0
    %v2821 = vadd.f32 0.0, %v2820
    %v2822 = vpop.f32.mrf.mxu0
    %v2823 = vpop.f32.mrf.mxu0
    %v2824 = vadd.f32 0.0, %v2823
    %v2825 = vpop.f32.mrf.mxu0
    %2826 = vmatprep.mubr.bf16.mxu0 %v2632
    %2827 = vmatmul.mubr.bf16.gmra.mxu0 %v2631
    %v2828 = vpop.f32.mrf.mxu0
    %v2829 = vadd.f32 0.0, %v2828
    %v2830 = vpop.f32.mrf.mxu0
    %v2831 = vpop.f32.mrf.mxu0
    %v2832 = vadd.f32 0.0, %v2831
    %v2833 = vpop.f32.mrf.mxu0
    %2834 = vdwg.mxu0
    %v2835 = vrcp.pop %v2698
    %v2836 = vrcp.pop %v2699
    %v2837 = vrcp.pop %v2700
    %v2838 = vrcp.pop %v2701
    %v2839 = vrcp.pop %v2702
    %v2840 = vrcp.pop %v2703
    %v2841 = vrcp.pop %v2704
    %v2842 = vrcp.pop %v2705
    %v2843 = vmul.f32 %v2805, %v2835
    %v2844 = vmul.f32 %v2808, %v2836
    %v2845 = vmul.f32 %v2813, %v2837
    %v2846 = vmul.f32 %v2816, %v2838
    %v2847 = vmul.f32 %v2821, %v2839
    %v2848 = vmul.f32 %v2824, %v2840
    %v2849 = vmul.f32 %v2829, %v2841
    %v2850 = vmul.f32 %v2832, %v2842
    %2851 = vst.msk [vmem:[#allocation2] sm:$0xff] %vm136, %v2843
    %2852 = vst.msk [vmem:[#allocation2 + $0x8] sm:$0xff] %vm136, %v2844
    %2853 = vst.msk [vmem:[#allocation2 + $0x10] sm:$0xff] %vm136, %v2845
    %2854 = vst.msk [vmem:[#allocation2 + $0x18] sm:$0xff] %vm136, %v2846
    %2855 = vst.msk [vmem:[#allocation2 + $0x20] sm:$0xff] %vm136, %v2847
    %2856 = vst.msk [vmem:[#allocation2 + $0x28] sm:$0xff] %vm136, %v2848
    %2857 = vst.msk [vmem:[#allocation2 + $0x30] sm:$0xff] %vm136, %v2849
    %2858 = vst.msk [vmem:[#allocation2 + $0x38] sm:$0xff] %vm136, %v2850
    %2867 = vrot.lane.b32.xlu0 %v2286, 96
    %v2868 = vpop.permute.xlu0 %2867
    %2869 = vrot.lane.b32.xlu0 %v2289, 96
    %v2870 = vpop.permute.xlu0 %2869
    %2871 = vrot.lane.b32.xlu0 %v2294, 96
    %v2872 = vpop.permute.xlu0 %2871
    %2873 = vrot.lane.b32.xlu0 %v2297, 96
    %v2874 = vpop.permute.xlu0 %2873
    %2875 = vrot.lane.b32.xlu0 %v2302, 96
    %v2876 = vpop.permute.xlu0 %2875
    %2877 = vrot.lane.b32.xlu0 %v2305, 96
    %v2878 = vpop.permute.xlu0 %2877
    %2879 = vrot.lane.b32.xlu0 %v2310, 96
    %v2880 = vpop.permute.xlu0 %2879
    %2881 = vrot.lane.b32.xlu0 %v2313, 96
    %v2882 = vpop.permute.xlu0 %2881
    %2891 = vxpose.xlu0.b32.start [1/16] %v2868, 128
    %2892 = vxpose.xlu0.b32.cont [2/16] %v2870, 128
    %2893 = vxpose.xlu0.b32.cont [3/16] %v2872, 128
    %2894 = vxpose.xlu0.b32.cont [4/16] %v2874, 128
    %2895 = vxpose.xlu0.b32.cont [5/16] %v2876, 128
    %2896 = vxpose.xlu0.b32.cont [6/16] %v2878, 128
    %2897 = vxpose.xlu0.b32.cont [7/16] %v2880, 128
    %2898 = vxpose.xlu0.b32.cont [8/16] %v2882, 128
    %2899 = vxpose.xlu0.b32.cont [9/16] 0.0, 128
    %2900 = vxpose.xlu0.b32.cont [10/16] 0.0, 128
    %2901 = vxpose.xlu0.b32.cont [11/16] 0.0, 128
    %2902 = vxpose.xlu0.b32.cont [12/16] 0.0, 128
    %2903 = vxpose.xlu0.b32.cont [13/16] 0.0, 128
    %2904 = vxpose.xlu0.b32.cont [14/16] 0.0, 128
    %2905 = vxpose.xlu0.b32.cont [15/16] 0.0, 128
    %2906 = vxpose.xlu0.b32.end [16/16] 0.0, 128
    %v2907 = vpop.trf.xlu0
    %v2908 = vpop.trf.xlu0
    %v2909 = vpop.trf.xlu0
    %v2910 = vpop.trf.xlu0
    %v2911 = vpop.trf.xlu0
    %v2912 = vpop.trf.xlu0
    %v2913 = vpop.trf.xlu0
    %v2914 = vpop.trf.xlu0
    %v2915 = vpop.trf.xlu0
    %v2916 = vpop.trf.xlu0
    %v2917 = vpop.trf.xlu0
    %v2918 = vpop.trf.xlu0
    %v2919 = vpop.trf.xlu0
    %v2920 = vpop.trf.xlu0
    %v2921 = vpop.trf.xlu0
    %v2922 = vpop.trf.xlu0
    %2927 = vrot.lane.b32.xlu0 %v2907, 64
    %v2928 = vpop.permute.xlu0 %2927
    %2929 = vrot.lane.b32.xlu0 %v2908, 64
    %v2930 = vpop.permute.xlu0 %2929
    %2931 = vrot.lane.b32.xlu0 %v2909, 64
    %v2932 = vpop.permute.xlu0 %2931
    %2933 = vrot.lane.b32.xlu0 %v2910, 64
    %v2934 = vpop.permute.xlu0 %2933
    %v2939 = vsel %vm537, %v2907, %v2928
    %v2940 = vsel %vm537, %v2908, %v2930
    %v2941 = vsel %vm537, %v2909, %v2932
    %v2942 = vsel %vm537, %v2910, %v2934
    %v2943 = vmul.f32 %v2939, %v40
    %v2944 = vmul.f32 %v2939, %v41
    %v2945 = vmul.f32 %v2940, %v42
    %v2946 = vmul.f32 %v2940, %v43
    %v2947 = vmul.f32 %v2941, %v44
    %v2948 = vmul.f32 %v2941, %v45
    %v2949 = vmul.f32 %v2942, %v46
    %v2950 = vmul.f32 %v2942, %v47
    %v2951 = vpack.c.bf16 %v2945, %v2943
    %v2952 = vpack.c.bf16 %v2946, %v2944
    %v2953 = vpack.c.bf16 %v2949, %v2947
    %v2954 = vpack.c.bf16 %v2950, %v2948
    %v2955 = vmul.f32 %v2286, %v587
    %v2956 = vmul.f32 %v2289, %v589
    %v2957 = vmul.f32 %v2294, %v591
    %v2958 = vmul.f32 %v2297, %v593
    %v2959 = vmul.f32 %v2302, %v595
    %v2960 = vmul.f32 %v2305, %v597
    %v2961 = vmul.f32 %v2310, %v599
    %v2962 = vmul.f32 %v2313, %v601
    %v2963 = vmul.f32 %v2286, %v603
    %v2964 = vmul.f32 %v2289, %v605
    %v2965 = vmul.f32 %v2294, %v607
    %v2966 = vmul.f32 %v2297, %v609
    %v2967 = vmul.f32 %v2302, %v611
    %v2968 = vmul.f32 %v2305, %v613
    %v2969 = vmul.f32 %v2310, %v615
    %v2970 = vmul.f32 %v2313, %v617
    %v2971 = vmul.f32 %v2286, %v619
    %v2972 = vmul.f32 %v2289, %v621
    %v2973 = vmul.f32 %v2294, %v623
    %v2974 = vmul.f32 %v2297, %v625
    %v2975 = vmul.f32 %v2302, %v627
    %v2976 = vmul.f32 %v2305, %v629
    %v2977 = vmul.f32 %v2310, %v631
    %v2978 = vmul.f32 %v2313, %v633
    %v2979 = vmul.f32 %v2286, %v635
    %v2980 = vmul.f32 %v2289, %v637
    %v2981 = vmul.f32 %v2294, %v639
    %v2982 = vmul.f32 %v2297, %v641
    %v2983 = vmul.f32 %v2302, %v643
    %v2984 = vmul.f32 %v2305, %v645
    %v2985 = vmul.f32 %v2310, %v647
    %v2986 = vmul.f32 %v2313, %v649
    %v2987 = vpack.c.bf16 %v2956, %v2955
    %v2988 = vpack.c.bf16 %v2958, %v2957
    %v2989 = vpack.c.bf16 %v2960, %v2959
    %v2990 = vpack.c.bf16 %v2962, %v2961
    %v2991 = vpack.c.bf16 %v2964, %v2963
    %v2992 = vpack.c.bf16 %v2966, %v2965
    %v2993 = vpack.c.bf16 %v2968, %v2967
    %v2994 = vpack.c.bf16 %v2970, %v2969
    %v2995 = vpack.c.bf16 %v2972, %v2971
    %v2996 = vpack.c.bf16 %v2974, %v2973
    %v2997 = vpack.c.bf16 %v2976, %v2975
    %v2998 = vpack.c.bf16 %v2978, %v2977
    %v2999 = vpack.c.bf16 %v2980, %v2979
    %v3000 = vpack.c.bf16 %v2982, %v2981
    %v3001 = vpack.c.bf16 %v2984, %v2983
    %v3002 = vpack.c.bf16 %v2986, %v2985
    %v3004 = vsel %vm136, %v2320, 0
    %v3007 = vsel %vm136, %v2321, 0
    %v3010 = vsel %vm136, %v2322, 0
    %v3013 = vsel %vm136, %v2323, 0
    %3015 = vmatprep.subr.bf16.mxu0 0
    %3016 = vmatpush1.bf16.msra.mxu0 0
    %3017 = vmatprep.subr.bf16.mxu0 0
    %3018 = vmatpush1.bf16.msra.mxu0 0
    %3019 = vmatprep.subr.bf16.mxu0 0
    %3020 = vmatpush1.bf16.msra.mxu0 0
    %3021 = vmatprep.subr.bf16.mxu0 0
    %3022 = vmatpush1.bf16.msra.mxu0 0
    %3023 = vmatprep.subr.bf16.mxu0 0
    %3024 = vmatpush1.bf16.msra.mxu0 0
    %3025 = vmatprep.subr.bf16.mxu0 0
    %3026 = vmatpush1.bf16.msra.mxu0 0
    %3027 = vmatprep.subr.bf16.mxu0 %v2954
    %3028 = vmatpush1.bf16.msra.mxu0 %v2953
    %3029 = vmatprep.subr.bf16.mxu0 %v2952
    %3030 = vmatpush1.bf16.msra.mxu0 %v2951
    %3031 = vmatprep.subr.bf16.mxu0 0
    %3032 = vmatpush2.bf16.msra.mxu0 0
    %3033 = vmatprep.subr.bf16.mxu0 0
    %3034 = vmatpush2.bf16.msra.mxu0 0
    %3035 = vmatprep.subr.bf16.mxu0 0
    %3036 = vmatpush2.bf16.msra.mxu0 0
    %3037 = vmatprep.subr.bf16.mxu0 0
    %3038 = vmatpush2.bf16.msra.mxu0 0
    %3039 = vmatprep.subr.bf16.mxu0 0
    %3040 = vmatpush2.bf16.msra.mxu0 0
    %3041 = vmatprep.subr.bf16.mxu0 0
    %3042 = vmatpush2.bf16.msra.mxu0 0
    %3043 = vmatprep.subr.bf16.mxu0 0
    %3044 = vmatpush2.bf16.msra.mxu0 0
    %3045 = vmatprep.subr.bf16.mxu0 0
    %3046 = vmatpush2.bf16.msra.mxu0 0
    %3047 = vmatprep.mubr.bf16.mxu0 0
    %3048 = vmatmul.mubr.bf16.gmra.mxu0 %v3004
    %v3049 = vpop.f32.mrf.mxu0
    %v3050 = vadd.f32 0.0, %v3049
    %v3051 = vpop.f32.mrf.mxu0
    %v3052 = vadd.f32 0.0, %v3051
    %v3053 = vpop.f32.mrf.mxu0
    %v3054 = vadd.f32 0.0, %v3053
    %v3055 = vpop.f32.mrf.mxu0
    %v3056 = vadd.f32 0.0, %v3055
    %3057 = vmatprep.mubr.bf16.mxu0 0
    %3058 = vmatmul.mubr.bf16.gmra.mxu0 %v3007
    %v3059 = vpop.f32.mrf.mxu0
    %v3060 = vadd.f32 0.0, %v3059
    %v3061 = vpop.f32.mrf.mxu0
    %v3062 = vadd.f32 0.0, %v3061
    %v3063 = vpop.f32.mrf.mxu0
    %v3064 = vadd.f32 0.0, %v3063
    %v3065 = vpop.f32.mrf.mxu0
    %v3066 = vadd.f32 0.0, %v3065
    %3067 = vmatprep.mubr.bf16.mxu0 0
    %3068 = vmatmul.mubr.bf16.gmra.mxu0 %v3010
    %v3069 = vpop.f32.mrf.mxu0
    %v3070 = vadd.f32 0.0, %v3069
    %v3071 = vpop.f32.mrf.mxu0
    %v3072 = vadd.f32 0.0, %v3071
    %v3073 = vpop.f32.mrf.mxu0
    %v3074 = vadd.f32 0.0, %v3073
    %v3075 = vpop.f32.mrf.mxu0
    %v3076 = vadd.f32 0.0, %v3075
    %3077 = vmatprep.mubr.bf16.mxu0 0
    %3078 = vmatmul.mubr.bf16.gmra.mxu0 %v3013
    %v3079 = vpop.f32.mrf.mxu0
    %v3080 = vadd.f32 0.0, %v3079
    %v3081 = vpop.f32.mrf.mxu0
    %v3082 = vadd.f32 0.0, %v3081
    %v3083 = vpop.f32.mrf.mxu0
    %v3084 = vadd.f32 0.0, %v3083
    %v3085 = vpop.f32.mrf.mxu0
    %v3086 = vadd.f32 0.0, %v3085
    %3087 = vdwg.mxu0
    %v3088 = vmax.f32 %v3050, %v3052
    %3089 = vmax.xlane.f32.xlu0 %v3088
    %v3090 = vpop.xlane.xlu0 %3089
    %v3091 = vmax.f32 %v3054, %v3056
    %3092 = vmax.xlane.f32.xlu0 %v3091
    %v3093 = vpop.xlane.xlu0 %3092
    %v3094 = vmax.f32 %v3060, %v3062
    %3095 = vmax.xlane.f32.xlu0 %v3094
    %v3096 = vpop.xlane.xlu0 %3095
    %v3097 = vmax.f32 %v3064, %v3066
    %3098 = vmax.xlane.f32.xlu0 %v3097
    %v3099 = vpop.xlane.xlu0 %3098
    %v3100 = vmax.f32 %v3070, %v3072
    %3101 = vmax.xlane.f32.xlu0 %v3100
    %v3102 = vpop.xlane.xlu0 %3101
    %v3103 = vmax.f32 %v3074, %v3076
    %3104 = vmax.xlane.f32.xlu0 %v3103
    %v3105 = vpop.xlane.xlu0 %3104
    %v3106 = vmax.f32 %v3080, %v3082
    %3107 = vmax.xlane.f32.xlu0 %v3106
    %v3108 = vpop.xlane.xlu0 %3107
    %v3109 = vmax.f32 %v3084, %v3086
    %3110 = vmax.xlane.f32.xlu0 %v3109
    %v3111 = vpop.xlane.xlu0 %3110
    %v3112 = vsub.f32 %v3050, %v3090
    %v3113 = vsub.f32 %v3052, %v3090
    %v3114 = vsub.f32 %v3054, %v3093
    %v3115 = vsub.f32 %v3056, %v3093
    %v3116 = vsub.f32 %v3060, %v3096
    %v3117 = vsub.f32 %v3062, %v3096
    %v3118 = vsub.f32 %v3064, %v3099
    %v3119 = vsub.f32 %v3066, %v3099
    %v3120 = vsub.f32 %v3070, %v3102
    %v3121 = vsub.f32 %v3072, %v3102
    %v3122 = vsub.f32 %v3074, %v3105
    %v3123 = vsub.f32 %v3076, %v3105
    %v3124 = vsub.f32 %v3080, %v3108
    %v3125 = vsub.f32 %v3082, %v3108
    %v3126 = vsub.f32 %v3084, %v3111
    %v3127 = vsub.f32 %v3086, %v3111
    %v3128 = vmul.f32 %v3112, 1.442695
    %v3129 = vpow.pop %v3128
    %v3130 = vmul.f32 %v3113, 1.442695
    %v3131 = vpow.pop %v3130
    %v3132 = vmul.f32 %v3114, 1.442695
    %v3133 = vpow.pop %v3132
    %v3134 = vmul.f32 %v3115, 1.442695
    %v3135 = vpow.pop %v3134
    %v3136 = vmul.f32 %v3116, 1.442695
    %v3137 = vpow.pop %v3136
    %v3138 = vmul.f32 %v3117, 1.442695
    %v3139 = vpow.pop %v3138
    %v3140 = vmul.f32 %v3118, 1.442695
    %v3141 = vpow.pop %v3140
    %v3142 = vmul.f32 %v3119, 1.442695
    %v3143 = vpow.pop %v3142
    %v3144 = vmul.f32 %v3120, 1.442695
    %v3145 = vpow.pop %v3144
    %v3146 = vmul.f32 %v3121, 1.442695
    %v3147 = vpow.pop %v3146
    %v3148 = vmul.f32 %v3122, 1.442695
    %v3149 = vpow.pop %v3148
    %v3150 = vmul.f32 %v3123, 1.442695
    %v3151 = vpow.pop %v3150
    %v3152 = vmul.f32 %v3124, 1.442695
    %v3153 = vpow.pop %v3152
    %v3154 = vmul.f32 %v3125, 1.442695
    %v3155 = vpow.pop %v3154
    %v3156 = vmul.f32 %v3126, 1.442695
    %v3157 = vpow.pop %v3156
    %v3158 = vmul.f32 %v3127, 1.442695
    %v3159 = vpow.pop %v3158
    %v3160 = vpack.c.bf16 %v3133, %v3129
    %v3161 = vpack.c.bf16 %v3135, %v3131
    %v3162 = vpack.c.bf16 %v3141, %v3137
    %v3163 = vpack.c.bf16 %v3143, %v3139
    %v3164 = vpack.c.bf16 %v3149, %v3145
    %v3165 = vpack.c.bf16 %v3151, %v3147
    %v3166 = vpack.c.bf16 %v3157, %v3153
    %v3167 = vpack.c.bf16 %v3159, %v3155
    %3168 = vmatprep.subr.bf16.mxu0 0
    %3169 = vmatpush1.bf16.msra.mxu0 %v87
    %3170 = vmatprep.subr.bf16.mxu0 0
    %3171 = vmatpush1.bf16.msra.mxu0 %v86
    %3172 = vmatprep.subr.bf16.mxu0 0
    %3173 = vmatpush1.bf16.msra.mxu0 %v85
    %3174 = vmatprep.subr.bf16.mxu0 0
    %3175 = vmatpush1.bf16.msra.mxu0 %v84
    %3176 = vmatprep.subr.bf16.mxu0 0
    %3177 = vmatpush1.bf16.msra.mxu0 %v83
    %3178 = vmatprep.subr.bf16.mxu0 0
    %3179 = vmatpush1.bf16.msra.mxu0 %v82
    %3180 = vmatprep.subr.bf16.mxu0 0
    %3181 = vmatpush1.bf16.msra.mxu0 %v81
    %3182 = vmatprep.subr.bf16.mxu0 0
    %3183 = vmatpush1.bf16.msra.mxu0 %v80
    %3184 = vmatprep.subr.bf16.mxu0 0
    %3185 = vmatpush2.bf16.msra.mxu0 %v95
    %3186 = vmatprep.subr.bf16.mxu0 0
    %3187 = vmatpush2.bf16.msra.mxu0 %v94
    %3188 = vmatprep.subr.bf16.mxu0 0
    %3189 = vmatpush2.bf16.msra.mxu0 %v93
    %3190 = vmatprep.subr.bf16.mxu0 0
    %3191 = vmatpush2.bf16.msra.mxu0 %v92
    %3192 = vmatprep.subr.bf16.mxu0 0
    %3193 = vmatpush2.bf16.msra.mxu0 %v91
    %3194 = vmatprep.subr.bf16.mxu0 0
    %3195 = vmatpush2.bf16.msra.mxu0 %v90
    %3196 = vmatprep.subr.bf16.mxu0 0
    %3197 = vmatpush2.bf16.msra.mxu0 %v89
    %3198 = vmatprep.subr.bf16.mxu0 0
    %3199 = vmatpush2.bf16.msra.mxu0 %v88
    %3200 = vmatprep.mubr.bf16.mxu0 %v3161
    %3201 = vmatmul.mubr.bf16.gmra.mxu0 %v3160
    %v3202 = vpop.f32.mrf.mxu0
    %v3203 = vadd.f32 0.0, %v3202
    %v3204 = vpop.f32.mrf.mxu0
    %v3205 = vpop.f32.mrf.mxu0
    %v3206 = vadd.f32 0.0, %v3205
    %v3207 = vpop.f32.mrf.mxu0
    %3208 = vmatprep.mubr.bf16.mxu0 %v3163
    %3209 = vmatmul.mubr.bf16.gmra.mxu0 %v3162
    %v3210 = vpop.f32.mrf.mxu0
    %v3211 = vadd.f32 0.0, %v3210
    %v3212 = vpop.f32.mrf.mxu0
    %v3213 = vpop.f32.mrf.mxu0
    %v3214 = vadd.f32 0.0, %v3213
    %v3215 = vpop.f32.mrf.mxu0
    %3216 = vmatprep.mubr.bf16.mxu0 %v3165
    %3217 = vmatmul.mubr.bf16.gmra.mxu0 %v3164
    %v3218 = vpop.f32.mrf.mxu0
    %v3219 = vadd.f32 0.0, %v3218
    %v3220 = vpop.f32.mrf.mxu0
    %v3221 = vpop.f32.mrf.mxu0
    %v3222 = vadd.f32 0.0, %v3221
    %v3223 = vpop.f32.mrf.mxu0
    %3224 = vmatprep.mubr.bf16.mxu0 %v3167
    %3225 = vmatmul.mubr.bf16.gmra.mxu0 %v3166
    %v3226 = vpop.f32.mrf.mxu0
    %v3227 = vadd.f32 0.0, %v3226
    %v3228 = vpop.f32.mrf.mxu0
    %v3229 = vpop.f32.mrf.mxu0
    %v3230 = vadd.f32 0.0, %v3229
    %v3231 = vpop.f32.mrf.mxu0
    %3232 = vdwg.mxu0
    %v3233 = vmax.f32 %v3203, 1e-30
    %v3234 = vmax.f32 %v3206, 1e-30
    %v3235 = vmax.f32 %v3211, 1e-30
    %v3236 = vmax.f32 %v3214, 1e-30
    %v3237 = vmax.f32 %v3219, 1e-30
    %v3238 = vmax.f32 %v3222, 1e-30
    %v3239 = vmax.f32 %v3227, 1e-30
    %v3240 = vmax.f32 %v3230, 1e-30
    %3257 = vrot.lane.b32.xlu0 %v2987, 64
    %v3258 = vpop.permute.xlu0 %3257
    %3259 = vrot.lane.b32.xlu0 %v2988, 64
    %v3260 = vpop.permute.xlu0 %3259
    %3261 = vrot.lane.b32.xlu0 %v2989, 64
    %v3262 = vpop.permute.xlu0 %3261
    %3263 = vrot.lane.b32.xlu0 %v2990, 64
    %v3264 = vpop.permute.xlu0 %3263
    %3265 = vrot.lane.b32.xlu0 %v2991, 64
    %v3266 = vpop.permute.xlu0 %3265
    %3267 = vrot.lane.b32.xlu0 %v2992, 64
    %v3268 = vpop.permute.xlu0 %3267
    %3269 = vrot.lane.b32.xlu0 %v2993, 64
    %v3270 = vpop.permute.xlu0 %3269
    %3271 = vrot.lane.b32.xlu0 %v2994, 64
    %v3272 = vpop.permute.xlu0 %3271
    %3273 = vrot.lane.b32.xlu0 %v2995, 64
    %v3274 = vpop.permute.xlu0 %3273
    %3275 = vrot.lane.b32.xlu0 %v2996, 64
    %v3276 = vpop.permute.xlu0 %3275
    %3277 = vrot.lane.b32.xlu0 %v2997, 64
    %v3278 = vpop.permute.xlu0 %3277
    %3279 = vrot.lane.b32.xlu0 %v2998, 64
    %v3280 = vpop.permute.xlu0 %3279
    %3281 = vrot.lane.b32.xlu0 %v2999, 64
    %v3282 = vpop.permute.xlu0 %3281
    %3283 = vrot.lane.b32.xlu0 %v3000, 64
    %v3284 = vpop.permute.xlu0 %3283
    %3285 = vrot.lane.b32.xlu0 %v3001, 64
    %v3286 = vpop.permute.xlu0 %3285
    %3287 = vrot.lane.b32.xlu0 %v3002, 64
    %v3288 = vpop.permute.xlu0 %3287
    %3305 = vmatprep.subr.bf16.mxu0 0
    %3306 = vmatpush1.bf16.msra.mxu0 %v3272
    %3307 = vmatprep.subr.bf16.mxu0 0
    %3308 = vmatpush1.bf16.msra.mxu0 %v3270
    %3309 = vmatprep.subr.bf16.mxu0 0
    %3310 = vmatpush1.bf16.msra.mxu0 %v3268
    %3311 = vmatprep.subr.bf16.mxu0 0
    %3312 = vmatpush1.bf16.msra.mxu0 %v3266
    %3313 = vmatprep.subr.bf16.mxu0 0
    %3314 = vmatpush1.bf16.msra.mxu0 %v3264
    %3315 = vmatprep.subr.bf16.mxu0 0
    %3316 = vmatpush1.bf16.msra.mxu0 %v3262
    %3317 = vmatprep.subr.bf16.mxu0 0
    %3318 = vmatpush1.bf16.msra.mxu0 %v3260
    %3319 = vmatprep.subr.bf16.mxu0 0
    %3320 = vmatpush1.bf16.msra.mxu0 %v3258
    %3321 = vmatprep.subr.bf16.mxu0 0
    %3322 = vmatpush2.bf16.msra.mxu0 %v3288
    %3323 = vmatprep.subr.bf16.mxu0 0
    %3324 = vmatpush2.bf16.msra.mxu0 %v3286
    %3325 = vmatprep.subr.bf16.mxu0 0
    %3326 = vmatpush2.bf16.msra.mxu0 %v3284
    %3327 = vmatprep.subr.bf16.mxu0 0
    %3328 = vmatpush2.bf16.msra.mxu0 %v3282
    %3329 = vmatprep.subr.bf16.mxu0 0
    %3330 = vmatpush2.bf16.msra.mxu0 %v3280
    %3331 = vmatprep.subr.bf16.mxu0 0
    %3332 = vmatpush2.bf16.msra.mxu0 %v3278
    %3333 = vmatprep.subr.bf16.mxu0 0
    %3334 = vmatpush2.bf16.msra.mxu0 %v3276
    %3335 = vmatprep.subr.bf16.mxu0 0
    %3336 = vmatpush2.bf16.msra.mxu0 %v3274
    %3337 = vmatprep.mubr.bf16.mxu0 %v3161
    %3338 = vmatmul.mubr.bf16.gmra.mxu0 %v3160
    %v3339 = vpop.f32.mrf.mxu0
    %v3340 = vadd.f32 0.0, %v3339
    %v3341 = vpop.f32.mrf.mxu0
    %v3342 = vpop.f32.mrf.mxu0
    %v3343 = vadd.f32 0.0, %v3342
    %v3344 = vpop.f32.mrf.mxu0
    %3345 = vmatprep.mubr.bf16.mxu0 %v3163
    %3346 = vmatmul.mubr.bf16.gmra.mxu0 %v3162
    %v3347 = vpop.f32.mrf.mxu0
    %v3348 = vadd.f32 0.0, %v3347
    %v3349 = vpop.f32.mrf.mxu0
    %v3350 = vpop.f32.mrf.mxu0
    %v3351 = vadd.f32 0.0, %v3350
    %v3352 = vpop.f32.mrf.mxu0
    %3353 = vmatprep.mubr.bf16.mxu0 %v3165
    %3354 = vmatmul.mubr.bf16.gmra.mxu0 %v3164
    %v3355 = vpop.f32.mrf.mxu0
    %v3356 = vadd.f32 0.0, %v3355
    %v3357 = vpop.f32.mrf.mxu0
    %v3358 = vpop.f32.mrf.mxu0
    %v3359 = vadd.f32 0.0, %v3358
    %v3360 = vpop.f32.mrf.mxu0
    %3361 = vmatprep.mubr.bf16.mxu0 %v3167
    %3362 = vmatmul.mubr.bf16.gmra.mxu0 %v3166
    %v3363 = vpop.f32.mrf.mxu0
    %v3364 = vadd.f32 0.0, %v3363
    %v3365 = vpop.f32.mrf.mxu0
    %v3366 = vpop.f32.mrf.mxu0
    %v3367 = vadd.f32 0.0, %v3366
    %v3368 = vpop.f32.mrf.mxu0
    %3369 = vdwg.mxu0
    %v3370 = vrcp.pop %v3233
    %v3371 = vrcp.pop %v3234
    %v3372 = vrcp.pop %v3235
    %v3373 = vrcp.pop %v3236
    %v3374 = vrcp.pop %v3237
    %v3375 = vrcp.pop %v3238
    %v3376 = vrcp.pop %v3239
    %v3377 = vrcp.pop %v3240
    %v3378 = vmul.f32 %v3340, %v3370
    %v3379 = vmul.f32 %v3343, %v3371
    %v3380 = vmul.f32 %v3348, %v3372
    %v3381 = vmul.f32 %v3351, %v3373
    %v3382 = vmul.f32 %v3356, %v3374
    %v3383 = vmul.f32 %v3359, %v3375
    %v3384 = vmul.f32 %v3364, %v3376
    %v3385 = vmul.f32 %v3367, %v3377
    %3386 = vst.msk [vmem:[#allocation2 + $0x40] sm:$0xff] %vm136, %v3378
    %3387 = vst.msk [vmem:[#allocation2 + $0x48] sm:$0xff] %vm136, %v3379
    %3388 = vst.msk [vmem:[#allocation2 + $0x50] sm:$0xff] %vm136, %v3380
    %3389 = vst.msk [vmem:[#allocation2 + $0x58] sm:$0xff] %vm136, %v3381
    %3390 = vst.msk [vmem:[#allocation2 + $0x60] sm:$0xff] %vm136, %v3382
    %3391 = vst.msk [vmem:[#allocation2 + $0x68] sm:$0xff] %vm136, %v3383
    %3392 = vst.msk [vmem:[#allocation2 + $0x70] sm:$0xff] %vm136, %v3384
    %3393 = vst.msk [vmem:[#allocation2 + $0x78] sm:$0xff] %vm136, %v3385
    %v3394 = vld [vmem:[#allocation2] sm:$0xff]
    %v3395 = vld [vmem:[#allocation2 + $0x8] sm:$0xff]
    %v3396 = vld [vmem:[#allocation2 + $0x10] sm:$0xff]
    %v3397 = vld [vmem:[#allocation2 + $0x18] sm:$0xff]
    %v3398 = vld [vmem:[#allocation2 + $0x20] sm:$0xff]
    %v3399 = vld [vmem:[#allocation2 + $0x28] sm:$0xff]
    %v3400 = vld [vmem:[#allocation2 + $0x30] sm:$0xff]
    %v3401 = vld [vmem:[#allocation2 + $0x38] sm:$0xff]
    %v3402 = vld [vmem:[#allocation2 + $0x40] sm:$0xff]
    %v3403 = vld [vmem:[#allocation2 + $0x48] sm:$0xff]
    %v3404 = vld [vmem:[#allocation2 + $0x50] sm:$0xff]
    %v3405 = vld [vmem:[#allocation2 + $0x58] sm:$0xff]
    %v3406 = vld [vmem:[#allocation2 + $0x60] sm:$0xff]
    %v3407 = vld [vmem:[#allocation2 + $0x68] sm:$0xff]
    %v3408 = vld [vmem:[#allocation2 + $0x70] sm:$0xff]
    %v3409 = vld [vmem:[#allocation2 + $0x78] sm:$0xff]
    %v3410 = vpack.c.bf16 %v3395, %v3394
    %v3411 = vpack.c.bf16 %v3397, %v3396
    %v3412 = vpack.c.bf16 %v3399, %v3398
    %v3413 = vpack.c.bf16 %v3401, %v3400
    %v3414 = vpack.c.bf16 %v3403, %v3402
    %v3415 = vpack.c.bf16 %v3405, %v3404
    %v3416 = vpack.c.bf16 %v3407, %v3406
    %v3417 = vpack.c.bf16 %v3409, %v3408
    %s3418 = scalar_lea.vmem %s5, 16
    %v3419 = vld [vmem:[%s3418] sm:$0xf]
    %v3420 = vld [vmem:[%s3418 + $0x4] sm:$0xf]
    %v3421 = vld [vmem:[%s3418 + $0x8] sm:$0xf]
    %v3422 = vld [vmem:[%s3418 + $0xc] sm:$0xf]
    %v3427 = vunpack.c.l.b16 %v3419
    %v3428 = vunpack.c.l.b16 %v3420
    %v3429 = vunpack.c.l.b16 %v3421
    %v3430 = vunpack.c.l.b16 %v3422
    %v3431 = vpack.c.b16 %v3428, %v3427
    %v3432 = vpack.c.b16 %v3430, %v3429
    %v3436 = vsel %vm136, %v3410, 0
    %v3439 = vsel %vm136, %v3411, 0
    %v3442 = vsel %vm136, %v3412, 0
    %v3445 = vsel %vm136, %v3413, 0
    %v3448 = vsel %vm136, %v3414, 0
    %v3451 = vsel %vm136, %v3415, 0
    %v3454 = vsel %vm136, %v3416, 0
    %v3457 = vsel %vm136, %v3417, 0
    %3459 = vmatprep.subr.bf16.mxu0 0
    %3460 = vmatpush1.bf16.msra.mxu0 0
    %3461 = vmatprep.subr.bf16.mxu0 0
    %3462 = vmatpush1.bf16.msra.mxu0 0
    %3463 = vmatprep.subr.bf16.mxu0 0
    %3464 = vmatpush1.bf16.msra.mxu0 0
    %3465 = vmatprep.subr.bf16.mxu0 0
    %3466 = vmatpush1.bf16.msra.mxu0 0
    %3467 = vmatprep.subr.bf16.mxu0 0
    %3468 = vmatpush1.bf16.msra.mxu0 0
    %3469 = vmatprep.subr.bf16.mxu0 0
    %3470 = vmatpush1.bf16.msra.mxu0 0
    %3471 = vmatprep.subr.bf16.mxu0 0
    %3472 = vmatpush1.bf16.msra.mxu0 %v3432
    %3473 = vmatprep.subr.bf16.mxu0 0
    %3474 = vmatpush1.bf16.msra.mxu0 %v3431
    %3475 = vmatprep.subr.bf16.mxu0 0
    %3476 = vmatpush2.bf16.msra.mxu0 0
    %3477 = vmatprep.subr.bf16.mxu0 0
    %3478 = vmatpush2.bf16.msra.mxu0 0
    %3479 = vmatprep.subr.bf16.mxu0 0
    %3480 = vmatpush2.bf16.msra.mxu0 0
    %3481 = vmatprep.subr.bf16.mxu0 0
    %3482 = vmatpush2.bf16.msra.mxu0 0
    %3483 = vmatprep.subr.bf16.mxu0 0
    %3484 = vmatpush2.bf16.msra.mxu0 0
    %3485 = vmatprep.subr.bf16.mxu0 0
    %3486 = vmatpush2.bf16.msra.mxu0 0
    %3487 = vmatprep.subr.bf16.mxu0 0
    %3488 = vmatpush2.bf16.msra.mxu0 0
    %3489 = vmatprep.subr.bf16.mxu0 0
    %3490 = vmatpush2.bf16.msra.mxu0 0
    %3491 = vmatprep.mubr.bf16.mxu0 0
    %3492 = vmatmul.mubr.bf16.gmra.mxu0 %v3436
    %v3493 = vpop.f32.mrf.mxu0
    %v3494 = vadd.f32 0.0, %v3493
    %v3495 = vpop.f32.mrf.mxu0
    %v3496 = vpop.f32.mrf.mxu0
    %v3497 = vadd.f32 0.0, %v3496
    %v3498 = vpop.f32.mrf.mxu0
    %3499 = vmatprep.mubr.bf16.mxu0 0
    %3500 = vmatmul.mubr.bf16.gmra.mxu0 %v3439
    %v3501 = vpop.f32.mrf.mxu0
    %v3502 = vadd.f32 0.0, %v3501
    %v3503 = vpop.f32.mrf.mxu0
    %v3504 = vpop.f32.mrf.mxu0
    %v3505 = vadd.f32 0.0, %v3504
    %v3506 = vpop.f32.mrf.mxu0
    %3507 = vmatprep.mubr.bf16.mxu0 0
    %3508 = vmatmul.mubr.bf16.gmra.mxu0 %v3442
    %v3509 = vpop.f32.mrf.mxu0
    %v3510 = vadd.f32 0.0, %v3509
    %v3511 = vpop.f32.mrf.mxu0
    %v3512 = vpop.f32.mrf.mxu0
    %v3513 = vadd.f32 0.0, %v3512
    %v3514 = vpop.f32.mrf.mxu0
    %3515 = vmatprep.mubr.bf16.mxu0 0
    %3516 = vmatmul.mubr.bf16.gmra.mxu0 %v3445
    %v3517 = vpop.f32.mrf.mxu0
    %v3518 = vadd.f32 0.0, %v3517
    %v3519 = vpop.f32.mrf.mxu0
    %v3520 = vpop.f32.mrf.mxu0
    %v3521 = vadd.f32 0.0, %v3520
    %v3522 = vpop.f32.mrf.mxu0
    %3523 = vmatprep.mubr.bf16.mxu0 0
    %3524 = vmatmul.mubr.bf16.gmra.mxu0 %v3448
    %v3525 = vpop.f32.mrf.mxu0
    %v3526 = vadd.f32 0.0, %v3525
    %v3527 = vpop.f32.mrf.mxu0
    %v3528 = vpop.f32.mrf.mxu0
    %v3529 = vadd.f32 0.0, %v3528
    %v3530 = vpop.f32.mrf.mxu0
    %3531 = vmatprep.mubr.bf16.mxu0 0
    %3532 = vmatmul.mubr.bf16.gmra.mxu0 %v3451
    %v3533 = vpop.f32.mrf.mxu0
    %v3534 = vadd.f32 0.0, %v3533
    %v3535 = vpop.f32.mrf.mxu0
    %v3536 = vpop.f32.mrf.mxu0
    %v3537 = vadd.f32 0.0, %v3536
    %v3538 = vpop.f32.mrf.mxu0
    %3539 = vmatprep.mubr.bf16.mxu0 0
    %3540 = vmatmul.mubr.bf16.gmra.mxu0 %v3454
    %v3541 = vpop.f32.mrf.mxu0
    %v3542 = vadd.f32 0.0, %v3541
    %v3543 = vpop.f32.mrf.mxu0
    %v3544 = vpop.f32.mrf.mxu0
    %v3545 = vadd.f32 0.0, %v3544
    %v3546 = vpop.f32.mrf.mxu0
    %3547 = vmatprep.mubr.bf16.mxu0 0
    %3548 = vmatmul.mubr.bf16.gmra.mxu0 %v3457
    %v3549 = vpop.f32.mrf.mxu0
    %v3550 = vadd.f32 0.0, %v3549
    %v3551 = vpop.f32.mrf.mxu0
    %v3552 = vpop.f32.mrf.mxu0
    %v3553 = vadd.f32 0.0, %v3552
    %v3554 = vpop.f32.mrf.mxu0
    %3555 = vdwg.mxu0
    %v3556 = vadd.f32 %v2146, %v3494
    %v3557 = vadd.f32 %v2147, %v3497
    %v3558 = vadd.f32 %v2148, %v3502
    %v3559 = vadd.f32 %v2149, %v3505
    %v3560 = vadd.f32 %v2150, %v3510
    %v3561 = vadd.f32 %v2151, %v3513
    %v3562 = vadd.f32 %v2152, %v3518
    %v3563 = vadd.f32 %v2153, %v3521
    %v3564 = vadd.f32 %v2154, %v3526
    %v3565 = vadd.f32 %v2155, %v3529
    %v3566 = vadd.f32 %v2156, %v3534
    %v3567 = vadd.f32 %v2157, %v3537
    %v3568 = vadd.f32 %v2158, %v3542
    %v3569 = vadd.f32 %v2159, %v3545
    %v3570 = vadd.f32 %v2160, %v3550
    %v3571 = vadd.f32 %v2161, %v3553
    %s3572 = scalar_lea.vmem %s6, 1
    %v3573 = vld [vmem:[%s3572] sm:$0x1]
    %v3575 = vlaneseq
    %v3576 = vshrl.u32 %v3575, 7
    %v3577 = vsub.s32 0, %v3576
    %v3578 = vrot.slane %v3573, %v3577
    %v3580 = vadd.f32 %v3556, %v3578
    %v3581 = vadd.f32 %v3557, %v3578
    %v3582 = vadd.f32 %v3558, %v3578
    %v3583 = vadd.f32 %v3559, %v3578
    %v3584 = vadd.f32 %v3560, %v3578
    %v3585 = vadd.f32 %v3561, %v3578
    %v3586 = vadd.f32 %v3562, %v3578
    %v3587 = vadd.f32 %v3563, %v3578
    %v3588 = vadd.f32 %v3564, %v3578
    %v3589 = vadd.f32 %v3565, %v3578
    %v3590 = vadd.f32 %v3566, %v3578
    %v3591 = vadd.f32 %v3567, %v3578
    %v3592 = vadd.f32 %v3568, %v3578
    %v3593 = vadd.f32 %v3569, %v3578
    %v3594 = vadd.f32 %v3570, %v3578
    %v3595 = vadd.f32 %v3571, %v3578
    %v3596 = vpack.c.bf16 %v3581, %v3580
    %v3597 = vpack.c.bf16 %v3583, %v3582
    %v3598 = vpack.c.bf16 %v3585, %v3584
    %v3599 = vpack.c.bf16 %v3587, %v3586
    %v3600 = vpack.c.bf16 %v3589, %v3588
    %v3601 = vpack.c.bf16 %v3591, %v3590
    %v3602 = vpack.c.bf16 %v3593, %v3592
    %v3603 = vpack.c.bf16 %v3595, %v3594
    %s3604 = scalar_lea.vmem %s7, 16
    %v3605 = vld [vmem:[%s3604] sm:$0xf]
    %v3606 = vld [vmem:[%s3604 + $0x4] sm:$0xf]
    %v3607 = vld [vmem:[%s3604 + $0x8] sm:$0xf]
    %v3608 = vld [vmem:[%s3604 + $0xc] sm:$0xf]
    %v3613 = vunpack.c.l.b16 %v3605
    %v3614 = vunpack.c.l.b16 %v3606
    %v3615 = vunpack.c.l.b16 %v3607
    %v3616 = vunpack.c.l.b16 %v3608
    %v3617 = vpack.c.b16 %v3614, %v3613
    %v3618 = vpack.c.b16 %v3616, %v3615
    %v3622 = vsel %vm136, %v3596, 0
    %v3625 = vsel %vm136, %v3597, 0
    %v3628 = vsel %vm136, %v3598, 0
    %v3631 = vsel %vm136, %v3599, 0
    %v3634 = vsel %vm136, %v3600, 0
    %v3637 = vsel %vm136, %v3601, 0
    %v3640 = vsel %vm136, %v3602, 0
    %v3643 = vsel %vm136, %v3603, 0
    %3645 = vmatprep.subr.bf16.mxu0 0
    %3646 = vmatpush1.bf16.msra.mxu0 0
    %3647 = vmatprep.subr.bf16.mxu0 0
    %3648 = vmatpush1.bf16.msra.mxu0 0
    %3649 = vmatprep.subr.bf16.mxu0 0
    %3650 = vmatpush1.bf16.msra.mxu0 0
    %3651 = vmatprep.subr.bf16.mxu0 0
    %3652 = vmatpush1.bf16.msra.mxu0 0
    %3653 = vmatprep.subr.bf16.mxu0 0
    %3654 = vmatpush1.bf16.msra.mxu0 0
    %3655 = vmatprep.subr.bf16.mxu0 0
    %3656 = vmatpush1.bf16.msra.mxu0 0
    %3657 = vmatprep.subr.bf16.mxu0 0
    %3658 = vmatpush1.bf16.msra.mxu0 %v3618
    %3659 = vmatprep.subr.bf16.mxu0 0
    %3660 = vmatpush1.bf16.msra.mxu0 %v3617
    %3661 = vmatprep.subr.bf16.mxu0 0
    %3662 = vmatpush2.bf16.msra.mxu0 0
    %3663 = vmatprep.subr.bf16.mxu0 0
    %3664 = vmatpush2.bf16.msra.mxu0 0
    %3665 = vmatprep.subr.bf16.mxu0 0
    %3666 = vmatpush2.bf16.msra.mxu0 0
    %3667 = vmatprep.subr.bf16.mxu0 0
    %3668 = vmatpush2.bf16.msra.mxu0 0
    %3669 = vmatprep.subr.bf16.mxu0 0
    %3670 = vmatpush2.bf16.msra.mxu0 0
    %3671 = vmatprep.subr.bf16.mxu0 0
    %3672 = vmatpush2.bf16.msra.mxu0 0
    %3673 = vmatprep.subr.bf16.mxu0 0
    %3674 = vmatpush2.bf16.msra.mxu0 0
    %3675 = vmatprep.subr.bf16.mxu0 0
    %3676 = vmatpush2.bf16.msra.mxu0 0
    %3677 = vmatprep.mubr.bf16.mxu0 0
    %3678 = vmatmul.mubr.bf16.gmra.mxu0 %v3622
    %v3679 = vpop.f32.mrf.mxu0
    %v3680 = vadd.f32 0.0, %v3679
    %v3681 = vpop.f32.mrf.mxu0
    %v3682 = vpop.f32.mrf.mxu0
    %v3683 = vadd.f32 0.0, %v3682
    %v3684 = vpop.f32.mrf.mxu0
    %3685 = vmatprep.mubr.bf16.mxu0 0
    %3686 = vmatmul.mubr.bf16.gmra.mxu0 %v3625
    %v3687 = vpop.f32.mrf.mxu0
    %v3688 = vadd.f32 0.0, %v3687
    %v3689 = vpop.f32.mrf.mxu0
    %v3690 = vpop.f32.mrf.mxu0
    %v3691 = vadd.f32 0.0, %v3690
    %v3692 = vpop.f32.mrf.mxu0
    %3693 = vmatprep.mubr.bf16.mxu0 0
    %3694 = vmatmul.mubr.bf16.gmra.mxu0 %v3628
    %v3695 = vpop.f32.mrf.mxu0
    %v3696 = vadd.f32 0.0, %v3695
    %v3697 = vpop.f32.mrf.mxu0
    %v3698 = vpop.f32.mrf.mxu0
    %v3699 = vadd.f32 0.0, %v3698
    %v3700 = vpop.f32.mrf.mxu0
    %3701 = vmatprep.mubr.bf16.mxu0 0
    %3702 = vmatmul.mubr.bf16.gmra.mxu0 %v3631
    %v3703 = vpop.f32.mrf.mxu0
    %v3704 = vadd.f32 0.0, %v3703
    %v3705 = vpop.f32.mrf.mxu0
    %v3706 = vpop.f32.mrf.mxu0
    %v3707 = vadd.f32 0.0, %v3706
    %v3708 = vpop.f32.mrf.mxu0
    %3709 = vmatprep.mubr.bf16.mxu0 0
    %3710 = vmatmul.mubr.bf16.gmra.mxu0 %v3634
    %v3711 = vpop.f32.mrf.mxu0
    %v3712 = vadd.f32 0.0, %v3711
    %v3713 = vpop.f32.mrf.mxu0
    %v3714 = vpop.f32.mrf.mxu0
    %v3715 = vadd.f32 0.0, %v3714
    %v3716 = vpop.f32.mrf.mxu0
    %3717 = vmatprep.mubr.bf16.mxu0 0
    %3718 = vmatmul.mubr.bf16.gmra.mxu0 %v3637
    %v3719 = vpop.f32.mrf.mxu0
    %v3720 = vadd.f32 0.0, %v3719
    %v3721 = vpop.f32.mrf.mxu0
    %v3722 = vpop.f32.mrf.mxu0
    %v3723 = vadd.f32 0.0, %v3722
    %v3724 = vpop.f32.mrf.mxu0
    %3725 = vmatprep.mubr.bf16.mxu0 0
    %3726 = vmatmul.mubr.bf16.gmra.mxu0 %v3640
    %v3727 = vpop.f32.mrf.mxu0
    %v3728 = vadd.f32 0.0, %v3727
    %v3729 = vpop.f32.mrf.mxu0
    %v3730 = vpop.f32.mrf.mxu0
    %v3731 = vadd.f32 0.0, %v3730
    %v3732 = vpop.f32.mrf.mxu0
    %3733 = vmatprep.mubr.bf16.mxu0 0
    %3734 = vmatmul.mubr.bf16.gmra.mxu0 %v3643
    %v3735 = vpop.f32.mrf.mxu0
    %v3736 = vadd.f32 0.0, %v3735
    %v3737 = vpop.f32.mrf.mxu0
    %v3738 = vpop.f32.mrf.mxu0
    %v3739 = vadd.f32 0.0, %v3738
    %v3740 = vpop.f32.mrf.mxu0
    %3741 = vdwg.mxu0
    %v3742 = vpack.c.bf16 %v3683, %v3680
    %v3743 = vpack.c.bf16 %v3691, %v3688
    %v3744 = vpack.c.bf16 %v3699, %v3696
    %v3745 = vpack.c.bf16 %v3707, %v3704
    %v3746 = vpack.c.bf16 %v3715, %v3712
    %v3747 = vpack.c.bf16 %v3723, %v3720
    %v3748 = vpack.c.bf16 %v3731, %v3728
    %v3749 = vpack.c.bf16 %v3739, %v3736
    %s3750 = scalar_lea.vmem %s8, 16
    %v3751 = vld [vmem:[%s3750] sm:$0xf]
    %v3752 = vld [vmem:[%s3750 + $0x4] sm:$0xf]
    %v3753 = vld [vmem:[%s3750 + $0x8] sm:$0xf]
    %v3754 = vld [vmem:[%s3750 + $0xc] sm:$0xf]
    %v3759 = vunpack.c.l.b16 %v3751
    %v3760 = vunpack.c.l.b16 %v3752
    %v3761 = vunpack.c.l.b16 %v3753
    %v3762 = vunpack.c.l.b16 %v3754
    %v3763 = vpack.c.b16 %v3760, %v3759
    %v3764 = vpack.c.b16 %v3762, %v3761
    %v3768 = vsel %vm136, %v3742, 0
    %v3771 = vsel %vm136, %v3743, 0
    %v3774 = vsel %vm136, %v3744, 0
    %v3777 = vsel %vm136, %v3745, 0
    %v3780 = vsel %vm136, %v3746, 0
    %v3783 = vsel %vm136, %v3747, 0
    %v3786 = vsel %vm136, %v3748, 0
    %v3789 = vsel %vm136, %v3749, 0
    %3791 = vmatprep.subr.bf16.mxu0 0
    %3792 = vmatpush1.bf16.msra.mxu0 0
    %3793 = vmatprep.subr.bf16.mxu0 0
    %3794 = vmatpush1.bf16.msra.mxu0 0
    %3795 = vmatprep.subr.bf16.mxu0 0
    %3796 = vmatpush1.bf16.msra.mxu0 0
    %3797 = vmatprep.subr.bf16.mxu0 0
    %3798 = vmatpush1.bf16.msra.mxu0 0
    %3799 = vmatprep.subr.bf16.mxu0 0
    %3800 = vmatpush1.bf16.msra.mxu0 0
    %3801 = vmatprep.subr.bf16.mxu0 0
    %3802 = vmatpush1.bf16.msra.mxu0 0
    %3803 = vmatprep.subr.bf16.mxu0 0
    %3804 = vmatpush1.bf16.msra.mxu0 %v3764
    %3805 = vmatprep.subr.bf16.mxu0 0
    %3806 = vmatpush1.bf16.msra.mxu0 %v3763
    %3807 = vmatprep.subr.bf16.mxu0 0
    %3808 = vmatpush2.bf16.msra.mxu0 0
    %3809 = vmatprep.subr.bf16.mxu0 0
    %3810 = vmatpush2.bf16.msra.mxu0 0
    %3811 = vmatprep.subr.bf16.mxu0 0
    %3812 = vmatpush2.bf16.msra.mxu0 0
    %3813 = vmatprep.subr.bf16.mxu0 0
    %3814 = vmatpush2.bf16.msra.mxu0 0
    %3815 = vmatprep.subr.bf16.mxu0 0
    %3816 = vmatpush2.bf16.msra.mxu0 0
    %3817 = vmatprep.subr.bf16.mxu0 0
    %3818 = vmatpush2.bf16.msra.mxu0 0
    %3819 = vmatprep.subr.bf16.mxu0 0
    %3820 = vmatpush2.bf16.msra.mxu0 0
    %3821 = vmatprep.subr.bf16.mxu0 0
    %3822 = vmatpush2.bf16.msra.mxu0 0
    %3823 = vmatprep.mubr.bf16.mxu0 0
    %3824 = vmatmul.mubr.bf16.gmra.mxu0 %v3768
    %v3825 = vpop.f32.mrf.mxu0
    %v3826 = vadd.f32 0.0, %v3825
    %v3827 = vpop.f32.mrf.mxu0
    %v3828 = vpop.f32.mrf.mxu0
    %v3829 = vadd.f32 0.0, %v3828
    %v3830 = vpop.f32.mrf.mxu0
    %3831 = vmatprep.mubr.bf16.mxu0 0
    %3832 = vmatmul.mubr.bf16.gmra.mxu0 %v3771
    %v3833 = vpop.f32.mrf.mxu0
    %v3834 = vadd.f32 0.0, %v3833
    %v3835 = vpop.f32.mrf.mxu0
    %v3836 = vpop.f32.mrf.mxu0
    %v3837 = vadd.f32 0.0, %v3836
    %v3838 = vpop.f32.mrf.mxu0
    %3839 = vmatprep.mubr.bf16.mxu0 0
    %3840 = vmatmul.mubr.bf16.gmra.mxu0 %v3774
    %v3841 = vpop.f32.mrf.mxu0
    %v3842 = vadd.f32 0.0, %v3841
    %v3843 = vpop.f32.mrf.mxu0
    %v3844 = vpop.f32.mrf.mxu0
    %v3845 = vadd.f32 0.0, %v3844
    %v3846 = vpop.f32.mrf.mxu0
    %3847 = vmatprep.mubr.bf16.mxu0 0
    %3848 = vmatmul.mubr.bf16.gmra.mxu0 %v3777
    %v3849 = vpop.f32.mrf.mxu0
    %v3850 = vadd.f32 0.0, %v3849
    %v3851 = vpop.f32.mrf.mxu0
    %v3852 = vpop.f32.mrf.mxu0
    %v3853 = vadd.f32 0.0, %v3852
    %v3854 = vpop.f32.mrf.mxu0
    %3855 = vmatprep.mubr.bf16.mxu0 0
    %3856 = vmatmul.mubr.bf16.gmra.mxu0 %v3780
    %v3857 = vpop.f32.mrf.mxu0
    %v3858 = vadd.f32 0.0, %v3857
    %v3859 = vpop.f32.mrf.mxu0
    %v3860 = vpop.f32.mrf.mxu0
    %v3861 = vadd.f32 0.0, %v3860
    %v3862 = vpop.f32.mrf.mxu0
    %3863 = vmatprep.mubr.bf16.mxu0 0
    %3864 = vmatmul.mubr.bf16.gmra.mxu0 %v3783
    %v3865 = vpop.f32.mrf.mxu0
    %v3866 = vadd.f32 0.0, %v3865
    %v3867 = vpop.f32.mrf.mxu0
    %v3868 = vpop.f32.mrf.mxu0
    %v3869 = vadd.f32 0.0, %v3868
    %v3870 = vpop.f32.mrf.mxu0
    %3871 = vmatprep.mubr.bf16.mxu0 0
    %3872 = vmatmul.mubr.bf16.gmra.mxu0 %v3786
    %v3873 = vpop.f32.mrf.mxu0
    %v3874 = vadd.f32 0.0, %v3873
    %v3875 = vpop.f32.mrf.mxu0
    %v3876 = vpop.f32.mrf.mxu0
    %v3877 = vadd.f32 0.0, %v3876
    %v3878 = vpop.f32.mrf.mxu0
    %3879 = vmatprep.mubr.bf16.mxu0 0
    %3880 = vmatmul.mubr.bf16.gmra.mxu0 %v3789
    %v3881 = vpop.f32.mrf.mxu0
    %v3882 = vadd.f32 0.0, %v3881
    %v3883 = vpop.f32.mrf.mxu0
    %v3884 = vpop.f32.mrf.mxu0
    %v3885 = vadd.f32 0.0, %v3884
    %v3886 = vpop.f32.mrf.mxu0
    %3887 = vdwg.mxu0
    %v3888 = vadd.f32 %v3580, %v3826
    %v3889 = vadd.f32 %v3581, %v3829
    %v3890 = vadd.f32 %v3582, %v3834
    %v3891 = vadd.f32 %v3583, %v3837
    %v3892 = vadd.f32 %v3584, %v3842
    %v3893 = vadd.f32 %v3585, %v3845
    %v3894 = vadd.f32 %v3586, %v3850
    %v3895 = vadd.f32 %v3587, %v3853
    %v3896 = vadd.f32 %v3588, %v3858
    %v3897 = vadd.f32 %v3589, %v3861
    %v3898 = vadd.f32 %v3590, %v3866
    %v3899 = vadd.f32 %v3591, %v3869
    %v3900 = vadd.f32 %v3592, %v3874
    %v3901 = vadd.f32 %v3593, %v3877
    %v3902 = vadd.f32 %v3594, %v3882
    %v3903 = vadd.f32 %v3595, %v3885
    %3906 = vrot.lane.b32.xlu0 %v3890, 32
    %v3907 = vpop.permute.xlu0 %3906
    %3908 = vrot.lane.b32.xlu0 %v3891, 32
    %v3909 = vpop.permute.xlu0 %3908
    %3914 = vrot.lane.b32.xlu0 %v3892, 64
    %v3915 = vpop.permute.xlu0 %3914
    %3916 = vrot.lane.b32.xlu0 %v3893, 64
    %v3917 = vpop.permute.xlu0 %3916
    %3922 = vrot.lane.b32.xlu0 %v3894, 96
    %v3923 = vpop.permute.xlu0 %3922
    %3924 = vrot.lane.b32.xlu0 %v3895, 96
    %v3925 = vpop.permute.xlu0 %3924
    %v3928 = vsel %vm136, %v3888, %v3907
    %v3929 = vsel %vm136, %v3889, %v3909
    %v3930 = vsel %vm537, %v3928, %v3915
    %v3931 = vsel %vm537, %v3929, %v3917
    %vm3932 = vcmask 785408
    %v3933 = vsel %vm3932, %v3930, %v3923
    %v3934 = vsel %vm3932, %v3931, %v3925
    %3935 = vst [vmem:[#allocation3] sm:$0xff] %v3933
    %3936 = vst [vmem:[#allocation3 + $0x8] sm:$0xff] %v3934
    %3939 = vrot.lane.b32.xlu0 %v3898, 32
    %v3940 = vpop.permute.xlu0 %3939
    %3941 = vrot.lane.b32.xlu0 %v3899, 32
    %v3942 = vpop.permute.xlu0 %3941
    %3947 = vrot.lane.b32.xlu0 %v3900, 64
    %v3948 = vpop.permute.xlu0 %3947
    %3949 = vrot.lane.b32.xlu0 %v3901, 64
    %v3950 = vpop.permute.xlu0 %3949
    %3955 = vrot.lane.b32.xlu0 %v3902, 96
    %v3956 = vpop.permute.xlu0 %3955
    %3957 = vrot.lane.b32.xlu0 %v3903, 96
    %v3958 = vpop.permute.xlu0 %3957
    %v3961 = vsel %vm136, %v3896, %v3940
    %v3962 = vsel %vm136, %v3897, %v3942
    %v3963 = vsel %vm537, %v3961, %v3948
    %v3964 = vsel %vm537, %v3962, %v3950
    %v3965 = vsel %vm3932, %v3963, %v3956
    %v3966 = vsel %vm3932, %v3964, %v3958
    %s3967 = scalar_lea.vmem [#allocation3], 16
    %3968 = vst [vmem:[%s3967] sm:$0xff] %v3965
    %3969 = vst [vmem:[%s3967 + $0x8] sm:$0xff] %v3966
    // Predicated region
    $region46: #{tpu_custom_call.1} parent=1 // pred_check
      _
    $region47: #{tpu_custom_call.1} parent=1 // pred_check_branch
      %3971 = sbr.rel (0) target = $region49
    $region48: #{tpu_custom_call.1} parent=1 // pred_region
      %s3973 = ssub.s32 512, 512
      %3974 = vsyncadd [#allocation4], %s3973
      %s3975 = sshll.u32 [#allocation3], 4
      %s3976 = int_to_ptr.vmem [resolvable:$true] %s3975
      %3981 = dma.vmem_to_hbm [thread:$0]  %s3976, 512, %s11, [#allocation4], 128, 128, 8
    $region49: #{tpu_custom_call.1} parent=1 // pred_fallthru
      _
    // Predicated region
    $region50: #{tpu_custom_call.1} parent=1 // pred_check
      _
    $region51: #{tpu_custom_call.1} parent=1 // pred_check_branch
      %3983 = sbr.rel (0) target = $region53
    $region52: #{tpu_custom_call.1} parent=1 // pred_region
      %3984 = dma.done [#allocation4], 512
    $region53: #{tpu_custom_call.1} parent=1 // pred_fallthru
      _
    %3985 = vsyncpa [#allocation4], 1

</llo_original>
